<compile_context>
chip_gen: v7x
topology: tpu7x:2x2x1
jax: 0.10.0
libtpu: 0.0.40
codegen_flags: <defaults>
</compile_context>

<pallas_src>
import functools
import math

import jax
import jax.numpy as jnp
from jax import lax
from jax.experimental import pallas as pl
from jax.experimental.pallas import tpu as pltpu

D_MODEL = 64          # feature_size
NHEAD = 8
HEAD_DIM = D_MODEL // NHEAD
FFN_DIM = 2048        # nn.TransformerEncoderLayer default dim_feedforward
FFN_CHUNK = 512       # FFN hidden-dim chunk (keeps the live intermediate small)
NUM_LAYERS = 6
LN_EPS = 1e-5
PE_MAX_LEN = 500


def fused_transam_kernel(x_ref, pe_ref,
                         wq_ref, bq_ref, wk_ref, bk_ref, wv_ref, bv_ref,
                         wo_ref, bo_ref,
                         g1_ref, be1_ref,
                         w1_ref, b1_ref, w2_ref, b2_ref,
                         g2_ref, be2_ref,
                         o_ref, *, seq_len):
    """PE add + 6 post-norm TransformerEncoderLayers, fused.

    x_ref / pe_ref / o_ref blocks: (R, D) with R = bt * seq_len (bt whole
    sequences per grid step). Stacked weights carry a leading layer axis of 6
    and are pre-transposed so every matmul is `x @ W`.
    """
    x0 = x_ref[...] + pe_ref[...]                        # (R, D) f32
    R = x0.shape[0]
    bt = R // seq_len                                    # sequences in this block
    scale = jnp.float32(1.0 / math.sqrt(HEAD_DIM))

    def layer_body(l, x):
        xb = x.astype(jnp.bfloat16)

        # ---- in-projection: three K=64 MXU dots (no (R,192) lane surgery)
        q = jnp.dot(xb, wq_ref[l], preferred_element_type=jnp.float32) + bq_ref[l]
        k = jnp.dot(xb, wk_ref[l], preferred_element_type=jnp.float32) + bk_ref[l]
        v = jnp.dot(xb, wv_ref[l], preferred_element_type=jnp.float32) + bv_ref[l]
        q = q * scale

        # ---- per-sequence attention: batched (bt, S, S) tiles, no big mask.
        # The original model passes NO mask to the encoder, so attention
        # within a sequence is unmasked; sequences never mix because bt is a
        # dot_general batch dimension.
        q3 = q.reshape(bt, seq_len, D_MODEL).astype(jnp.bfloat16)
        k3 = k.reshape(bt, seq_len, D_MODEL).astype(jnp.bfloat16)
        v3 = v.reshape(bt, seq_len, D_MODEL).astype(jnp.bfloat16)

        ctx_heads = []
        for h in range(NHEAD):                           # static unroll: 8 heads
            sl = slice(h * HEAD_DIM, (h + 1) * HEAD_DIM)
            qh = q3[:, :, sl]
            kh = k3[:, :, sl]
            vh = v3[:, :, sl]
            s = lax.dot_general(qh, kh, (((2,), (2,)), ((0,), (0,))),
                                preferred_element_type=jnp.float32)   # (bt, S, S)
            s = s - jnp.max(s, axis=-1, keepdims=True)
            p = jnp.exp(s)
            denom = jnp.sum(p, axis=-1, keepdims=True)
            p = p * pl.reciprocal(denom, approx=False)   # exact recip for parity
            ctx = lax.dot_general(p.astype(jnp.bfloat16), vh,
                                  (((2,), (1,)), ((0,), (0,))),
                                  preferred_element_type=jnp.float32)  # (bt,S,hd)
            ctx_heads.append(ctx)

        # concatenate heads back onto the lane axis and do ONE K=64 out-proj
        ctx_all = jnp.concatenate(ctx_heads, axis=-1)                  # (bt,S,D)
        ctx_all = ctx_all.reshape(R, D_MODEL).astype(jnp.bfloat16)
        attn = jnp.dot(ctx_all, wo_ref[l],
                       preferred_element_type=jnp.float32) + bo_ref[l]  # (R, D)

        # ---- residual + LayerNorm1 (post-norm, biased variance, eps=1e-5)
        y = x + attn
        mu = jnp.mean(y, axis=-1, keepdims=True)
        var = jnp.mean((y - mu) ** 2, axis=-1, keepdims=True)
        y = (y - mu) * lax.rsqrt(var + LN_EPS) * g1_ref[l] + be1_ref[l]

        # ---- feed-forward 64 -> 2048 -> 64, hidden dim chunked so the full
        #      (R, 2048) f32 intermediate is never live.
        yb = y.astype(jnp.bfloat16)

        def ffn_chunk(c, f_acc):
            off = pl.multiple_of(c * FFN_CHUNK, FFN_CHUNK)
            w1c = w1_ref[l, :, pl.ds(off, FFN_CHUNK)]     # (D, C) bf16
            b1c = b1_ref[l, :, pl.ds(off, FFN_CHUNK)]     # (1, C) f32
            h1c = jnp.dot(yb, w1c, preferred_element_type=jnp.float32) + b1c
            h1c = jnp.maximum(h1c, 0.0)
            w2c = w2_ref[l, pl.ds(off, FFN_CHUNK), :]     # (C, D) bf16
            return f_acc + jnp.dot(h1c.astype(jnp.bfloat16), w2c,
                                   preferred_element_type=jnp.float32)

        f = lax.fori_loop(0, FFN_DIM // FFN_CHUNK, ffn_chunk,
                          jnp.zeros((R, D_MODEL), jnp.float32))
        f = f + b2_ref[l]

        # ---- residual + LayerNorm2
        z = y + f
        mu2 = jnp.mean(z, axis=-1, keepdims=True)
        var2 = jnp.mean((z - mu2) ** 2, axis=-1, keepdims=True)
        return (z - mu2) * lax.rsqrt(var2 + LN_EPS) * g2_ref[l] + be2_ref[l]

    x_out = lax.fori_loop(0, NUM_LAYERS, layer_body, x0)
    o_ref[...] = x_out.astype(o_ref.dtype)


def _rows_per_step(B, S, max_rows=512):
    """Pick how many whole sequences each grid step processes.

    Constraints: bt divides B; the block's sublane extent (bt*S) is a multiple
    of 8 unless bt == B (full-array exemption); bt*S <= max_rows when
    possible; and prefer >= 2 grid steps when B >= 2 (v7x megacore).
    max_rows=512 is safe on v5e/v7x with the chunked FFN; v6e can go higher.
    """
    candidates = [bt for bt in range(1, B + 1)
                  if B % bt == 0 and ((bt * S) % 8 == 0 or bt == B)]
    fitting = [bt for bt in candidates if bt * S <= max_rows]
    pool = fitting if fitting else [min(candidates)]
    if B >= 2:
        multi = [bt for bt in pool if B // bt >= 2]
        if multi:
            pool = multi
    return max(pool)


def transam_forward(src_sbd, params, pe, *, max_rows=512):
    """src_sbd: (S, B, D) float32, PyTorch transformer layout."""
    S, B, D = src_sbd.shape
    assert D == D_MODEL
    assert S <= PE_MAX_LEN, "PositionalEncoding was built with max_len=500"

    R = B * S
    # fold batch into rows: row r = b*S + s  (sequences are contiguous)
    x = jnp.transpose(src_sbd, (1, 0, 2)).reshape(R, D)
    pe_rows = jnp.tile(pe[:S], (B, 1))                    # (R, D)

    bt = _rows_per_step(B, S, max_rows=max_rows)          # sequences per grid step
    rows = bt * S
    grid = (B // bt,)

    def const_spec(a):
        nd = a.ndim
        # constant across the grid -> fetch once, single-buffered
        return pl.BlockSpec(a.shape, lambda i, _n=nd: (0,) * _n,
                            pipeline_mode=pl.Buffered(1))

    in_specs = [pl.BlockSpec((rows, D), lambda i: (i, 0)),   # x rows
                pl.BlockSpec((rows, D), lambda i: (i, 0))]   # pe rows
    in_specs += [const_spec(a) for a in params]

    out = pl.pallas_call(
        functools.partial(fused_transam_kernel, seq_len=S),
        out_shape=jax.ShapeDtypeStruct((R, D), jnp.float32),
        grid_spec=pltpu.PrefetchScalarGridSpec(
            num_scalar_prefetch=0,
            grid=grid,
            in_specs=in_specs,
            out_specs=pl.BlockSpec((rows, D), lambda i: (i, 0)),
        ),
        compiler_params=pltpu.CompilerParams(
            dimension_semantics=("parallel",)),
    )(x, pe_rows, *params)

    return out.reshape(B, S, D).transpose(1, 0, 2)        # back to (S, B, D)


def positional_encoding(max_len, d_model):
    position = jnp.arange(max_len, dtype=jnp.float32)[:, None]
    div_term = jnp.exp(jnp.arange(0, d_model, 2, dtype=jnp.float32)
                       * (-math.log(10000.0) / d_model))
    ang = position * div_term
    pe = jnp.zeros((max_len, d_model), dtype=jnp.float32)
    pe = pe.at[:, 0::2].set(jnp.sin(ang))
    pe = pe.at[:, 1::2].set(jnp.cos(ang))
    return pe                                             # (max_len, d_model)


def init_params(key):
    """Deterministic synthetic weights matching nn.TransformerEncoderLayer shapes.

    Returns 16 arrays stacked over the layer axis, pre-transposed so matmuls
    are `x @ W`. Matrix weights are bf16 (HBM-bandwidth win), everything else f32.
    Order: wq, bq, wk, bk, wv, bv, wo, bo, g1, be1, w1, b1, w2, b2, g2, be2.
    """
    s = 0.05
    names = ("wq", "bq", "wk", "bk", "wv", "bv", "wo", "bo",
             "g1", "be1", "w1", "b1", "w2", "b2", "g2", "be2")
    acc = {n: [] for n in names}
    for i in range(NUM_LAYERS):
        keys = jax.random.split(jax.random.fold_in(key, i), 8)
        wqkv = jax.random.uniform(keys[0], (3 * D_MODEL, D_MODEL), jnp.float32, -s, s)
        bqkv = jax.random.uniform(keys[1], (3 * D_MODEL,), jnp.float32, -s, s)
        wo = jax.random.uniform(keys[2], (D_MODEL, D_MODEL), jnp.float32, -s, s)
        bo = jax.random.uniform(keys[3], (D_MODEL,), jnp.float32, -s, s)
        w1 = jax.random.uniform(keys[4], (FFN_DIM, D_MODEL), jnp.float32, -s, s)
        b1 = jax.random.uniform(keys[5], (FFN_DIM,), jnp.float32, -s, s)
        w2 = jax.random.uniform(keys[6], (D_MODEL, FFN_DIM), jnp.float32, -s, s)
        b2 = jax.random.uniform(keys[7], (D_MODEL,), jnp.float32, -s, s)
        # split fused in-proj into q/k/v and pre-transpose
        acc["wq"].append(wqkv[:D_MODEL].T.astype(jnp.bfloat16))
        acc["wk"].append(wqkv[D_MODEL:2 * D_MODEL].T.astype(jnp.bfloat16))
        acc["wv"].append(wqkv[2 * D_MODEL:].T.astype(jnp.bfloat16))
        acc["bq"].append(bqkv[None, :D_MODEL])
        acc["bk"].append(bqkv[None, D_MODEL:2 * D_MODEL])
        acc["bv"].append(bqkv[None, 2 * D_MODEL:])
        acc["wo"].append(wo.T.astype(jnp.bfloat16))
        acc["bo"].append(bo[None, :])
        acc["g1"].append(jnp.ones((1, D_MODEL), jnp.float32))
        acc["be1"].append(jnp.zeros((1, D_MODEL), jnp.float32))
        acc["w1"].append(w1.T.astype(jnp.bfloat16))
        acc["b1"].append(b1[None, :])
        acc["w2"].append(w2.T.astype(jnp.bfloat16))
        acc["b2"].append(b2[None, :])
        acc["g2"].append(jnp.ones((1, D_MODEL), jnp.float32))
        acc["be2"].append(jnp.zeros((1, D_MODEL), jnp.float32))
    return tuple(jnp.stack(acc[n], axis=0) for n in names)


if __name__ == "__main__":
    key = jax.random.PRNGKey(0)
    S, B = 8, 2
    src = jax.random.normal(jax.random.fold_in(key, 999), (S, B, D_MODEL), jnp.float32)

    params = init_params(key)
    pe = positional_encoding(PE_MAX_LEN, D_MODEL)

    out = transam_forward(src, params, pe)
    out = jax.block_until_ready(out)
    assert out.shape == (S, B, D_MODEL) and out.dtype == jnp.float32
    assert bool(jnp.all(jnp.isfinite(out)))
    print("KERNEL_OK")
</pallas_src>

<mosaic_0001>
module attributes {stable_mosaic.version = 11 : i64} {
  func.func @fused_transam_kernel(%arg0: i32, %arg1: memref<8x64xf32, #tpu.memory_space<vmem>>, %arg2: memref<8x64xf32, #tpu.memory_space<vmem>>, %arg3: memref<6x64x64xbf16, #tpu.memory_space<vmem>>, %arg4: memref<6x1x64xf32, #tpu.memory_space<vmem>>, %arg5: memref<6x64x64xbf16, #tpu.memory_space<vmem>>, %arg6: memref<6x1x64xf32, #tpu.memory_space<vmem>>, %arg7: memref<6x64x64xbf16, #tpu.memory_space<vmem>>, %arg8: memref<6x1x64xf32, #tpu.memory_space<vmem>>, %arg9: memref<6x64x64xbf16, #tpu.memory_space<vmem>>, %arg10: memref<6x1x64xf32, #tpu.memory_space<vmem>>, %arg11: memref<6x1x64xf32, #tpu.memory_space<vmem>>, %arg12: memref<6x1x64xf32, #tpu.memory_space<vmem>>, %arg13: memref<6x64x2048xbf16, #tpu.memory_space<vmem>>, %arg14: memref<6x1x2048xf32, #tpu.memory_space<vmem>>, %arg15: memref<6x2048x64xbf16, #tpu.memory_space<vmem>>, %arg16: memref<6x1x64xf32, #tpu.memory_space<vmem>>, %arg17: memref<6x1x64xf32, #tpu.memory_space<vmem>>, %arg18: memref<6x1x64xf32, #tpu.memory_space<vmem>>, %arg19: memref<8x64xf32, #tpu.memory_space<vmem>>) attributes {dimension_semantics = [#tpu.dimension_semantics<parallel>], iteration_bounds = array<i64: 2>, scalar_prefetch = 0 : i64, scratch_operands = 0 : i64, tpu.core_type = #tpu.core_type<tc>, window_params = [{transform_indices = @transform_0, window_bounds = array<i64: 8, 64>}, {transform_indices = @transform_1, window_bounds = array<i64: 8, 64>}, {pipeline_mode = #tpu.pipeline_mode<synchronous>, transform_indices = @transform_2, window_bounds = array<i64: 6, 64, 64>}, {pipeline_mode = #tpu.pipeline_mode<synchronous>, transform_indices = @transform_3, window_bounds = array<i64: 6, 1, 64>}, {pipeline_mode = #tpu.pipeline_mode<synchronous>, transform_indices = @transform_4, window_bounds = array<i64: 6, 64, 64>}, {pipeline_mode = #tpu.pipeline_mode<synchronous>, transform_indices = @transform_5, window_bounds = array<i64: 6, 1, 64>}, {pipeline_mode = #tpu.pipeline_mode<synchronous>, transform_indices = @transform_6, window_bounds = array<i64: 6, 64, 64>}, {pipeline_mode = #tpu.pipeline_mode<synchronous>, transform_indices = @transform_7, window_bounds = array<i64: 6, 1, 64>}, {pipeline_mode = #tpu.pipeline_mode<synchronous>, transform_indices = @transform_8, window_bounds = array<i64: 6, 64, 64>}, {pipeline_mode = #tpu.pipeline_mode<synchronous>, transform_indices = @transform_9, window_bounds = array<i64: 6, 1, 64>}, {pipeline_mode = #tpu.pipeline_mode<synchronous>, transform_indices = @transform_10, window_bounds = array<i64: 6, 1, 64>}, {pipeline_mode = #tpu.pipeline_mode<synchronous>, transform_indices = @transform_11, window_bounds = array<i64: 6, 1, 64>}, {pipeline_mode = #tpu.pipeline_mode<synchronous>, transform_indices = @transform_12, window_bounds = array<i64: 6, 64, 2048>}, {pipeline_mode = #tpu.pipeline_mode<synchronous>, transform_indices = @transform_13, window_bounds = array<i64: 6, 1, 2048>}, {pipeline_mode = #tpu.pipeline_mode<synchronous>, transform_indices = @transform_14, window_bounds = array<i64: 6, 2048, 64>}, {pipeline_mode = #tpu.pipeline_mode<synchronous>, transform_indices = @transform_15, window_bounds = array<i64: 6, 1, 64>}, {pipeline_mode = #tpu.pipeline_mode<synchronous>, transform_indices = @transform_16, window_bounds = array<i64: 6, 1, 64>}, {pipeline_mode = #tpu.pipeline_mode<synchronous>, transform_indices = @transform_17, window_bounds = array<i64: 6, 1, 64>}, {transform_indices = @transform_18, window_bounds = array<i64: 8, 64>}]} {
    %c0 = arith.constant 0 : index
    %c0_0 = arith.constant 0 : index
    %0 = vector.load %arg1[%c0, %c0_0] : memref<8x64xf32, #tpu.memory_space<vmem>>, vector<8x64xf32>
    %c0_1 = arith.constant 0 : index
    %c0_2 = arith.constant 0 : index
    %1 = vector.load %arg2[%c0_1, %c0_2] : memref<8x64xf32, #tpu.memory_space<vmem>>, vector<8x64xf32>
    %2 = arith.addf %0, %1 : vector<8x64xf32>
    %cst = arith.constant 0.353553385 : f32
    %c0_i32 = arith.constant 0 : i32
    %c6_i32 = arith.constant 6 : i32
    %3 = arith.addi %c0_i32, %c6_i32 : i32
    %c1_i32 = arith.constant 1 : i32
    %4 = scf.for %arg20 = %c0_i32 to %3 step %c1_i32 iter_args(%arg21 = %2) -> (vector<8x64xf32>)  : i32 {
      %6 = arith.truncf %arg21 : vector<8x64xf32> to vector<8x64xbf16>
      %7 = arith.index_cast %arg20 : i32 to index
      %c0_6 = arith.constant 0 : index
      %c0_7 = arith.constant 0 : index
      %8 = vector.load %arg3[%7, %c0_6, %c0_7] : memref<6x64x64xbf16, #tpu.memory_space<vmem>>, vector<1x64x64xbf16>
      %9 = vector.shape_cast %8 : vector<1x64x64xbf16> to vector<64x64xbf16>
      %cst_8 = arith.constant dense<0.000000e+00> : vector<8x64xf32>
      %10 = tpu.matmul %6, %9, %cst_8 {dimension_numbers = #tpu.dot_dimension_numbers<[1], [0], [0], [1], [0, 0, 1, 1], [], []>} : vector<8x64xbf16>, vector<64x64xbf16>, vector<8x64xf32> -> vector<8x64xf32>
      %11 = arith.index_cast %arg20 : i32 to index
      %c0_9 = arith.constant 0 : index
      %c0_10 = arith.constant 0 : index
      %12 = vector.load %arg4[%11, %c0_9, %c0_10] : memref<6x1x64xf32, #tpu.memory_space<vmem>>, vector<1x1x64xf32>
      %13 = vector.shape_cast %12 : vector<1x1x64xf32> to vector<1x64xf32>
      %14 = vector.broadcast %13 : vector<1x64xf32> to vector<8x64xf32>
      %15 = arith.addf %10, %14 : vector<8x64xf32>
      %16 = arith.index_cast %arg20 : i32 to index
      %c0_11 = arith.constant 0 : index
      %c0_12 = arith.constant 0 : index
      %17 = vector.load %arg5[%16, %c0_11, %c0_12] : memref<6x64x64xbf16, #tpu.memory_space<vmem>>, vector<1x64x64xbf16>
      %18 = vector.shape_cast %17 : vector<1x64x64xbf16> to vector<64x64xbf16>
      %cst_13 = arith.constant dense<0.000000e+00> : vector<8x64xf32>
      %19 = tpu.matmul %6, %18, %cst_13 {dimension_numbers = #tpu.dot_dimension_numbers<[1], [0], [0], [1], [0, 0, 1, 1], [], []>} : vector<8x64xbf16>, vector<64x64xbf16>, vector<8x64xf32> -> vector<8x64xf32>
      %20 = arith.index_cast %arg20 : i32 to index
      %c0_14 = arith.constant 0 : index
      %c0_15 = arith.constant 0 : index
      %21 = vector.load %arg6[%20, %c0_14, %c0_15] : memref<6x1x64xf32, #tpu.memory_space<vmem>>, vector<1x1x64xf32>
      %22 = vector.shape_cast %21 : vector<1x1x64xf32> to vector<1x64xf32>
      %23 = vector.broadcast %22 : vector<1x64xf32> to vector<8x64xf32>
      %24 = arith.addf %19, %23 : vector<8x64xf32>
      %25 = arith.index_cast %arg20 : i32 to index
      %c0_16 = arith.constant 0 : index
      %c0_17 = arith.constant 0 : index
      %26 = vector.load %arg7[%25, %c0_16, %c0_17] : memref<6x64x64xbf16, #tpu.memory_space<vmem>>, vector<1x64x64xbf16>
      %27 = vector.shape_cast %26 : vector<1x64x64xbf16> to vector<64x64xbf16>
      %cst_18 = arith.constant dense<0.000000e+00> : vector<8x64xf32>
      %28 = tpu.matmul %6, %27, %cst_18 {dimension_numbers = #tpu.dot_dimension_numbers<[1], [0], [0], [1], [0, 0, 1, 1], [], []>} : vector<8x64xbf16>, vector<64x64xbf16>, vector<8x64xf32> -> vector<8x64xf32>
      %29 = arith.index_cast %arg20 : i32 to index
      %c0_19 = arith.constant 0 : index
      %c0_20 = arith.constant 0 : index
      %30 = vector.load %arg8[%29, %c0_19, %c0_20] : memref<6x1x64xf32, #tpu.memory_space<vmem>>, vector<1x1x64xf32>
      %31 = vector.shape_cast %30 : vector<1x1x64xf32> to vector<1x64xf32>
      %32 = vector.broadcast %31 : vector<1x64xf32> to vector<8x64xf32>
      %33 = arith.addf %28, %32 : vector<8x64xf32>
      %34 = vector.broadcast %cst : f32 to vector<8x64xf32>
      %35 = arith.mulf %15, %34 : vector<8x64xf32>
      %36 = vector.shape_cast %35 : vector<8x64xf32> to vector<1x8x64xf32>
      %37 = arith.truncf %36 : vector<1x8x64xf32> to vector<1x8x64xbf16>
      %38 = vector.shape_cast %24 : vector<8x64xf32> to vector<1x8x64xf32>
      %39 = arith.truncf %38 : vector<1x8x64xf32> to vector<1x8x64xbf16>
      %40 = vector.shape_cast %33 : vector<8x64xf32> to vector<1x8x64xf32>
      %41 = arith.truncf %40 : vector<1x8x64xf32> to vector<1x8x64xbf16>
      %42 = vector.extract_strided_slice %37 {offsets = [0, 0, 0], sizes = [1, 8, 8], strides = [1, 1, 1]} : vector<1x8x64xbf16> to vector<1x8x8xbf16>
      %43 = vector.extract_strided_slice %39 {offsets = [0, 0, 0], sizes = [1, 8, 8], strides = [1, 1, 1]} : vector<1x8x64xbf16> to vector<1x8x8xbf16>
      %44 = vector.extract_strided_slice %41 {offsets = [0, 0, 0], sizes = [1, 8, 8], strides = [1, 1, 1]} : vector<1x8x64xbf16> to vector<1x8x8xbf16>
      %cst_21 = arith.constant dense<0.000000e+00> : vector<1x8x8xf32>
      %45 = tpu.matmul %42, %43, %cst_21 {dimension_numbers = #tpu.dot_dimension_numbers<[2], [2], [1], [1], [0, 0, 0, 1, 1, 1], [0], [0]>} : vector<1x8x8xbf16>, vector<1x8x8xbf16>, vector<1x8x8xf32> -> vector<1x8x8xf32>
      %cst_22 = arith.constant dense<0xFF800000> : vector<1x8xf32>
      %46 = vector.multi_reduction <maximumf>, %45, %cst_22 [2] : vector<1x8x8xf32> to vector<1x8xf32>
      %47 = vector.shape_cast %46 : vector<1x8xf32> to vector<1x8x1xf32>
      %48 = vector.broadcast %47 : vector<1x8x1xf32> to vector<1x8x8xf32>
      %49 = arith.subf %45, %48 : vector<1x8x8xf32>
      %50 = math.exp %49 : vector<1x8x8xf32>
      %cst_23 = arith.constant dense<0.000000e+00> : vector<1x8xf32>
      %51 = vector.multi_reduction <add>, %50, %cst_23 [2] : vector<1x8x8xf32> to vector<1x8xf32>
      %52 = vector.shape_cast %51 : vector<1x8xf32> to vector<1x8x1xf32>
      %53 = tpu.reciprocal %52 : vector<1x8x1xf32> -> vector<1x8x1xf32>
      %54 = vector.broadcast %53 : vector<1x8x1xf32> to vector<1x8x8xf32>
      %55 = arith.mulf %50, %54 : vector<1x8x8xf32>
      %56 = arith.truncf %55 : vector<1x8x8xf32> to vector<1x8x8xbf16>
      %cst_24 = arith.constant dense<0.000000e+00> : vector<1x8x8xf32>
      %57 = tpu.matmul %56, %44, %cst_24 {dimension_numbers = #tpu.dot_dimension_numbers<[2], [1], [1], [2], [0, 0, 0, 1, 1, 2], [0], [0]>} : vector<1x8x8xbf16>, vector<1x8x8xbf16>, vector<1x8x8xf32> -> vector<1x8x8xf32>
      %58 = vector.extract_strided_slice %37 {offsets = [0, 0, 8], sizes = [1, 8, 8], strides = [1, 1, 1]} : vector<1x8x64xbf16> to vector<1x8x8xbf16>
      %59 = vector.extract_strided_slice %39 {offsets = [0, 0, 8], sizes = [1, 8, 8], strides = [1, 1, 1]} : vector<1x8x64xbf16> to vector<1x8x8xbf16>
      %60 = vector.extract_strided_slice %41 {offsets = [0, 0, 8], sizes = [1, 8, 8], strides = [1, 1, 1]} : vector<1x8x64xbf16> to vector<1x8x8xbf16>
      %cst_25 = arith.constant dense<0.000000e+00> : vector<1x8x8xf32>
      %61 = tpu.matmul %58, %59, %cst_25 {dimension_numbers = #tpu.dot_dimension_numbers<[2], [2], [1], [1], [0, 0, 0, 1, 1, 1], [0], [0]>} : vector<1x8x8xbf16>, vector<1x8x8xbf16>, vector<1x8x8xf32> -> vector<1x8x8xf32>
      %cst_26 = arith.constant dense<0xFF800000> : vector<1x8xf32>
      %62 = vector.multi_reduction <maximumf>, %61, %cst_26 [2] : vector<1x8x8xf32> to vector<1x8xf32>
      %63 = vector.shape_cast %62 : vector<1x8xf32> to vector<1x8x1xf32>
      %64 = vector.broadcast %63 : vector<1x8x1xf32> to vector<1x8x8xf32>
      %65 = arith.subf %61, %64 : vector<1x8x8xf32>
      %66 = math.exp %65 : vector<1x8x8xf32>
      %cst_27 = arith.constant dense<0.000000e+00> : vector<1x8xf32>
      %67 = vector.multi_reduction <add>, %66, %cst_27 [2] : vector<1x8x8xf32> to vector<1x8xf32>
      %68 = vector.shape_cast %67 : vector<1x8xf32> to vector<1x8x1xf32>
      %69 = tpu.reciprocal %68 : vector<1x8x1xf32> -> vector<1x8x1xf32>
      %70 = vector.broadcast %69 : vector<1x8x1xf32> to vector<1x8x8xf32>
      %71 = arith.mulf %66, %70 : vector<1x8x8xf32>
      %72 = arith.truncf %71 : vector<1x8x8xf32> to vector<1x8x8xbf16>
      %cst_28 = arith.constant dense<0.000000e+00> : vector<1x8x8xf32>
      %73 = tpu.matmul %72, %60, %cst_28 {dimension_numbers = #tpu.dot_dimension_numbers<[2], [1], [1], [2], [0, 0, 0, 1, 1, 2], [0], [0]>} : vector<1x8x8xbf16>, vector<1x8x8xbf16>, vector<1x8x8xf32> -> vector<1x8x8xf32>
      %74 = vector.extract_strided_slice %37 {offsets = [0, 0, 16], sizes = [1, 8, 8], strides = [1, 1, 1]} : vector<1x8x64xbf16> to vector<1x8x8xbf16>
      %75 = vector.extract_strided_slice %39 {offsets = [0, 0, 16], sizes = [1, 8, 8], strides = [1, 1, 1]} : vector<1x8x64xbf16> to vector<1x8x8xbf16>
      %76 = vector.extract_strided_slice %41 {offsets = [0, 0, 16], sizes = [1, 8, 8], strides = [1, 1, 1]} : vector<1x8x64xbf16> to vector<1x8x8xbf16>
      %cst_29 = arith.constant dense<0.000000e+00> : vector<1x8x8xf32>
      %77 = tpu.matmul %74, %75, %cst_29 {dimension_numbers = #tpu.dot_dimension_numbers<[2], [2], [1], [1], [0, 0, 0, 1, 1, 1], [0], [0]>} : vector<1x8x8xbf16>, vector<1x8x8xbf16>, vector<1x8x8xf32> -> vector<1x8x8xf32>
      %cst_30 = arith.constant dense<0xFF800000> : vector<1x8xf32>
      %78 = vector.multi_reduction <maximumf>, %77, %cst_30 [2] : vector<1x8x8xf32> to vector<1x8xf32>
      %79 = vector.shape_cast %78 : vector<1x8xf32> to vector<1x8x1xf32>
      %80 = vector.broadcast %79 : vector<1x8x1xf32> to vector<1x8x8xf32>
      %81 = arith.subf %77, %80 : vector<1x8x8xf32>
      %82 = math.exp %81 : vector<1x8x8xf32>
      %cst_31 = arith.constant dense<0.000000e+00> : vector<1x8xf32>
      %83 = vector.multi_reduction <add>, %82, %cst_31 [2] : vector<1x8x8xf32> to vector<1x8xf32>
      %84 = vector.shape_cast %83 : vector<1x8xf32> to vector<1x8x1xf32>
      %85 = tpu.reciprocal %84 : vector<1x8x1xf32> -> vector<1x8x1xf32>
      %86 = vector.broadcast %85 : vector<1x8x1xf32> to vector<1x8x8xf32>
      %87 = arith.mulf %82, %86 : vector<1x8x8xf32>
      %88 = arith.truncf %87 : vector<1x8x8xf32> to vector<1x8x8xbf16>
      %cst_32 = arith.constant dense<0.000000e+00> : vector<1x8x8xf32>
      %89 = tpu.matmul %88, %76, %cst_32 {dimension_numbers = #tpu.dot_dimension_numbers<[2], [1], [1], [2], [0, 0, 0, 1, 1, 2], [0], [0]>} : vector<1x8x8xbf16>, vector<1x8x8xbf16>, vector<1x8x8xf32> -> vector<1x8x8xf32>
      %90 = vector.extract_strided_slice %37 {offsets = [0, 0, 24], sizes = [1, 8, 8], strides = [1, 1, 1]} : vector<1x8x64xbf16> to vector<1x8x8xbf16>
      %91 = vector.extract_strided_slice %39 {offsets = [0, 0, 24], sizes = [1, 8, 8], strides = [1, 1, 1]} : vector<1x8x64xbf16> to vector<1x8x8xbf16>
      %92 = vector.extract_strided_slice %41 {offsets = [0, 0, 24], sizes = [1, 8, 8], strides = [1, 1, 1]} : vector<1x8x64xbf16> to vector<1x8x8xbf16>
      %cst_33 = arith.constant dense<0.000000e+00> : vector<1x8x8xf32>
      %93 = tpu.matmul %90, %91, %cst_33 {dimension_numbers = #tpu.dot_dimension_numbers<[2], [2], [1], [1], [0, 0, 0, 1, 1, 1], [0], [0]>} : vector<1x8x8xbf16>, vector<1x8x8xbf16>, vector<1x8x8xf32> -> vector<1x8x8xf32>
      %cst_34 = arith.constant dense<0xFF800000> : vector<1x8xf32>
      %94 = vector.multi_reduction <maximumf>, %93, %cst_34 [2] : vector<1x8x8xf32> to vector<1x8xf32>
      %95 = vector.shape_cast %94 : vector<1x8xf32> to vector<1x8x1xf32>
      %96 = vector.broadcast %95 : vector<1x8x1xf32> to vector<1x8x8xf32>
      %97 = arith.subf %93, %96 : vector<1x8x8xf32>
      %98 = math.exp %97 : vector<1x8x8xf32>
      %cst_35 = arith.constant dense<0.000000e+00> : vector<1x8xf32>
      %99 = vector.multi_reduction <add>, %98, %cst_35 [2] : vector<1x8x8xf32> to vector<1x8xf32>
      %100 = vector.shape_cast %99 : vector<1x8xf32> to vector<1x8x1xf32>
      %101 = tpu.reciprocal %100 : vector<1x8x1xf32> -> vector<1x8x1xf32>
      %102 = vector.broadcast %101 : vector<1x8x1xf32> to vector<1x8x8xf32>
      %103 = arith.mulf %98, %102 : vector<1x8x8xf32>
      %104 = arith.truncf %103 : vector<1x8x8xf32> to vector<1x8x8xbf16>
      %cst_36 = arith.constant dense<0.000000e+00> : vector<1x8x8xf32>
      %105 = tpu.matmul %104, %92, %cst_36 {dimension_numbers = #tpu.dot_dimension_numbers<[2], [1], [1], [2], [0, 0, 0, 1, 1, 2], [0], [0]>} : vector<1x8x8xbf16>, vector<1x8x8xbf16>, vector<1x8x8xf32> -> vector<1x8x8xf32>
      %106 = vector.extract_strided_slice %37 {offsets = [0, 0, 32], sizes = [1, 8, 8], strides = [1, 1, 1]} : vector<1x8x64xbf16> to vector<1x8x8xbf16>
      %107 = vector.extract_strided_slice %39 {offsets = [0, 0, 32], sizes = [1, 8, 8], strides = [1, 1, 1]} : vector<1x8x64xbf16> to vector<1x8x8xbf16>
      %108 = vector.extract_strided_slice %41 {offsets = [0, 0, 32], sizes = [1, 8, 8], strides = [1, 1, 1]} : vector<1x8x64xbf16> to vector<1x8x8xbf16>
      %cst_37 = arith.constant dense<0.000000e+00> : vector<1x8x8xf32>
      %109 = tpu.matmul %106, %107, %cst_37 {dimension_numbers = #tpu.dot_dimension_numbers<[2], [2], [1], [1], [0, 0, 0, 1, 1, 1], [0], [0]>} : vector<1x8x8xbf16>, vector<1x8x8xbf16>, vector<1x8x8xf32> -> vector<1x8x8xf32>
      %cst_38 = arith.constant dense<0xFF800000> : vector<1x8xf32>
      %110 = vector.multi_reduction <maximumf>, %109, %cst_38 [2] : vector<1x8x8xf32> to vector<1x8xf32>
      %111 = vector.shape_cast %110 : vector<1x8xf32> to vector<1x8x1xf32>
      %112 = vector.broadcast %111 : vector<1x8x1xf32> to vector<1x8x8xf32>
      %113 = arith.subf %109, %112 : vector<1x8x8xf32>
      %114 = math.exp %113 : vector<1x8x8xf32>
      %cst_39 = arith.constant dense<0.000000e+00> : vector<1x8xf32>
      %115 = vector.multi_reduction <add>, %114, %cst_39 [2] : vector<1x8x8xf32> to vector<1x8xf32>
      %116 = vector.shape_cast %115 : vector<1x8xf32> to vector<1x8x1xf32>
      %117 = tpu.reciprocal %116 : vector<1x8x1xf32> -> vector<1x8x1xf32>
      %118 = vector.broadcast %117 : vector<1x8x1xf32> to vector<1x8x8xf32>
      %119 = arith.mulf %114, %118 : vector<1x8x8xf32>
      %120 = arith.truncf %119 : vector<1x8x8xf32> to vector<1x8x8xbf16>
      %cst_40 = arith.constant dense<0.000000e+00> : vector<1x8x8xf32>
      %121 = tpu.matmul %120, %108, %cst_40 {dimension_numbers = #tpu.dot_dimension_numbers<[2], [1], [1], [2], [0, 0, 0, 1, 1, 2], [0], [0]>} : vector<1x8x8xbf16>, vector<1x8x8xbf16>, vector<1x8x8xf32> -> vector<1x8x8xf32>
      %122 = vector.extract_strided_slice %37 {offsets = [0, 0, 40], sizes = [1, 8, 8], strides = [1, 1, 1]} : vector<1x8x64xbf16> to vector<1x8x8xbf16>
      %123 = vector.extract_strided_slice %39 {offsets = [0, 0, 40], sizes = [1, 8, 8], strides = [1, 1, 1]} : vector<1x8x64xbf16> to vector<1x8x8xbf16>
      %124 = vector.extract_strided_slice %41 {offsets = [0, 0, 40], sizes = [1, 8, 8], strides = [1, 1, 1]} : vector<1x8x64xbf16> to vector<1x8x8xbf16>
      %cst_41 = arith.constant dense<0.000000e+00> : vector<1x8x8xf32>
      %125 = tpu.matmul %122, %123, %cst_41 {dimension_numbers = #tpu.dot_dimension_numbers<[2], [2], [1], [1], [0, 0, 0, 1, 1, 1], [0], [0]>} : vector<1x8x8xbf16>, vector<1x8x8xbf16>, vector<1x8x8xf32> -> vector<1x8x8xf32>
      %cst_42 = arith.constant dense<0xFF800000> : vector<1x8xf32>
      %126 = vector.multi_reduction <maximumf>, %125, %cst_42 [2] : vector<1x8x8xf32> to vector<1x8xf32>
      %127 = vector.shape_cast %126 : vector<1x8xf32> to vector<1x8x1xf32>
      %128 = vector.broadcast %127 : vector<1x8x1xf32> to vector<1x8x8xf32>
      %129 = arith.subf %125, %128 : vector<1x8x8xf32>
      %130 = math.exp %129 : vector<1x8x8xf32>
      %cst_43 = arith.constant dense<0.000000e+00> : vector<1x8xf32>
      %131 = vector.multi_reduction <add>, %130, %cst_43 [2] : vector<1x8x8xf32> to vector<1x8xf32>
      %132 = vector.shape_cast %131 : vector<1x8xf32> to vector<1x8x1xf32>
      %133 = tpu.reciprocal %132 : vector<1x8x1xf32> -> vector<1x8x1xf32>
      %134 = vector.broadcast %133 : vector<1x8x1xf32> to vector<1x8x8xf32>
      %135 = arith.mulf %130, %134 : vector<1x8x8xf32>
      %136 = arith.truncf %135 : vector<1x8x8xf32> to vector<1x8x8xbf16>
      %cst_44 = arith.constant dense<0.000000e+00> : vector<1x8x8xf32>
      %137 = tpu.matmul %136, %124, %cst_44 {dimension_numbers = #tpu.dot_dimension_numbers<[2], [1], [1], [2], [0, 0, 0, 1, 1, 2], [0], [0]>} : vector<1x8x8xbf16>, vector<1x8x8xbf16>, vector<1x8x8xf32> -> vector<1x8x8xf32>
      %138 = vector.extract_strided_slice %37 {offsets = [0, 0, 48], sizes = [1, 8, 8], strides = [1, 1, 1]} : vector<1x8x64xbf16> to vector<1x8x8xbf16>
      %139 = vector.extract_strided_slice %39 {offsets = [0, 0, 48], sizes = [1, 8, 8], strides = [1, 1, 1]} : vector<1x8x64xbf16> to vector<1x8x8xbf16>
      %140 = vector.extract_strided_slice %41 {offsets = [0, 0, 48], sizes = [1, 8, 8], strides = [1, 1, 1]} : vector<1x8x64xbf16> to vector<1x8x8xbf16>
      %cst_45 = arith.constant dense<0.000000e+00> : vector<1x8x8xf32>
      %141 = tpu.matmul %138, %139, %cst_45 {dimension_numbers = #tpu.dot_dimension_numbers<[2], [2], [1], [1], [0, 0, 0, 1, 1, 1], [0], [0]>} : vector<1x8x8xbf16>, vector<1x8x8xbf16>, vector<1x8x8xf32> -> vector<1x8x8xf32>
      %cst_46 = arith.constant dense<0xFF800000> : vector<1x8xf32>
      %142 = vector.multi_reduction <maximumf>, %141, %cst_46 [2] : vector<1x8x8xf32> to vector<1x8xf32>
      %143 = vector.shape_cast %142 : vector<1x8xf32> to vector<1x8x1xf32>
      %144 = vector.broadcast %143 : vector<1x8x1xf32> to vector<1x8x8xf32>
      %145 = arith.subf %141, %144 : vector<1x8x8xf32>
      %146 = math.exp %145 : vector<1x8x8xf32>
      %cst_47 = arith.constant dense<0.000000e+00> : vector<1x8xf32>
      %147 = vector.multi_reduction <add>, %146, %cst_47 [2] : vector<1x8x8xf32> to vector<1x8xf32>
      %148 = vector.shape_cast %147 : vector<1x8xf32> to vector<1x8x1xf32>
      %149 = tpu.reciprocal %148 : vector<1x8x1xf32> -> vector<1x8x1xf32>
      %150 = vector.broadcast %149 : vector<1x8x1xf32> to vector<1x8x8xf32>
      %151 = arith.mulf %146, %150 : vector<1x8x8xf32>
      %152 = arith.truncf %151 : vector<1x8x8xf32> to vector<1x8x8xbf16>
      %cst_48 = arith.constant dense<0.000000e+00> : vector<1x8x8xf32>
      %153 = tpu.matmul %152, %140, %cst_48 {dimension_numbers = #tpu.dot_dimension_numbers<[2], [1], [1], [2], [0, 0, 0, 1, 1, 2], [0], [0]>} : vector<1x8x8xbf16>, vector<1x8x8xbf16>, vector<1x8x8xf32> -> vector<1x8x8xf32>
      %154 = vector.extract_strided_slice %37 {offsets = [0, 0, 56], sizes = [1, 8, 8], strides = [1, 1, 1]} : vector<1x8x64xbf16> to vector<1x8x8xbf16>
      %155 = vector.extract_strided_slice %39 {offsets = [0, 0, 56], sizes = [1, 8, 8], strides = [1, 1, 1]} : vector<1x8x64xbf16> to vector<1x8x8xbf16>
      %156 = vector.extract_strided_slice %41 {offsets = [0, 0, 56], sizes = [1, 8, 8], strides = [1, 1, 1]} : vector<1x8x64xbf16> to vector<1x8x8xbf16>
      %cst_49 = arith.constant dense<0.000000e+00> : vector<1x8x8xf32>
      %157 = tpu.matmul %154, %155, %cst_49 {dimension_numbers = #tpu.dot_dimension_numbers<[2], [2], [1], [1], [0, 0, 0, 1, 1, 1], [0], [0]>} : vector<1x8x8xbf16>, vector<1x8x8xbf16>, vector<1x8x8xf32> -> vector<1x8x8xf32>
      %cst_50 = arith.constant dense<0xFF800000> : vector<1x8xf32>
      %158 = vector.multi_reduction <maximumf>, %157, %cst_50 [2] : vector<1x8x8xf32> to vector<1x8xf32>
      %159 = vector.shape_cast %158 : vector<1x8xf32> to vector<1x8x1xf32>
      %160 = vector.broadcast %159 : vector<1x8x1xf32> to vector<1x8x8xf32>
      %161 = arith.subf %157, %160 : vector<1x8x8xf32>
      %162 = math.exp %161 : vector<1x8x8xf32>
      %cst_51 = arith.constant dense<0.000000e+00> : vector<1x8xf32>
      %163 = vector.multi_reduction <add>, %162, %cst_51 [2] : vector<1x8x8xf32> to vector<1x8xf32>
      %164 = vector.shape_cast %163 : vector<1x8xf32> to vector<1x8x1xf32>
      %165 = tpu.reciprocal %164 : vector<1x8x1xf32> -> vector<1x8x1xf32>
      %166 = vector.broadcast %165 : vector<1x8x1xf32> to vector<1x8x8xf32>
      %167 = arith.mulf %162, %166 : vector<1x8x8xf32>
      %168 = arith.truncf %167 : vector<1x8x8xf32> to vector<1x8x8xbf16>
      %cst_52 = arith.constant dense<0.000000e+00> : vector<1x8x8xf32>
      %169 = tpu.matmul %168, %156, %cst_52 {dimension_numbers = #tpu.dot_dimension_numbers<[2], [1], [1], [2], [0, 0, 0, 1, 1, 2], [0], [0]>} : vector<1x8x8xbf16>, vector<1x8x8xbf16>, vector<1x8x8xf32> -> vector<1x8x8xf32>
      %170 = tpu.concatenate %57, %73, %89, %105, %121, %137, %153, %169 in 2 : vector<1x8x8xf32>, vector<1x8x8xf32>, vector<1x8x8xf32>, vector<1x8x8xf32>, vector<1x8x8xf32>, vector<1x8x8xf32>, vector<1x8x8xf32>, vector<1x8x8xf32> -> vector<1x8x64xf32>
      %171 = vector.shape_cast %170 : vector<1x8x64xf32> to vector<8x64xf32>
      %172 = arith.truncf %171 : vector<8x64xf32> to vector<8x64xbf16>
      %173 = arith.index_cast %arg20 : i32 to index
      %c0_53 = arith.constant 0 : index
      %c0_54 = arith.constant 0 : index
      %174 = vector.load %arg9[%173, %c0_53, %c0_54] : memref<6x64x64xbf16, #tpu.memory_space<vmem>>, vector<1x64x64xbf16>
      %175 = vector.shape_cast %174 : vector<1x64x64xbf16> to vector<64x64xbf16>
      %cst_55 = arith.constant dense<0.000000e+00> : vector<8x64xf32>
      %176 = tpu.matmul %172, %175, %cst_55 {dimension_numbers = #tpu.dot_dimension_numbers<[1], [0], [0], [1], [0, 0, 1, 1], [], []>} : vector<8x64xbf16>, vector<64x64xbf16>, vector<8x64xf32> -> vector<8x64xf32>
      %177 = arith.index_cast %arg20 : i32 to index
      %c0_56 = arith.constant 0 : index
      %c0_57 = arith.constant 0 : index
      %178 = vector.load %arg10[%177, %c0_56, %c0_57] : memref<6x1x64xf32, #tpu.memory_space<vmem>>, vector<1x1x64xf32>
      %179 = vector.shape_cast %178 : vector<1x1x64xf32> to vector<1x64xf32>
      %180 = vector.broadcast %179 : vector<1x64xf32> to vector<8x64xf32>
      %181 = arith.addf %176, %180 : vector<8x64xf32>
      %182 = arith.addf %arg21, %181 : vector<8x64xf32>
      %cst_58 = arith.constant dense<0.000000e+00> : vector<8xf32>
      %183 = vector.multi_reduction <add>, %182, %cst_58 [1] : vector<8x64xf32> to vector<8xf32>
      %184 = vector.shape_cast %183 : vector<8xf32> to vector<8x1xf32>
      %cst_59 = arith.constant 6.400000e+01 : f32
      %185 = vector.broadcast %cst_59 : f32 to vector<8x1xf32>
      %186 = arith.divf %184, %185 : vector<8x1xf32>
      %187 = vector.broadcast %186 : vector<8x1xf32> to vector<8x64xf32>
      %188 = arith.subf %182, %187 : vector<8x64xf32>
      %189 = arith.mulf %188, %188 : vector<8x64xf32>
      %cst_60 = arith.constant dense<0.000000e+00> : vector<8xf32>
      %190 = vector.multi_reduction <add>, %189, %cst_60 [1] : vector<8x64xf32> to vector<8xf32>
      %191 = vector.shape_cast %190 : vector<8xf32> to vector<8x1xf32>
      %cst_61 = arith.constant 6.400000e+01 : f32
      %192 = vector.broadcast %cst_61 : f32 to vector<8x1xf32>
      %193 = arith.divf %191, %192 : vector<8x1xf32>
      %194 = vector.broadcast %186 : vector<8x1xf32> to vector<8x64xf32>
      %195 = arith.subf %182, %194 : vector<8x64xf32>
      %cst_62 = arith.constant 9.99999974E-6 : f32
      %196 = vector.broadcast %cst_62 : f32 to vector<8x1xf32>
      %197 = arith.addf %193, %196 : vector<8x1xf32>
      %198 = math.rsqrt %197 : vector<8x1xf32>
      %199 = vector.broadcast %198 : vector<8x1xf32> to vector<8x64xf32>
      %200 = arith.mulf %195, %199 : vector<8x64xf32>
      %201 = arith.index_cast %arg20 : i32 to index
      %c0_63 = arith.constant 0 : index
      %c0_64 = arith.constant 0 : index
      %202 = vector.load %arg11[%201, %c0_63, %c0_64] : memref<6x1x64xf32, #tpu.memory_space<vmem>>, vector<1x1x64xf32>
      %203 = vector.shape_cast %202 : vector<1x1x64xf32> to vector<1x64xf32>
      %204 = vector.broadcast %203 : vector<1x64xf32> to vector<8x64xf32>
      %205 = arith.mulf %200, %204 : vector<8x64xf32>
      %206 = arith.index_cast %arg20 : i32 to index
      %c0_65 = arith.constant 0 : index
      %c0_66 = arith.constant 0 : index
      %207 = vector.load %arg12[%206, %c0_65, %c0_66] : memref<6x1x64xf32, #tpu.memory_space<vmem>>, vector<1x1x64xf32>
      %208 = vector.shape_cast %207 : vector<1x1x64xf32> to vector<1x64xf32>
      %209 = vector.broadcast %208 : vector<1x64xf32> to vector<8x64xf32>
      %210 = arith.addf %205, %209 : vector<8x64xf32>
      %211 = arith.truncf %210 : vector<8x64xf32> to vector<8x64xbf16>
      %cst_67 = arith.constant 0.000000e+00 : f32
      %212 = vector.broadcast %cst_67 : f32 to vector<8x64xf32>
      %c0_i32_68 = arith.constant 0 : i32
      %c4_i32 = arith.constant 4 : i32
      %213 = arith.addi %c0_i32_68, %c4_i32 : i32
      %c1_i32_69 = arith.constant 1 : i32
      %214 = scf.for %arg22 = %c0_i32_68 to %213 step %c1_i32_69 iter_args(%arg23 = %212) -> (vector<8x64xf32>)  : i32 {
        %c512_i32 = arith.constant 512 : i32
        %249 = arith.muli %arg22, %c512_i32 : i32
        %250 = tpu.assume_multiple %249, 512 : i32
        %251 = arith.index_cast %arg20 : i32 to index
        %c0_82 = arith.constant 0 : index
        %252 = arith.index_cast %250 : i32 to index
        %253 = vector.load %arg13[%251, %c0_82, %252] : memref<6x64x2048xbf16, #tpu.memory_space<vmem>>, vector<1x64x512xbf16>
        %254 = vector.shape_cast %253 : vector<1x64x512xbf16> to vector<64x512xbf16>
        %255 = arith.index_cast %arg20 : i32 to index
        %c0_83 = arith.constant 0 : index
        %256 = arith.index_cast %250 : i32 to index
        %257 = vector.load %arg14[%255, %c0_83, %256] : memref<6x1x2048xf32, #tpu.memory_space<vmem>>, vector<1x1x512xf32>
        %258 = vector.shape_cast %257 : vector<1x1x512xf32> to vector<1x512xf32>
        %cst_84 = arith.constant dense<0.000000e+00> : vector<8x512xf32>
        %259 = tpu.matmul %211, %254, %cst_84 {dimension_numbers = #tpu.dot_dimension_numbers<[1], [0], [0], [1], [0, 0, 1, 1], [], []>} : vector<8x64xbf16>, vector<64x512xbf16>, vector<8x512xf32> -> vector<8x512xf32>
        %260 = vector.broadcast %258 : vector<1x512xf32> to vector<8x512xf32>
        %261 = arith.addf %259, %260 : vector<8x512xf32>
        %cst_85 = arith.constant 0.000000e+00 : f32
        %262 = vector.broadcast %cst_85 : f32 to vector<8x512xf32>
        %263 = arith.maximumf %261, %262 : vector<8x512xf32>
        %264 = arith.index_cast %arg20 : i32 to index
        %265 = arith.index_cast %250 : i32 to index
        %c0_86 = arith.constant 0 : index
        %266 = vector.load %arg15[%264, %265, %c0_86] : memref<6x2048x64xbf16, #tpu.memory_space<vmem>>, vector<1x512x64xbf16>
        %267 = vector.shape_cast %266 : vector<1x512x64xbf16> to vector<512x64xbf16>
        %268 = arith.truncf %263 : vector<8x512xf32> to vector<8x512xbf16>
        %cst_87 = arith.constant dense<0.000000e+00> : vector<8x64xf32>
        %269 = tpu.matmul %268, %267, %cst_87 {dimension_numbers = #tpu.dot_dimension_numbers<[1], [0], [0], [1], [0, 0, 1, 1], [], []>} : vector<8x512xbf16>, vector<512x64xbf16>, vector<8x64xf32> -> vector<8x64xf32>
        %270 = arith.addf %arg23, %269 : vector<8x64xf32>
        scf.yield %270 : vector<8x64xf32>
      }
      %c4_i32_70 = arith.constant 4 : i32
      %215 = arith.index_cast %arg20 : i32 to index
      %c0_71 = arith.constant 0 : index
      %c0_72 = arith.constant 0 : index
      %216 = vector.load %arg16[%215, %c0_71, %c0_72] : memref<6x1x64xf32, #tpu.memory_space<vmem>>, vector<1x1x64xf32>
      %217 = vector.shape_cast %216 : vector<1x1x64xf32> to vector<1x64xf32>
      %218 = vector.broadcast %217 : vector<1x64xf32> to vector<8x64xf32>
      %219 = arith.addf %214, %218 : vector<8x64xf32>
      %220 = arith.addf %210, %219 : vector<8x64xf32>
      %cst_73 = arith.constant dense<0.000000e+00> : vector<8xf32>
      %221 = vector.multi_reduction <add>, %220, %cst_73 [1] : vector<8x64xf32> to vector<8xf32>
      %222 = vector.shape_cast %221 : vector<8xf32> to vector<8x1xf32>
      %cst_74 = arith.constant 6.400000e+01 : f32
      %223 = vector.broadcast %cst_74 : f32 to vector<8x1xf32>
      %224 = arith.divf %222, %223 : vector<8x1xf32>
      %225 = vector.broadcast %224 : vector<8x1xf32> to vector<8x64xf32>
      %226 = arith.subf %220, %225 : vector<8x64xf32>
      %227 = arith.mulf %226, %226 : vector<8x64xf32>
      %cst_75 = arith.constant dense<0.000000e+00> : vector<8xf32>
      %228 = vector.multi_reduction <add>, %227, %cst_75 [1] : vector<8x64xf32> to vector<8xf32>
      %229 = vector.shape_cast %228 : vector<8xf32> to vector<8x1xf32>
      %cst_76 = arith.constant 6.400000e+01 : f32
      %230 = vector.broadcast %cst_76 : f32 to vector<8x1xf32>
      %231 = arith.divf %229, %230 : vector<8x1xf32>
      %232 = vector.broadcast %224 : vector<8x1xf32> to vector<8x64xf32>
      %233 = arith.subf %220, %232 : vector<8x64xf32>
      %cst_77 = arith.constant 9.99999974E-6 : f32
      %234 = vector.broadcast %cst_77 : f32 to vector<8x1xf32>
      %235 = arith.addf %231, %234 : vector<8x1xf32>
      %236 = math.rsqrt %235 : vector<8x1xf32>
      %237 = vector.broadcast %236 : vector<8x1xf32> to vector<8x64xf32>
      %238 = arith.mulf %233, %237 : vector<8x64xf32>
      %239 = arith.index_cast %arg20 : i32 to index
      %c0_78 = arith.constant 0 : index
      %c0_79 = arith.constant 0 : index
      %240 = vector.load %arg17[%239, %c0_78, %c0_79] : memref<6x1x64xf32, #tpu.memory_space<vmem>>, vector<1x1x64xf32>
      %241 = vector.shape_cast %240 : vector<1x1x64xf32> to vector<1x64xf32>
      %242 = vector.broadcast %241 : vector<1x64xf32> to vector<8x64xf32>
      %243 = arith.mulf %238, %242 : vector<8x64xf32>
      %244 = arith.index_cast %arg20 : i32 to index
      %c0_80 = arith.constant 0 : index
      %c0_81 = arith.constant 0 : index
      %245 = vector.load %arg18[%244, %c0_80, %c0_81] : memref<6x1x64xf32, #tpu.memory_space<vmem>>, vector<1x1x64xf32>
      %246 = vector.shape_cast %245 : vector<1x1x64xf32> to vector<1x64xf32>
      %247 = vector.broadcast %246 : vector<1x64xf32> to vector<8x64xf32>
      %248 = arith.addf %243, %247 : vector<8x64xf32>
      scf.yield %248 : vector<8x64xf32>
    }
    %c6_i32_3 = arith.constant 6 : i32
    %c0_4 = arith.constant 0 : index
    %c0_5 = arith.constant 0 : index
    %5 = vector.load %arg19[%c0_4, %c0_5] : memref<8x64xf32, #tpu.memory_space<vmem>>, vector<8x64xf32>
    tpu.vector_store %arg19[%c0_4, %c0_5], %4 {strides = array<i32>} : memref<8x64xf32, #tpu.memory_space<vmem>>, vector<8x64xf32>,
    return
  }
  func.func @transform_0(%arg0: i32) -> (i32, i32) {
    %c0_i32 = arith.constant 0 : i32
    %c0_i32_0 = arith.constant 0 : i32
    return %arg0, %c0_i32 : i32, i32
  }
  func.func @transform_1(%arg0: i32) -> (i32, i32) {
    %c0_i32 = arith.constant 0 : i32
    %c0_i32_0 = arith.constant 0 : i32
    return %arg0, %c0_i32 : i32, i32
  }
  func.func @transform_2(%arg0: i32) -> (i32, i32, i32) {
    %c0_i32 = arith.constant 0 : i32
    %c0_i32_0 = arith.constant 0 : i32
    %c0_i32_1 = arith.constant 0 : i32
    %c0_i32_2 = arith.constant 0 : i32
    return %c0_i32, %c0_i32_0, %c0_i32_1 : i32, i32, i32
  }
  func.func @transform_3(%arg0: i32) -> (i32, i32, i32) {
    %c0_i32 = arith.constant 0 : i32
    %c0_i32_0 = arith.constant 0 : i32
    %c0_i32_1 = arith.constant 0 : i32
    %c0_i32_2 = arith.constant 0 : i32
    return %c0_i32, %c0_i32_0, %c0_i32_1 : i32, i32, i32
  }
  func.func @transform_4(%arg0: i32) -> (i32, i32, i32) {
    %c0_i32 = arith.constant 0 : i32
    %c0_i32_0 = arith.constant 0 : i32
    %c0_i32_1 = arith.constant 0 : i32
    %c0_i32_2 = arith.constant 0 : i32
    return %c0_i32, %c0_i32_0, %c0_i32_1 : i32, i32, i32
  }
  func.func @transform_5(%arg0: i32) -> (i32, i32, i32) {
    %c0_i32 = arith.constant 0 : i32
    %c0_i32_0 = arith.constant 0 : i32
    %c0_i32_1 = arith.constant 0 : i32
    %c0_i32_2 = arith.constant 0 : i32
    return %c0_i32, %c0_i32_0, %c0_i32_1 : i32, i32, i32
  }
  func.func @transform_6(%arg0: i32) -> (i32, i32, i32) {
    %c0_i32 = arith.constant 0 : i32
    %c0_i32_0 = arith.constant 0 : i32
    %c0_i32_1 = arith.constant 0 : i32
    %c0_i32_2 = arith.constant 0 : i32
    return %c0_i32, %c0_i32_0, %c0_i32_1 : i32, i32, i32
  }
  func.func @transform_7(%arg0: i32) -> (i32, i32, i32) {
    %c0_i32 = arith.constant 0 : i32
    %c0_i32_0 = arith.constant 0 : i32
    %c0_i32_1 = arith.constant 0 : i32
    %c0_i32_2 = arith.constant 0 : i32
    return %c0_i32, %c0_i32_0, %c0_i32_1 : i32, i32, i32
  }
  func.func @transform_8(%arg0: i32) -> (i32, i32, i32) {
    %c0_i32 = arith.constant 0 : i32
    %c0_i32_0 = arith.constant 0 : i32
    %c0_i32_1 = arith.constant 0 : i32
    %c0_i32_2 = arith.constant 0 : i32
    return %c0_i32, %c0_i32_0, %c0_i32_1 : i32, i32, i32
  }
  func.func @transform_9(%arg0: i32) -> (i32, i32, i32) {
    %c0_i32 = arith.constant 0 : i32
    %c0_i32_0 = arith.constant 0 : i32
    %c0_i32_1 = arith.constant 0 : i32
    %c0_i32_2 = arith.constant 0 : i32
    return %c0_i32, %c0_i32_0, %c0_i32_1 : i32, i32, i32
  }
  func.func @transform_10(%arg0: i32) -> (i32, i32, i32) {
    %c0_i32 = arith.constant 0 : i32
    %c0_i32_0 = arith.constant 0 : i32
    %c0_i32_1 = arith.constant 0 : i32
    %c0_i32_2 = arith.constant 0 : i32
    return %c0_i32, %c0_i32_0, %c0_i32_1 : i32, i32, i32
  }
  func.func @transform_11(%arg0: i32) -> (i32, i32, i32) {
    %c0_i32 = arith.constant 0 : i32
    %c0_i32_0 = arith.constant 0 : i32
    %c0_i32_1 = arith.constant 0 : i32
    %c0_i32_2 = arith.constant 0 : i32
    return %c0_i32, %c0_i32_0, %c0_i32_1 : i32, i32, i32
  }
  func.func @transform_12(%arg0: i32) -> (i32, i32, i32) {
    %c0_i32 = arith.constant 0 : i32
    %c0_i32_0 = arith.constant 0 : i32
    %c0_i32_1 = arith.constant 0 : i32
    %c0_i32_2 = arith.constant 0 : i32
    return %c0_i32, %c0_i32_0, %c0_i32_1 : i32, i32, i32
  }
  func.func @transform_13(%arg0: i32) -> (i32, i32, i32) {
    %c0_i32 = arith.constant 0 : i32
    %c0_i32_0 = arith.constant 0 : i32
    %c0_i32_1 = arith.constant 0 : i32
    %c0_i32_2 = arith.constant 0 : i32
    return %c0_i32, %c0_i32_0, %c0_i32_1 : i32, i32, i32
  }
  func.func @transform_14(%arg0: i32) -> (i32, i32, i32) {
    %c0_i32 = arith.constant 0 : i32
    %c0_i32_0 = arith.constant 0 : i32
    %c0_i32_1 = arith.constant 0 : i32
    %c0_i32_2 = arith.constant 0 : i32
    return %c0_i32, %c0_i32_0, %c0_i32_1 : i32, i32, i32
  }
  func.func @transform_15(%arg0: i32) -> (i32, i32, i32) {
    %c0_i32 = arith.constant 0 : i32
    %c0_i32_0 = arith.constant 0 : i32
    %c0_i32_1 = arith.constant 0 : i32
    %c0_i32_2 = arith.constant 0 : i32
    return %c0_i32, %c0_i32_0, %c0_i32_1 : i32, i32, i32
  }
  func.func @transform_16(%arg0: i32) -> (i32, i32, i32) {
    %c0_i32 = arith.constant 0 : i32
    %c0_i32_0 = arith.constant 0 : i32
    %c0_i32_1 = arith.constant 0 : i32
    %c0_i32_2 = arith.constant 0 : i32
    return %c0_i32, %c0_i32_0, %c0_i32_1 : i32, i32, i32
  }
  func.func @transform_17(%arg0: i32) -> (i32, i32, i32) {
    %c0_i32 = arith.constant 0 : i32
    %c0_i32_0 = arith.constant 0 : i32
    %c0_i32_1 = arith.constant 0 : i32
    %c0_i32_2 = arith.constant 0 : i32
    return %c0_i32, %c0_i32_0, %c0_i32_1 : i32, i32, i32
  }
  func.func @transform_18(%arg0: i32) -> (i32, i32) {
    %c0_i32 = arith.constant 0 : i32
    %c0_i32_0 = arith.constant 0 : i32
    return %arg0, %c0_i32 : i32, i32
  }
}

</mosaic_0001>

<llo_original>
// kernel: tpu_custom_call.1
$region0: #{tpu_custom_call.1}
  #allocation0 [shape = 'u32[]', space=smem, size = 0x4, offset = 0x4, fixed_abs, tag = 'smem constant byte address 0x4 - core index']
  #allocation1 [shape = 'u32[144,128]{1,0:T(1,128)}', space=vmem, size = 0x12000, scoped, tag = 'internal scratch']
  %s0 = inlined_call_operand.vmem [shape: f32[16,64], index: 0, kind: input, shape index: {}]
  %s1 = inlined_call_operand.vmem [shape: f32[16,64], index: 1, kind: input, shape index: {}]
  %s2 = inlined_call_operand.vmem [shape: bf16[6,64,64], index: 2, kind: input, shape index: {}]
  %s3 = inlined_call_operand.vmem [shape: f32[6,1,64], index: 3, kind: input, shape index: {}]
  %s4 = inlined_call_operand.vmem [shape: bf16[6,64,64], index: 4, kind: input, shape index: {}]
  %s5 = inlined_call_operand.vmem [shape: f32[6,1,64], index: 5, kind: input, shape index: {}]
  %s6 = inlined_call_operand.vmem [shape: bf16[6,64,64], index: 6, kind: input, shape index: {}]
  %s7 = inlined_call_operand.vmem [shape: f32[6,1,64], index: 7, kind: input, shape index: {}]
  %s8 = inlined_call_operand.vmem [shape: bf16[6,64,64], index: 8, kind: input, shape index: {}]
  %s9 = inlined_call_operand.vmem [shape: f32[6,1,64], index: 9, kind: input, shape index: {}]
  %s10 = inlined_call_operand.vmem [shape: f32[6,1,64], index: 10, kind: input, shape index: {}]
  %s11 = inlined_call_operand.vmem [shape: f32[6,1,64], index: 11, kind: input, shape index: {}]
  %s12 = inlined_call_operand.vmem [shape: bf16[6,64,2048], index: 12, kind: input, shape index: {}]
  %s13 = inlined_call_operand.vmem [shape: f32[6,1,2048], index: 13, kind: input, shape index: {}]
  %s14 = inlined_call_operand.vmem [shape: bf16[6,2048,64], index: 14, kind: input, shape index: {}]
  %s15 = inlined_call_operand.vmem [shape: f32[6,1,64], index: 15, kind: input, shape index: {}]
  %s16 = inlined_call_operand.vmem [shape: f32[6,1,64], index: 16, kind: input, shape index: {}]
  %s17 = inlined_call_operand.vmem [shape: f32[6,1,64], index: 17, kind: input, shape index: {}]
  %s18 = inlined_call_operand.hbm [shape: f32[16,64], index: 18, kind: output, shape index: {}]
  %s19 = sld [smem:[#allocation0]]
  $region119: #{tpu_custom_call.1} parent=0
    _
  %s21 = ssub.s32 1, %s19
  %s22 = scalar_select 0, %s21, %s19
  $region1: #{tpu_custom_call.1} parent=0
    #allocation2 [shape = 'u8[8192]{0}', space=vmem, size = 0x2000, scoped, tag = 'output window, operand 0']
    #allocation3 [shape = 's32[2]{0}', space=sflag, size = 0x8, scoped, tag = 'scoped memory for tpu_custom_call.1']
    %23 = vsyncpa [#allocation3], 0
    %s24 = scalar_lea.sflag [#allocation3], 1
    %25 = vsyncpa %s24, 0
    loop: start=0, step=1, limit=4
    $region2: #{tpu_custom_call.1} parent=1 // loop_pre_header
      _
    $region3: #{tpu_custom_call.1} parent=1 // loop_header
      %s27 = sphi 0, %s31
      %p28 = scmp.ge.s32.totalorder %s27, 4
      %s37 = sphi 0, %s39
      %s40 = sphi 0, %s37
      %s41 = sphi 0, %s40
      %s57 = sphi 0, %s41
      %s63 = sphi 0, %s65
      %s66 = sphi 0, %s63
      %s67 = sphi 0, %s66
      %s83 = sphi 0, %s67
      %s87 = sphi 0, %s87
      %s89 = sphi 0, %s87
      %s90 = sphi 0, %s89
      %s104 = sphi 0, %s90
      %s108 = sphi 0, %s108
      %s110 = sphi 0, %s108
      %s111 = sphi 0, %s110
      %s125 = sphi 0, %s111
      %s129 = sphi 0, %s129
      %s131 = sphi 0, %s129
      %s132 = sphi 0, %s131
      %s146 = sphi 0, %s132
      %s150 = sphi 0, %s150
      %s152 = sphi 0, %s150
      %s153 = sphi 0, %s152
      %s167 = sphi 0, %s153
      %s171 = sphi 0, %s171
      %s173 = sphi 0, %s171
      %s174 = sphi 0, %s173
      %s188 = sphi 0, %s174
      %s192 = sphi 0, %s192
      %s194 = sphi 0, %s192
      %s195 = sphi 0, %s194
      %s209 = sphi 0, %s195
      %s213 = sphi 0, %s213
      %s215 = sphi 0, %s213
      %s216 = sphi 0, %s215
      %s230 = sphi 0, %s216
      %s234 = sphi 0, %s234
      %s236 = sphi 0, %s234
      %s237 = sphi 0, %s236
      %s251 = sphi 0, %s237
      %s255 = sphi 0, %s255
      %s257 = sphi 0, %s255
      %s258 = sphi 0, %s257
      %s272 = sphi 0, %s258
      %s276 = sphi 0, %s276
      %s278 = sphi 0, %s276
      %s279 = sphi 0, %s278
      %s293 = sphi 0, %s279
      %s297 = sphi 0, %s297
      %s299 = sphi 0, %s297
      %s300 = sphi 0, %s299
      %s314 = sphi 0, %s300
      %s318 = sphi 0, %s318
      %s320 = sphi 0, %s318
      %s321 = sphi 0, %s320
      %s335 = sphi 0, %s321
      %s339 = sphi 0, %s339
      %s341 = sphi 0, %s339
      %s342 = sphi 0, %s341
      %s356 = sphi 0, %s342
      %s360 = sphi 0, %s360
      %s362 = sphi 0, %s360
      %s363 = sphi 0, %s362
      %s377 = sphi 0, %s363
      %s381 = sphi 0, %s381
      %s383 = sphi 0, %s381
      %s384 = sphi 0, %s383
      %s398 = sphi 0, %s384
      %s402 = sphi 0, %s402
      %s404 = sphi 0, %s402
      %s405 = sphi 0, %s404
      %s419 = sphi 0, %s405
      %s425 = sphi 0, %s427
      %s428 = sphi 0, %s425
      %s429 = sphi 0, %s428
      %s445 = sphi 0, %s429
    $region4: #{tpu_custom_call.1} parent=1 // loop_header_branch
      %30 = sbr.rel (%p28) target = $region8
    $region5: #{tpu_custom_call.1} parent=1 // loop_body
      %s32 = ssub.s32 %s27, 1
      %s33 = ssub.s32 %s27, 2
      %s34 = sadd.s32 %s27, 1
      %s35 = ssub.s32 %s27, %s34
      %p36 = scmp.eq.s32.totalorder %s35, 0
      %s38 = sadd.s32 %s37, 1
      %s39 = scalar_select %p36, %s37, %s38
      %p42 = pneg %p36
      %p43 = scmp.eq.s32.totalorder %s27, 1
      %p44 = por %p42, %p43
      %p45 = scmp.ne.s32.totalorder %s37, %s40
      %p46 = scmp.eq.s32.totalorder %s27, 0
      %p47 = por %p45, %p46
      %p48 = scmp.ne.s32.totalorder %s37, %s40
      %p49 = scmp.eq.s32.totalorder %s32, 1
      %p50 = por %p48, %p49
      %p51 = scmp.ne.s32.totalorder %s40, %s41
      %p52 = scmp.eq.s32.totalorder %s32, 0
      %p53 = por %p51, %p52
      %p54 = scmp.ne.s32.totalorder %s40, %s41
      %p55 = scmp.eq.s32.totalorder %s33, 1
      %p56 = por %p54, %p55
      %p58 = scmp.ne.s32.totalorder %s41, %s57
      %p59 = scmp.eq.s32.totalorder %s33, 0
      %p60 = por %p58, %p59
      %s61 = ssub.s32 %s27, %s34
      %p62 = scmp.eq.s32.totalorder %s61, 0
      %s64 = sadd.s32 %s63, 1
      %s65 = scalar_select %p62, %s63, %s64
      %p68 = pneg %p62
      %p69 = scmp.eq.s32.totalorder %s27, 1
      %p70 = por %p68, %p69
      %p71 = scmp.ne.s32.totalorder %s63, %s66
      %p72 = scmp.eq.s32.totalorder %s27, 0
      %p73 = por %p71, %p72
      %p74 = scmp.ne.s32.totalorder %s63, %s66
      %p75 = scmp.eq.s32.totalorder %s32, 1
      %p76 = por %p74, %p75
      %p77 = scmp.ne.s32.totalorder %s66, %s67
      %p78 = scmp.eq.s32.totalorder %s32, 0
      %p79 = por %p77, %p78
      %p80 = scmp.ne.s32.totalorder %s66, %s67
      %p81 = scmp.eq.s32.totalorder %s33, 1
      %p82 = por %p80, %p81
      %p84 = scmp.ne.s32.totalorder %s67, %s83
      %p85 = scmp.eq.s32.totalorder %s33, 0
      %p86 = por %p84, %p85
      %s88 = sadd.s32 %s87, 1
      %p91 = scmp.eq.s32.totalorder %s27, 1
      %p92 = scmp.ne.s32.totalorder %s87, %s89
      %p93 = scmp.eq.s32.totalorder %s27, 0
      %p94 = por %p92, %p93
      %p95 = scmp.ne.s32.totalorder %s87, %s89
      %p96 = scmp.eq.s32.totalorder %s32, 1
      %p97 = por %p95, %p96
      %p98 = scmp.ne.s32.totalorder %s89, %s90
      %p99 = scmp.eq.s32.totalorder %s32, 0
      %p100 = por %p98, %p99
      %p101 = scmp.ne.s32.totalorder %s89, %s90
      %p102 = scmp.eq.s32.totalorder %s33, 1
      %p103 = por %p101, %p102
      %p105 = scmp.ne.s32.totalorder %s90, %s104
      %p106 = scmp.eq.s32.totalorder %s33, 0
      %p107 = por %p105, %p106
      %s109 = sadd.s32 %s108, 1
      %p112 = scmp.eq.s32.totalorder %s27, 1
      %p113 = scmp.ne.s32.totalorder %s108, %s110
      %p114 = scmp.eq.s32.totalorder %s27, 0
      %p115 = por %p113, %p114
      %p116 = scmp.ne.s32.totalorder %s108, %s110
      %p117 = scmp.eq.s32.totalorder %s32, 1
      %p118 = por %p116, %p117
      %p119 = scmp.ne.s32.totalorder %s110, %s111
      %p120 = scmp.eq.s32.totalorder %s32, 0
      %p121 = por %p119, %p120
      %p122 = scmp.ne.s32.totalorder %s110, %s111
      %p123 = scmp.eq.s32.totalorder %s33, 1
      %p124 = por %p122, %p123
      %p126 = scmp.ne.s32.totalorder %s111, %s125
      %p127 = scmp.eq.s32.totalorder %s33, 0
      %p128 = por %p126, %p127
      %s130 = sadd.s32 %s129, 1
      %p133 = scmp.eq.s32.totalorder %s27, 1
      %p134 = scmp.ne.s32.totalorder %s129, %s131
      %p135 = scmp.eq.s32.totalorder %s27, 0
      %p136 = por %p134, %p135
      %p137 = scmp.ne.s32.totalorder %s129, %s131
      %p138 = scmp.eq.s32.totalorder %s32, 1
      %p139 = por %p137, %p138
      %p140 = scmp.ne.s32.totalorder %s131, %s132
      %p141 = scmp.eq.s32.totalorder %s32, 0
      %p142 = por %p140, %p141
      %p143 = scmp.ne.s32.totalorder %s131, %s132
      %p144 = scmp.eq.s32.totalorder %s33, 1
      %p145 = por %p143, %p144
      %p147 = scmp.ne.s32.totalorder %s132, %s146
      %p148 = scmp.eq.s32.totalorder %s33, 0
      %p149 = por %p147, %p148
      %s151 = sadd.s32 %s150, 1
      %p154 = scmp.eq.s32.totalorder %s27, 1
      %p155 = scmp.ne.s32.totalorder %s150, %s152
      %p156 = scmp.eq.s32.totalorder %s27, 0
      %p157 = por %p155, %p156
      %p158 = scmp.ne.s32.totalorder %s150, %s152
      %p159 = scmp.eq.s32.totalorder %s32, 1
      %p160 = por %p158, %p159
      %p161 = scmp.ne.s32.totalorder %s152, %s153
      %p162 = scmp.eq.s32.totalorder %s32, 0
      %p163 = por %p161, %p162
      %p164 = scmp.ne.s32.totalorder %s152, %s153
      %p165 = scmp.eq.s32.totalorder %s33, 1
      %p166 = por %p164, %p165
      %p168 = scmp.ne.s32.totalorder %s153, %s167
      %p169 = scmp.eq.s32.totalorder %s33, 0
      %p170 = por %p168, %p169
      %s172 = sadd.s32 %s171, 1
      %p175 = scmp.eq.s32.totalorder %s27, 1
      %p176 = scmp.ne.s32.totalorder %s171, %s173
      %p177 = scmp.eq.s32.totalorder %s27, 0
      %p178 = por %p176, %p177
      %p179 = scmp.ne.s32.totalorder %s171, %s173
      %p180 = scmp.eq.s32.totalorder %s32, 1
      %p181 = por %p179, %p180
      %p182 = scmp.ne.s32.totalorder %s173, %s174
      %p183 = scmp.eq.s32.totalorder %s32, 0
      %p184 = por %p182, %p183
      %p185 = scmp.ne.s32.totalorder %s173, %s174
      %p186 = scmp.eq.s32.totalorder %s33, 1
      %p187 = por %p185, %p186
      %p189 = scmp.ne.s32.totalorder %s174, %s188
      %p190 = scmp.eq.s32.totalorder %s33, 0
      %p191 = por %p189, %p190
      %s193 = sadd.s32 %s192, 1
      %p196 = scmp.eq.s32.totalorder %s27, 1
      %p197 = scmp.ne.s32.totalorder %s192, %s194
      %p198 = scmp.eq.s32.totalorder %s27, 0
      %p199 = por %p197, %p198
      %p200 = scmp.ne.s32.totalorder %s192, %s194
      %p201 = scmp.eq.s32.totalorder %s32, 1
      %p202 = por %p200, %p201
      %p203 = scmp.ne.s32.totalorder %s194, %s195
      %p204 = scmp.eq.s32.totalorder %s32, 0
      %p205 = por %p203, %p204
      %p206 = scmp.ne.s32.totalorder %s194, %s195
      %p207 = scmp.eq.s32.totalorder %s33, 1
      %p208 = por %p206, %p207
      %p210 = scmp.ne.s32.totalorder %s195, %s209
      %p211 = scmp.eq.s32.totalorder %s33, 0
      %p212 = por %p210, %p211
      %s214 = sadd.s32 %s213, 1
      %p217 = scmp.eq.s32.totalorder %s27, 1
      %p218 = scmp.ne.s32.totalorder %s213, %s215
      %p219 = scmp.eq.s32.totalorder %s27, 0
      %p220 = por %p218, %p219
      %p221 = scmp.ne.s32.totalorder %s213, %s215
      %p222 = scmp.eq.s32.totalorder %s32, 1
      %p223 = por %p221, %p222
      %p224 = scmp.ne.s32.totalorder %s215, %s216
      %p225 = scmp.eq.s32.totalorder %s32, 0
      %p226 = por %p224, %p225
      %p227 = scmp.ne.s32.totalorder %s215, %s216
      %p228 = scmp.eq.s32.totalorder %s33, 1
      %p229 = por %p227, %p228
      %p231 = scmp.ne.s32.totalorder %s216, %s230
      %p232 = scmp.eq.s32.totalorder %s33, 0
      %p233 = por %p231, %p232
      %s235 = sadd.s32 %s234, 1
      %p238 = scmp.eq.s32.totalorder %s27, 1
      %p239 = scmp.ne.s32.totalorder %s234, %s236
      %p240 = scmp.eq.s32.totalorder %s27, 0
      %p241 = por %p239, %p240
      %p242 = scmp.ne.s32.totalorder %s234, %s236
      %p243 = scmp.eq.s32.totalorder %s32, 1
      %p244 = por %p242, %p243
      %p245 = scmp.ne.s32.totalorder %s236, %s237
      %p246 = scmp.eq.s32.totalorder %s32, 0
      %p247 = por %p245, %p246
      %p248 = scmp.ne.s32.totalorder %s236, %s237
      %p249 = scmp.eq.s32.totalorder %s33, 1
      %p250 = por %p248, %p249
      %p252 = scmp.ne.s32.totalorder %s237, %s251
      %p253 = scmp.eq.s32.totalorder %s33, 0
      %p254 = por %p252, %p253
      %s256 = sadd.s32 %s255, 1
      %p259 = scmp.eq.s32.totalorder %s27, 1
      %p260 = scmp.ne.s32.totalorder %s255, %s257
      %p261 = scmp.eq.s32.totalorder %s27, 0
      %p262 = por %p260, %p261
      %p263 = scmp.ne.s32.totalorder %s255, %s257
      %p264 = scmp.eq.s32.totalorder %s32, 1
      %p265 = por %p263, %p264
      %p266 = scmp.ne.s32.totalorder %s257, %s258
      %p267 = scmp.eq.s32.totalorder %s32, 0
      %p268 = por %p266, %p267
      %p269 = scmp.ne.s32.totalorder %s257, %s258
      %p270 = scmp.eq.s32.totalorder %s33, 1
      %p271 = por %p269, %p270
      %p273 = scmp.ne.s32.totalorder %s258, %s272
      %p274 = scmp.eq.s32.totalorder %s33, 0
      %p275 = por %p273, %p274
      %s277 = sadd.s32 %s276, 1
      %p280 = scmp.eq.s32.totalorder %s27, 1
      %p281 = scmp.ne.s32.totalorder %s276, %s278
      %p282 = scmp.eq.s32.totalorder %s27, 0
      %p283 = por %p281, %p282
      %p284 = scmp.ne.s32.totalorder %s276, %s278
      %p285 = scmp.eq.s32.totalorder %s32, 1
      %p286 = por %p284, %p285
      %p287 = scmp.ne.s32.totalorder %s278, %s279
      %p288 = scmp.eq.s32.totalorder %s32, 0
      %p289 = por %p287, %p288
      %p290 = scmp.ne.s32.totalorder %s278, %s279
      %p291 = scmp.eq.s32.totalorder %s33, 1
      %p292 = por %p290, %p291
      %p294 = scmp.ne.s32.totalorder %s279, %s293
      %p295 = scmp.eq.s32.totalorder %s33, 0
      %p296 = por %p294, %p295
      %s298 = sadd.s32 %s297, 1
      %p301 = scmp.eq.s32.totalorder %s27, 1
      %p302 = scmp.ne.s32.totalorder %s297, %s299
      %p303 = scmp.eq.s32.totalorder %s27, 0
      %p304 = por %p302, %p303
      %p305 = scmp.ne.s32.totalorder %s297, %s299
      %p306 = scmp.eq.s32.totalorder %s32, 1
      %p307 = por %p305, %p306
      %p308 = scmp.ne.s32.totalorder %s299, %s300
      %p309 = scmp.eq.s32.totalorder %s32, 0
      %p310 = por %p308, %p309
      %p311 = scmp.ne.s32.totalorder %s299, %s300
      %p312 = scmp.eq.s32.totalorder %s33, 1
      %p313 = por %p311, %p312
      %p315 = scmp.ne.s32.totalorder %s300, %s314
      %p316 = scmp.eq.s32.totalorder %s33, 0
      %p317 = por %p315, %p316
      %s319 = sadd.s32 %s318, 1
      %p322 = scmp.eq.s32.totalorder %s27, 1
      %p323 = scmp.ne.s32.totalorder %s318, %s320
      %p324 = scmp.eq.s32.totalorder %s27, 0
      %p325 = por %p323, %p324
      %p326 = scmp.ne.s32.totalorder %s318, %s320
      %p327 = scmp.eq.s32.totalorder %s32, 1
      %p328 = por %p326, %p327
      %p329 = scmp.ne.s32.totalorder %s320, %s321
      %p330 = scmp.eq.s32.totalorder %s32, 0
      %p331 = por %p329, %p330
      %p332 = scmp.ne.s32.totalorder %s320, %s321
      %p333 = scmp.eq.s32.totalorder %s33, 1
      %p334 = por %p332, %p333
      %p336 = scmp.ne.s32.totalorder %s321, %s335
      %p337 = scmp.eq.s32.totalorder %s33, 0
      %p338 = por %p336, %p337
      %s340 = sadd.s32 %s339, 1
      %p343 = scmp.eq.s32.totalorder %s27, 1
      %p344 = scmp.ne.s32.totalorder %s339, %s341
      %p345 = scmp.eq.s32.totalorder %s27, 0
      %p346 = por %p344, %p345
      %p347 = scmp.ne.s32.totalorder %s339, %s341
      %p348 = scmp.eq.s32.totalorder %s32, 1
      %p349 = por %p347, %p348
      %p350 = scmp.ne.s32.totalorder %s341, %s342
      %p351 = scmp.eq.s32.totalorder %s32, 0
      %p352 = por %p350, %p351
      %p353 = scmp.ne.s32.totalorder %s341, %s342
      %p354 = scmp.eq.s32.totalorder %s33, 1
      %p355 = por %p353, %p354
      %p357 = scmp.ne.s32.totalorder %s342, %s356
      %p358 = scmp.eq.s32.totalorder %s33, 0
      %p359 = por %p357, %p358
      %s361 = sadd.s32 %s360, 1
      %p364 = scmp.eq.s32.totalorder %s27, 1
      %p365 = scmp.ne.s32.totalorder %s360, %s362
      %p366 = scmp.eq.s32.totalorder %s27, 0
      %p367 = por %p365, %p366
      %p368 = scmp.ne.s32.totalorder %s360, %s362
      %p369 = scmp.eq.s32.totalorder %s32, 1
      %p370 = por %p368, %p369
      %p371 = scmp.ne.s32.totalorder %s362, %s363
      %p372 = scmp.eq.s32.totalorder %s32, 0
      %p373 = por %p371, %p372
      %p374 = scmp.ne.s32.totalorder %s362, %s363
      %p375 = scmp.eq.s32.totalorder %s33, 1
      %p376 = por %p374, %p375
      %p378 = scmp.ne.s32.totalorder %s363, %s377
      %p379 = scmp.eq.s32.totalorder %s33, 0
      %p380 = por %p378, %p379
      %s382 = sadd.s32 %s381, 1
      %p385 = scmp.eq.s32.totalorder %s27, 1
      %p386 = scmp.ne.s32.totalorder %s381, %s383
      %p387 = scmp.eq.s32.totalorder %s27, 0
      %p388 = por %p386, %p387
      %p389 = scmp.ne.s32.totalorder %s381, %s383
      %p390 = scmp.eq.s32.totalorder %s32, 1
      %p391 = por %p389, %p390
      %p392 = scmp.ne.s32.totalorder %s383, %s384
      %p393 = scmp.eq.s32.totalorder %s32, 0
      %p394 = por %p392, %p393
      %p395 = scmp.ne.s32.totalorder %s383, %s384
      %p396 = scmp.eq.s32.totalorder %s33, 1
      %p397 = por %p395, %p396
      %p399 = scmp.ne.s32.totalorder %s384, %s398
      %p400 = scmp.eq.s32.totalorder %s33, 0
      %p401 = por %p399, %p400
      %s403 = sadd.s32 %s402, 1
      %p406 = scmp.eq.s32.totalorder %s27, 1
      %p407 = scmp.ne.s32.totalorder %s402, %s404
      %p408 = scmp.eq.s32.totalorder %s27, 0
      %p409 = por %p407, %p408
      %p410 = scmp.ne.s32.totalorder %s402, %s404
      %p411 = scmp.eq.s32.totalorder %s32, 1
      %p412 = por %p410, %p411
      %p413 = scmp.ne.s32.totalorder %s404, %s405
      %p414 = scmp.eq.s32.totalorder %s32, 0
      %p415 = por %p413, %p414
      %p416 = scmp.ne.s32.totalorder %s404, %s405
      %p417 = scmp.eq.s32.totalorder %s33, 1
      %p418 = por %p416, %p417
      %p420 = scmp.ne.s32.totalorder %s405, %s419
      %p421 = scmp.eq.s32.totalorder %s33, 0
      %p422 = por %p420, %p421
      %s423 = ssub.s32 %s27, %s34
      %p424 = scmp.eq.s32.totalorder %s423, 0
      %s426 = sadd.s32 %s425, 1
      %s427 = scalar_select %p424, %s425, %s426
      %p430 = pneg %p424
      %p431 = scmp.eq.s32.totalorder %s27, 1
      %p432 = por %p430, %p431
      %p433 = scmp.ne.s32.totalorder %s425, %s428
      %p434 = scmp.eq.s32.totalorder %s27, 0
      %p435 = por %p433, %p434
      %p436 = scmp.ne.s32.totalorder %s425, %s428
      %p437 = scmp.eq.s32.totalorder %s32, 1
      %p438 = por %p436, %p437
      %p439 = scmp.ne.s32.totalorder %s428, %s429
      %p440 = scmp.eq.s32.totalorder %s32, 0
      %p441 = por %p439, %p440
      %p442 = scmp.ne.s32.totalorder %s428, %s429
      %p443 = scmp.eq.s32.totalorder %s33, 1
      %p444 = por %p442, %p443
      %p446 = scmp.ne.s32.totalorder %s429, %s445
      %p447 = scmp.eq.s32.totalorder %s33, 0
      %p448 = por %p446, %p447
      %p449 = scmp.le.s32.totalorder 1, %s27
      %p450 = scmp.lt.s32.totalorder %s27, 3
      %p451 = pnand %p449, %p450
      %p452 = pneg %p451
      // Predicated region
      $region9: #{tpu_custom_call.1} parent=5 // pred_check
        _
      $region10: #{tpu_custom_call.1} parent=5 // pred_check_branch
        %454 = sbr.rel (%p451) target = $region12
      $region11: #{tpu_custom_call.1} parent=5 // pred_region
        %s455 = ssub.s32 %s27, 1
        // Predicated region
        $region13: #{tpu_custom_call.1} parent=11 // pred_check
          %p456 = pneg %p100
        $region14: #{tpu_custom_call.1} parent=11 // pred_check_branch
          %458 = sbr.rel (%p456) target = $region16
        $region15: #{tpu_custom_call.1} parent=11 // pred_region
          _
        $region16: #{tpu_custom_call.1} parent=11 // pred_fallthru
          _
        // Predicated region
        $region17: #{tpu_custom_call.1} parent=11 // pred_check
          %p459 = pneg %p121
        $region18: #{tpu_custom_call.1} parent=11 // pred_check_branch
          %461 = sbr.rel (%p459) target = $region20
        $region19: #{tpu_custom_call.1} parent=11 // pred_region
          _
        $region20: #{tpu_custom_call.1} parent=11 // pred_fallthru
          _
        // Predicated region
        $region21: #{tpu_custom_call.1} parent=11 // pred_check
          %p462 = pneg %p142
        $region22: #{tpu_custom_call.1} parent=11 // pred_check_branch
          %464 = sbr.rel (%p462) target = $region24
        $region23: #{tpu_custom_call.1} parent=11 // pred_region
          _
        $region24: #{tpu_custom_call.1} parent=11 // pred_fallthru
          _
        // Predicated region
        $region25: #{tpu_custom_call.1} parent=11 // pred_check
          %p465 = pneg %p163
        $region26: #{tpu_custom_call.1} parent=11 // pred_check_branch
          %467 = sbr.rel (%p465) target = $region28
        $region27: #{tpu_custom_call.1} parent=11 // pred_region
          _
        $region28: #{tpu_custom_call.1} parent=11 // pred_fallthru
          _
        // Predicated region
        $region29: #{tpu_custom_call.1} parent=11 // pred_check
          %p468 = pneg %p184
        $region30: #{tpu_custom_call.1} parent=11 // pred_check_branch
          %470 = sbr.rel (%p468) target = $region32
        $region31: #{tpu_custom_call.1} parent=11 // pred_region
          _
        $region32: #{tpu_custom_call.1} parent=11 // pred_fallthru
          _
        // Predicated region
        $region33: #{tpu_custom_call.1} parent=11 // pred_check
          %p471 = pneg %p205
        $region34: #{tpu_custom_call.1} parent=11 // pred_check_branch
          %473 = sbr.rel (%p471) target = $region36
        $region35: #{tpu_custom_call.1} parent=11 // pred_region
          _
        $region36: #{tpu_custom_call.1} parent=11 // pred_fallthru
          _
        // Predicated region
        $region37: #{tpu_custom_call.1} parent=11 // pred_check
          %p474 = pneg %p226
        $region38: #{tpu_custom_call.1} parent=11 // pred_check_branch
          %476 = sbr.rel (%p474) target = $region40
        $region39: #{tpu_custom_call.1} parent=11 // pred_region
          _
        $region40: #{tpu_custom_call.1} parent=11 // pred_fallthru
          _
        // Predicated region
        $region41: #{tpu_custom_call.1} parent=11 // pred_check
          %p477 = pneg %p247
        $region42: #{tpu_custom_call.1} parent=11 // pred_check_branch
          %479 = sbr.rel (%p477) target = $region44
        $region43: #{tpu_custom_call.1} parent=11 // pred_region
          _
        $region44: #{tpu_custom_call.1} parent=11 // pred_fallthru
          _
        // Predicated region
        $region45: #{tpu_custom_call.1} parent=11 // pred_check
          %p480 = pneg %p268
        $region46: #{tpu_custom_call.1} parent=11 // pred_check_branch
          %482 = sbr.rel (%p480) target = $region48
        $region47: #{tpu_custom_call.1} parent=11 // pred_region
          _
        $region48: #{tpu_custom_call.1} parent=11 // pred_fallthru
          _
        // Predicated region
        $region49: #{tpu_custom_call.1} parent=11 // pred_check
          %p483 = pneg %p289
        $region50: #{tpu_custom_call.1} parent=11 // pred_check_branch
          %485 = sbr.rel (%p483) target = $region52
        $region51: #{tpu_custom_call.1} parent=11 // pred_region
          _
        $region52: #{tpu_custom_call.1} parent=11 // pred_fallthru
          _
        // Predicated region
        $region53: #{tpu_custom_call.1} parent=11 // pred_check
          %p486 = pneg %p310
        $region54: #{tpu_custom_call.1} parent=11 // pred_check_branch
          %488 = sbr.rel (%p486) target = $region56
        $region55: #{tpu_custom_call.1} parent=11 // pred_region
          _
        $region56: #{tpu_custom_call.1} parent=11 // pred_fallthru
          _
        // Predicated region
        $region57: #{tpu_custom_call.1} parent=11 // pred_check
          %p489 = pneg %p331
        $region58: #{tpu_custom_call.1} parent=11 // pred_check_branch
          %491 = sbr.rel (%p489) target = $region60
        $region59: #{tpu_custom_call.1} parent=11 // pred_region
          _
        $region60: #{tpu_custom_call.1} parent=11 // pred_fallthru
          _
        // Predicated region
        $region61: #{tpu_custom_call.1} parent=11 // pred_check
          %p492 = pneg %p352
        $region62: #{tpu_custom_call.1} parent=11 // pred_check_branch
          %494 = sbr.rel (%p492) target = $region64
        $region63: #{tpu_custom_call.1} parent=11 // pred_region
          _
        $region64: #{tpu_custom_call.1} parent=11 // pred_fallthru
          _
        // Predicated region
        $region65: #{tpu_custom_call.1} parent=11 // pred_check
          %p495 = pneg %p373
        $region66: #{tpu_custom_call.1} parent=11 // pred_check_branch
          %497 = sbr.rel (%p495) target = $region68
        $region67: #{tpu_custom_call.1} parent=11 // pred_region
          _
        $region68: #{tpu_custom_call.1} parent=11 // pred_fallthru
          _
        // Predicated region
        $region69: #{tpu_custom_call.1} parent=11 // pred_check
          %p498 = pneg %p394
        $region70: #{tpu_custom_call.1} parent=11 // pred_check_branch
          %500 = sbr.rel (%p498) target = $region72
        $region71: #{tpu_custom_call.1} parent=11 // pred_region
          _
        $region72: #{tpu_custom_call.1} parent=11 // pred_fallthru
          _
        // Predicated region
        $region73: #{tpu_custom_call.1} parent=11 // pred_check
          %p501 = pneg %p415
        $region74: #{tpu_custom_call.1} parent=11 // pred_check_branch
          %503 = sbr.rel (%p501) target = $region76
        $region75: #{tpu_custom_call.1} parent=11 // pred_region
          _
        $region76: #{tpu_custom_call.1} parent=11 // pred_fallthru
          _
      $region12: #{tpu_custom_call.1} parent=5 // pred_fallthru
        _
      %p504 = scmp.lt.s32.totalorder %s27, 2
      // Predicated region
      $region77: #{tpu_custom_call.1} parent=5 // pred_check
        %p505 = pneg %p504
      $region78: #{tpu_custom_call.1} parent=5 // pred_check_branch
        %507 = sbr.rel (%p505) target = $region80
      $region79: #{tpu_custom_call.1} parent=5 // pred_region
        // Predicated region
        $region81: #{tpu_custom_call.1} parent=79 // pred_check
          %p508 = pneg %p47
        $region82: #{tpu_custom_call.1} parent=79 // pred_check_branch
          %510 = sbr.rel (%p508) target = $region84
        $region83: #{tpu_custom_call.1} parent=79 // pred_region
          %p511 = scmp.lt.s32.totalorder %s27, 1
          %s512 = scalar_select %p511, %s27, 1
          %s513 = smul.addr %s512, 8
          %s514 = scalar_lea.vmem %s0, %s513
        $region84: #{tpu_custom_call.1} parent=79 // pred_fallthru
          _
        // Predicated region
        $region85: #{tpu_custom_call.1} parent=79 // pred_check
          %p515 = pneg %p73
        $region86: #{tpu_custom_call.1} parent=79 // pred_check_branch
          %517 = sbr.rel (%p515) target = $region88
        $region87: #{tpu_custom_call.1} parent=79 // pred_region
          %p518 = scmp.lt.s32.totalorder %s27, 1
          %s519 = scalar_select %p518, %s27, 1
          %s520 = smul.addr %s519, 8
          %s521 = scalar_lea.vmem %s1, %s520
        $region88: #{tpu_custom_call.1} parent=79 // pred_fallthru
          _
      $region80: #{tpu_custom_call.1} parent=5 // pred_fallthru
        _
      %p522 = scmp.le.s32.totalorder 1, %s27
      %p523 = scmp.lt.s32.totalorder %s27, 3
      %p524 = pnand %p522, %p523
      %p525 = pneg %p524
      // Predicated region
      $region89: #{tpu_custom_call.1} parent=5 // pred_check
        _
      $region90: #{tpu_custom_call.1} parent=5 // pred_check_branch
        %527 = sbr.rel (%p524) target = $region92
      $region91: #{tpu_custom_call.1} parent=5 // pred_region
        %s528 = ssub.s32 %s27, 1
        %p529 = scmp.lt.s32.totalorder %s32, 1
        %s530 = scalar_select %p529, %s32, 1
        %s531 = smul.addr %s530, 8
        %s532 = scalar_lea.vmem %s0, %s531
        %p533 = pneg %p53
        %p534 = pneg %p50
        %p535 = scmp.lt.s32.totalorder %s32, 1
        %s536 = scalar_select %p535, %s32, 1
        %s537 = smul.addr %s536, 8
        %s538 = scalar_lea.vmem %s1, %s537
        %p539 = pneg %p79
        %p540 = pneg %p76
        %p541 = pneg %p100
        %p542 = pneg %p97
        %p543 = pneg %p121
        %p544 = pneg %p118
        %p545 = pneg %p142
        %p546 = pneg %p139
        %p547 = pneg %p163
        %p548 = pneg %p160
        %p549 = pneg %p184
        %p550 = pneg %p181
        %p551 = pneg %p205
        %p552 = pneg %p202
        %p553 = pneg %p226
        %p554 = pneg %p223
        %p555 = pneg %p247
        %p556 = pneg %p244
        %p557 = pneg %p268
        %p558 = pneg %p265
        %p559 = pneg %p289
        %p560 = pneg %p286
        %p561 = pneg %p310
        %p562 = pneg %p307
        %p563 = pneg %p331
        %p564 = pneg %p328
        %p565 = pneg %p352
        %p566 = pneg %p349
        %p567 = pneg %p373
        %p568 = pneg %p370
        %p569 = pneg %p394
        %p570 = pneg %p391
        %p571 = pneg %p415
        %p572 = pneg %p412
        %p573 = pneg %p441
        %p574 = pneg %p438
        %s575 = sand.u32 %s428, 1
        %s576 = scalar_lea.sflag [#allocation3], %s575
        %s577 = sand.u32 %s428, 1
        %s578 = smul.addr %s577, 8
        %s579 = scalar_lea.vmem [#allocation2], %s578
        %p580 = scmp.lt.s32.totalorder %s32, 1
        %s581 = scalar_select %p580, %s32, 1
        %s582 = smul.addr %s581, 8
        %s583 = scalar_lea.vmem %s0, %s582
        %p584 = scmp.lt.s32.totalorder %s32, 1
        %s585 = scalar_select %p584, %s32, 1
        %s586 = smul.addr %s585, 8
        %s587 = scalar_lea.vmem %s1, %s586
        %v589 = vld [vmem:[%s583] sm:$0xff]
        %v590 = vld [vmem:[%s587] sm:$0xff]
        %v591 = vadd.f32 %v589, %v590
        loop: start=0, step=1, limit=6
        $region93: #{tpu_custom_call.1} parent=91 // loop_pre_header
          _
        $region94: #{tpu_custom_call.1} parent=91 // loop_header
          %s593 = sphi 0, %s597
          %p594 = scmp.ge.s32.totalorder %s593, 6
          %v598 = vphi %v591, %v2506
        $region95: #{tpu_custom_call.1} parent=91 // loop_header_branch
          %596 = sbr.rel (%p594) target = $region99
        $region96: #{tpu_custom_call.1} parent=91 // loop_body
          %v599 = vpack.c.bf16 %v598, %v598
          %s600 = smul.u32 %s593, 8
          %s601 = smul.addr %s600, 4
          %s602 = scalar_lea.vmem %s2, %s601
          %v603 = vld [vmem:[%s602] sm:$0xf]
          %v604 = vld [vmem:[%s602 + $0x4] sm:$0xf]
          %v605 = vld [vmem:[%s602 + $0x8] sm:$0xf]
          %v606 = vld [vmem:[%s602 + $0xc] sm:$0xf]
          %v607 = vld [vmem:[%s602 + $0x10] sm:$0xf]
          %v608 = vld [vmem:[%s602 + $0x14] sm:$0xf]
          %v609 = vld [vmem:[%s602 + $0x18] sm:$0xf]
          %v610 = vld [vmem:[%s602 + $0x1c] sm:$0xf]
          %s611 = scalar_lea.vmem %s3, %s593
          %v612 = vld [vmem:[%s611] sm:$0x1]
          %v614 = vlaneseq
          %v615 = vshrl.u32 %v614, 7
          %v616 = vsub.s32 0, %v615
          %v617 = vrot.slane %v612, %v616
          %v627 = vunpack.c.l.b16 %v603
          %v628 = vunpack.c.l.b16 %v604
          %v629 = vunpack.c.l.b16 %v605
          %v630 = vunpack.c.l.b16 %v606
          %v631 = vunpack.c.l.b16 %v607
          %v632 = vunpack.c.l.b16 %v608
          %v633 = vunpack.c.l.b16 %v609
          %v634 = vunpack.c.l.b16 %v610
          %v635 = vpack.c.b16 %v628, %v627
          %v636 = vpack.c.b16 %v630, %v629
          %v637 = vpack.c.b16 %v632, %v631
          %v638 = vpack.c.b16 %v634, %v633
          %vm643 = vcmask 523264
          %v645 = vsel %vm643, %v599, 0
          %647 = vmatprep.subr.bf16.mxu0 0
          %648 = vmatpush1.bf16.msra.mxu0 %v635
          %649 = vmatprep.subr.bf16.mxu0 0
          %650 = vmatpush1.bf16.msra.mxu0 %v636
          %651 = vmatprep.subr.bf16.mxu0 0
          %652 = vmatpush1.bf16.msra.mxu0 %v637
          %653 = vmatprep.subr.bf16.mxu0 0
          %654 = vmatpush1.bf16.msra.mxu0 %v638
          %655 = vmatprep.subr.bf16.mxu0 0
          %656 = vmatpush1.bf16.msra.mxu0 0
          %657 = vmatprep.subr.bf16.mxu0 0
          %658 = vmatpush1.bf16.msra.mxu0 0
          %659 = vmatprep.subr.bf16.mxu0 0
          %660 = vmatpush1.bf16.msra.mxu0 0
          %661 = vmatprep.subr.bf16.mxu0 0
          %662 = vmatpush1.bf16.msra.mxu0 0
          %663 = vmatprep.subr.bf16.mxu0 0
          %664 = vmatpush1.bf16.msra.mxu0 0
          %665 = vmatprep.subr.bf16.mxu0 0
          %666 = vmatpush1.bf16.msra.mxu0 0
          %667 = vmatprep.subr.bf16.mxu0 0
          %668 = vmatpush1.bf16.msra.mxu0 0
          %669 = vmatprep.subr.bf16.mxu0 0
          %670 = vmatpush1.bf16.msra.mxu0 0
          %671 = vmatprep.subr.bf16.mxu0 0
          %672 = vmatpush1.bf16.msra.mxu0 0
          %673 = vmatprep.subr.bf16.mxu0 0
          %674 = vmatpush1.bf16.msra.mxu0 0
          %675 = vmatprep.subr.bf16.mxu0 0
          %676 = vmatpush1.bf16.msra.mxu0 0
          %677 = vmatprep.subr.bf16.mxu0 0
          %678 = vmatpush1.bf16.msra.mxu0 0
          %679 = vmatprep.mubr.bf16.mxu0 0
          %680 = vmatmul.mubr.bf16.gmra.mrb[0].mxu0 %v645
          %v681 = vpop.f32.mrb[0].mxu0
          %v682 = vadd.f32 %v617, %v681
          %v683 = vpop.f32.mrb[0].mxu0
          %v684 = vpop.f32.mrb[0].mxu0
          %v685 = vpop.f32.mrb[0].mxu0
          %686 = vdwg.mxu0
          %s687 = smul.addr %s600, 4
          %s688 = scalar_lea.vmem %s4, %s687
          %v689 = vld [vmem:[%s688] sm:$0xf]
          %v690 = vld [vmem:[%s688 + $0x4] sm:$0xf]
          %v691 = vld [vmem:[%s688 + $0x8] sm:$0xf]
          %v692 = vld [vmem:[%s688 + $0xc] sm:$0xf]
          %v693 = vld [vmem:[%s688 + $0x10] sm:$0xf]
          %v694 = vld [vmem:[%s688 + $0x14] sm:$0xf]
          %v695 = vld [vmem:[%s688 + $0x18] sm:$0xf]
          %v696 = vld [vmem:[%s688 + $0x1c] sm:$0xf]
          %s697 = scalar_lea.vmem %s5, %s593
          %v698 = vld [vmem:[%s697] sm:$0x1]
          %v700 = vlaneseq
          %v701 = vshrl.u32 %v700, 7
          %v702 = vsub.s32 0, %v701
          %v703 = vrot.slane %v698, %v702
          %v713 = vunpack.c.l.b16 %v689
          %v714 = vunpack.c.l.b16 %v690
          %v715 = vunpack.c.l.b16 %v691
          %v716 = vunpack.c.l.b16 %v692
          %v717 = vunpack.c.l.b16 %v693
          %v718 = vunpack.c.l.b16 %v694
          %v719 = vunpack.c.l.b16 %v695
          %v720 = vunpack.c.l.b16 %v696
          %v721 = vpack.c.b16 %v714, %v713
          %v722 = vpack.c.b16 %v716, %v715
          %v723 = vpack.c.b16 %v718, %v717
          %v724 = vpack.c.b16 %v720, %v719
          %729 = vmatprep.subr.bf16.mxu0 0
          %730 = vmatpush1.bf16.msra.mxu0 %v721
          %731 = vmatprep.subr.bf16.mxu0 0
          %732 = vmatpush1.bf16.msra.mxu0 %v722
          %733 = vmatprep.subr.bf16.mxu0 0
          %734 = vmatpush1.bf16.msra.mxu0 %v723
          %735 = vmatprep.subr.bf16.mxu0 0
          %736 = vmatpush1.bf16.msra.mxu0 %v724
          %737 = vmatprep.subr.bf16.mxu0 0
          %738 = vmatpush1.bf16.msra.mxu0 0
          %739 = vmatprep.subr.bf16.mxu0 0
          %740 = vmatpush1.bf16.msra.mxu0 0
          %741 = vmatprep.subr.bf16.mxu0 0
          %742 = vmatpush1.bf16.msra.mxu0 0
          %743 = vmatprep.subr.bf16.mxu0 0
          %744 = vmatpush1.bf16.msra.mxu0 0
          %745 = vmatprep.subr.bf16.mxu0 0
          %746 = vmatpush1.bf16.msra.mxu0 0
          %747 = vmatprep.subr.bf16.mxu0 0
          %748 = vmatpush1.bf16.msra.mxu0 0
          %749 = vmatprep.subr.bf16.mxu0 0
          %750 = vmatpush1.bf16.msra.mxu0 0
          %751 = vmatprep.subr.bf16.mxu0 0
          %752 = vmatpush1.bf16.msra.mxu0 0
          %753 = vmatprep.subr.bf16.mxu0 0
          %754 = vmatpush1.bf16.msra.mxu0 0
          %755 = vmatprep.subr.bf16.mxu0 0
          %756 = vmatpush1.bf16.msra.mxu0 0
          %757 = vmatprep.subr.bf16.mxu0 0
          %758 = vmatpush1.bf16.msra.mxu0 0
          %759 = vmatprep.subr.bf16.mxu0 0
          %760 = vmatpush1.bf16.msra.mxu0 0
          %761 = vmatprep.mubr.bf16.mxu0 0
          %762 = vmatmul.mubr.bf16.gmra.mrb[0].mxu0 %v645
          %v763 = vpop.f32.mrb[0].mxu0
          %v764 = vadd.f32 %v703, %v763
          %v765 = vpop.f32.mrb[0].mxu0
          %v766 = vpop.f32.mrb[0].mxu0
          %v767 = vpop.f32.mrb[0].mxu0
          %768 = vdwg.mxu0
          %s769 = smul.addr %s600, 4
          %s770 = scalar_lea.vmem %s6, %s769
          %v771 = vld [vmem:[%s770] sm:$0xf]
          %v772 = vld [vmem:[%s770 + $0x4] sm:$0xf]
          %v773 = vld [vmem:[%s770 + $0x8] sm:$0xf]
          %v774 = vld [vmem:[%s770 + $0xc] sm:$0xf]
          %v775 = vld [vmem:[%s770 + $0x10] sm:$0xf]
          %v776 = vld [vmem:[%s770 + $0x14] sm:$0xf]
          %v777 = vld [vmem:[%s770 + $0x18] sm:$0xf]
          %v778 = vld [vmem:[%s770 + $0x1c] sm:$0xf]
          %s779 = scalar_lea.vmem %s7, %s593
          %v780 = vld [vmem:[%s779] sm:$0x1]
          %v782 = vlaneseq
          %v783 = vshrl.u32 %v782, 7
          %v784 = vsub.s32 0, %v783
          %v785 = vrot.slane %v780, %v784
          %v795 = vunpack.c.l.b16 %v771
          %v796 = vunpack.c.l.b16 %v772
          %v797 = vunpack.c.l.b16 %v773
          %v798 = vunpack.c.l.b16 %v774
          %v799 = vunpack.c.l.b16 %v775
          %v800 = vunpack.c.l.b16 %v776
          %v801 = vunpack.c.l.b16 %v777
          %v802 = vunpack.c.l.b16 %v778
          %v803 = vpack.c.b16 %v796, %v795
          %v804 = vpack.c.b16 %v798, %v797
          %v805 = vpack.c.b16 %v800, %v799
          %v806 = vpack.c.b16 %v802, %v801
          %811 = vmatprep.subr.bf16.mxu0 0
          %812 = vmatpush1.bf16.msra.mxu0 %v803
          %813 = vmatprep.subr.bf16.mxu0 0
          %814 = vmatpush1.bf16.msra.mxu0 %v804
          %815 = vmatprep.subr.bf16.mxu0 0
          %816 = vmatpush1.bf16.msra.mxu0 %v805
          %817 = vmatprep.subr.bf16.mxu0 0
          %818 = vmatpush1.bf16.msra.mxu0 %v806
          %819 = vmatprep.subr.bf16.mxu0 0
          %820 = vmatpush1.bf16.msra.mxu0 0
          %821 = vmatprep.subr.bf16.mxu0 0
          %822 = vmatpush1.bf16.msra.mxu0 0
          %823 = vmatprep.subr.bf16.mxu0 0
          %824 = vmatpush1.bf16.msra.mxu0 0
          %825 = vmatprep.subr.bf16.mxu0 0
          %826 = vmatpush1.bf16.msra.mxu0 0
          %827 = vmatprep.subr.bf16.mxu0 0
          %828 = vmatpush1.bf16.msra.mxu0 0
          %829 = vmatprep.subr.bf16.mxu0 0
          %830 = vmatpush1.bf16.msra.mxu0 0
          %831 = vmatprep.subr.bf16.mxu0 0
          %832 = vmatpush1.bf16.msra.mxu0 0
          %833 = vmatprep.subr.bf16.mxu0 0
          %834 = vmatpush1.bf16.msra.mxu0 0
          %835 = vmatprep.subr.bf16.mxu0 0
          %836 = vmatpush1.bf16.msra.mxu0 0
          %837 = vmatprep.subr.bf16.mxu0 0
          %838 = vmatpush1.bf16.msra.mxu0 0
          %839 = vmatprep.subr.bf16.mxu0 0
          %840 = vmatpush1.bf16.msra.mxu0 0
          %841 = vmatprep.subr.bf16.mxu0 0
          %842 = vmatpush1.bf16.msra.mxu0 0
          %843 = vmatprep.mubr.bf16.mxu0 0
          %844 = vmatmul.mubr.bf16.gmra.mrb[0].mxu0 %v645
          %v845 = vpop.f32.mrb[0].mxu0
          %v846 = vadd.f32 %v785, %v845
          %v847 = vpop.f32.mrb[0].mxu0
          %v848 = vpop.f32.mrb[0].mxu0
          %v849 = vpop.f32.mrb[0].mxu0
          %850 = vdwg.mxu0
          %v851 = vmul.f32 %v682, 0.35355338
          %v852 = vpack.c.bf16 %v851, %v851
          %v853 = vpack.c.bf16 %v764, %v764
          %v854 = vpack.c.bf16 %v846, %v846
          %vm855 = vcmask 64512
          %v857 = vsel %vm855, %v852, 0
          %v860 = vsel %vm855, %v853, 0
          %862 = vmatprep.subr.bf16.mxu0 0
          %863 = vmatpush1.bf16.xpose.msra.mxu0 %v860
          %864 = vmatprep.subr.bf16.mxu0 0
          %865 = vmatpush1.bf16.xpose.msra.mxu0 0
          %866 = vmatprep.subr.bf16.mxu0 0
          %867 = vmatpush1.bf16.xpose.msra.mxu0 0
          %868 = vmatprep.subr.bf16.mxu0 0
          %869 = vmatpush1.bf16.xpose.msra.mxu0 0
          %870 = vmatprep.subr.bf16.mxu0 0
          %871 = vmatpush1.bf16.xpose.msra.mxu0 0
          %872 = vmatprep.subr.bf16.mxu0 0
          %873 = vmatpush1.bf16.xpose.msra.mxu0 0
          %874 = vmatprep.subr.bf16.mxu0 0
          %875 = vmatpush1.bf16.xpose.msra.mxu0 0
          %876 = vmatprep.subr.bf16.mxu0 0
          %877 = vmatpush1.bf16.xpose.msra.mxu0 0
          %878 = vmatprep.subr.bf16.mxu0 0
          %879 = vmatpush1.bf16.xpose.msra.mxu0 0
          %880 = vmatprep.subr.bf16.mxu0 0
          %881 = vmatpush1.bf16.xpose.msra.mxu0 0
          %882 = vmatprep.subr.bf16.mxu0 0
          %883 = vmatpush1.bf16.xpose.msra.mxu0 0
          %884 = vmatprep.subr.bf16.mxu0 0
          %885 = vmatpush1.bf16.xpose.msra.mxu0 0
          %886 = vmatprep.subr.bf16.mxu0 0
          %887 = vmatpush1.bf16.xpose.msra.mxu0 0
          %888 = vmatprep.subr.bf16.mxu0 0
          %889 = vmatpush1.bf16.xpose.msra.mxu0 0
          %890 = vmatprep.subr.bf16.mxu0 0
          %891 = vmatpush1.bf16.xpose.msra.mxu0 0
          %892 = vmatprep.subr.bf16.mxu0 0
          %893 = vmatpush1.bf16.xpose.msra.mxu0 0
          %894 = vmatprep.mubr.bf16.mxu0 0
          %895 = vmatmul.mubr.bf16.gmra.mrb[0].mxu0 %v857
          %v896 = vpop.f32.mrb[0].mxu0
          %v897 = vadd.f32 0.0, %v896
          %v898 = vpop.f32.mrb[0].mxu0
          %v899 = vpop.f32.mrb[0].mxu0
          %v900 = vpop.f32.mrb[0].mxu0
          %901 = vdwg.mxu0
          %v902 = vsel %vm855, %v897, -inf
          %903 = vmax.xlane.f32.xlu0 %v902
          %v904 = vpop.xlane.xlu0 %903
          %v905 = vsub.f32 %v897, %v904
          %v906 = vmul.f32 %v905, 1.442695
          %v907 = vpow.pop %v906
          %v908 = vsel %vm855, %v907, 0.0
          %909 = vadd.xlane.f32.xlu0 %v908
          %v910 = vpop.xlane.xlu0 %909
          %v911 = vrcp.pop %v910
          %v912 = vmul.f32 %v907, %v911
          %v913 = vpack.c.bf16 %v912, %v912
          %v915 = vsel %vm855, %v913, 0
          %vm917 = vcmask 1043456
          %v919 = vsel %vm917, %v854, 0
          %921 = vmatprep.subr.bf16.mxu0 0
          %922 = vmatpush1.bf16.msra.mxu0 %v919
          %923 = vmatprep.subr.bf16.mxu0 0
          %924 = vmatpush1.bf16.msra.mxu0 0
          %925 = vmatprep.subr.bf16.mxu0 0
          %926 = vmatpush1.bf16.msra.mxu0 0
          %927 = vmatprep.subr.bf16.mxu0 0
          %928 = vmatpush1.bf16.msra.mxu0 0
          %929 = vmatprep.subr.bf16.mxu0 0
          %930 = vmatpush1.bf16.msra.mxu0 0
          %931 = vmatprep.subr.bf16.mxu0 0
          %932 = vmatpush1.bf16.msra.mxu0 0
          %933 = vmatprep.subr.bf16.mxu0 0
          %934 = vmatpush1.bf16.msra.mxu0 0
          %935 = vmatprep.subr.bf16.mxu0 0
          %936 = vmatpush1.bf16.msra.mxu0 0
          %937 = vmatprep.subr.bf16.mxu0 0
          %938 = vmatpush1.bf16.msra.mxu0 0
          %939 = vmatprep.subr.bf16.mxu0 0
          %940 = vmatpush1.bf16.msra.mxu0 0
          %941 = vmatprep.subr.bf16.mxu0 0
          %942 = vmatpush1.bf16.msra.mxu0 0
          %943 = vmatprep.subr.bf16.mxu0 0
          %944 = vmatpush1.bf16.msra.mxu0 0
          %945 = vmatprep.subr.bf16.mxu0 0
          %946 = vmatpush1.bf16.msra.mxu0 0
          %947 = vmatprep.subr.bf16.mxu0 0
          %948 = vmatpush1.bf16.msra.mxu0 0
          %949 = vmatprep.subr.bf16.mxu0 0
          %950 = vmatpush1.bf16.msra.mxu0 0
          %951 = vmatprep.subr.bf16.mxu0 0
          %952 = vmatpush1.bf16.msra.mxu0 0
          %953 = vmatprep.mubr.bf16.mxu0 0
          %954 = vmatmul.mubr.bf16.gmra.mrb[0].mxu0 %v915
          %v955 = vpop.f32.mrb[0].mxu0
          %v956 = vadd.f32 0.0, %v955
          %v957 = vpop.f32.mrb[0].mxu0
          %v958 = vpop.f32.mrb[0].mxu0
          %v959 = vpop.f32.mrb[0].mxu0
          %960 = vdwg.mxu0
          %962 = vrot.lane.b32.xlu0 %v852, 120
          %v963 = vpop.permute.xlu0 %962
          %965 = vrot.lane.b32.xlu0 %v853, 120
          %v966 = vpop.permute.xlu0 %965
          %v968 = vsel %vm855, %v963, 0
          %v971 = vsel %vm855, %v966, 0
          %973 = vmatprep.subr.bf16.mxu0 0
          %974 = vmatpush1.bf16.xpose.msra.mxu0 %v971
          %975 = vmatprep.subr.bf16.mxu0 0
          %976 = vmatpush1.bf16.xpose.msra.mxu0 0
          %977 = vmatprep.subr.bf16.mxu0 0
          %978 = vmatpush1.bf16.xpose.msra.mxu0 0
          %979 = vmatprep.subr.bf16.mxu0 0
          %980 = vmatpush1.bf16.xpose.msra.mxu0 0
          %981 = vmatprep.subr.bf16.mxu0 0
          %982 = vmatpush1.bf16.xpose.msra.mxu0 0
          %983 = vmatprep.subr.bf16.mxu0 0
          %984 = vmatpush1.bf16.xpose.msra.mxu0 0
          %985 = vmatprep.subr.bf16.mxu0 0
          %986 = vmatpush1.bf16.xpose.msra.mxu0 0
          %987 = vmatprep.subr.bf16.mxu0 0
          %988 = vmatpush1.bf16.xpose.msra.mxu0 0
          %989 = vmatprep.subr.bf16.mxu0 0
          %990 = vmatpush1.bf16.xpose.msra.mxu0 0
          %991 = vmatprep.subr.bf16.mxu0 0
          %992 = vmatpush1.bf16.xpose.msra.mxu0 0
          %993 = vmatprep.subr.bf16.mxu0 0
          %994 = vmatpush1.bf16.xpose.msra.mxu0 0
          %995 = vmatprep.subr.bf16.mxu0 0
          %996 = vmatpush1.bf16.xpose.msra.mxu0 0
          %997 = vmatprep.subr.bf16.mxu0 0
          %998 = vmatpush1.bf16.xpose.msra.mxu0 0
          %999 = vmatprep.subr.bf16.mxu0 0
          %1000 = vmatpush1.bf16.xpose.msra.mxu0 0
          %1001 = vmatprep.subr.bf16.mxu0 0
          %1002 = vmatpush1.bf16.xpose.msra.mxu0 0
          %1003 = vmatprep.subr.bf16.mxu0 0
          %1004 = vmatpush1.bf16.xpose.msra.mxu0 0
          %1005 = vmatprep.mubr.bf16.mxu0 0
          %1006 = vmatmul.mubr.bf16.gmra.mrb[0].mxu0 %v968
          %v1007 = vpop.f32.mrb[0].mxu0
          %v1008 = vadd.f32 0.0, %v1007
          %v1009 = vpop.f32.mrb[0].mxu0
          %v1010 = vpop.f32.mrb[0].mxu0
          %v1011 = vpop.f32.mrb[0].mxu0
          %1012 = vdwg.mxu0
          %v1013 = vsel %vm855, %v1008, -inf
          %1014 = vmax.xlane.f32.xlu0 %v1013
          %v1015 = vpop.xlane.xlu0 %1014
          %v1016 = vsub.f32 %v1008, %v1015
          %v1017 = vmul.f32 %v1016, 1.442695
          %v1018 = vpow.pop %v1017
          %v1019 = vsel %vm855, %v1018, 0.0
          %1020 = vadd.xlane.f32.xlu0 %v1019
          %v1021 = vpop.xlane.xlu0 %1020
          %v1022 = vrcp.pop %v1021
          %v1023 = vmul.f32 %v1018, %v1022
          %v1024 = vpack.c.bf16 %v1023, %v1023
          %1026 = vrot.lane.b32.xlu0 %v854, 120
          %v1027 = vpop.permute.xlu0 %1026
          %v1029 = vsel %vm855, %v1024, 0
          %v1032 = vsel %vm917, %v1027, 0
          %1034 = vmatprep.subr.bf16.mxu0 0
          %1035 = vmatpush1.bf16.msra.mxu0 %v1032
          %1036 = vmatprep.subr.bf16.mxu0 0
          %1037 = vmatpush1.bf16.msra.mxu0 0
          %1038 = vmatprep.subr.bf16.mxu0 0
          %1039 = vmatpush1.bf16.msra.mxu0 0
          %1040 = vmatprep.subr.bf16.mxu0 0
          %1041 = vmatpush1.bf16.msra.mxu0 0
          %1042 = vmatprep.subr.bf16.mxu0 0
          %1043 = vmatpush1.bf16.msra.mxu0 0
          %1044 = vmatprep.subr.bf16.mxu0 0
          %1045 = vmatpush1.bf16.msra.mxu0 0
          %1046 = vmatprep.subr.bf16.mxu0 0
          %1047 = vmatpush1.bf16.msra.mxu0 0
          %1048 = vmatprep.subr.bf16.mxu0 0
          %1049 = vmatpush1.bf16.msra.mxu0 0
          %1050 = vmatprep.subr.bf16.mxu0 0
          %1051 = vmatpush1.bf16.msra.mxu0 0
          %1052 = vmatprep.subr.bf16.mxu0 0
          %1053 = vmatpush1.bf16.msra.mxu0 0
          %1054 = vmatprep.subr.bf16.mxu0 0
          %1055 = vmatpush1.bf16.msra.mxu0 0
          %1056 = vmatprep.subr.bf16.mxu0 0
          %1057 = vmatpush1.bf16.msra.mxu0 0
          %1058 = vmatprep.subr.bf16.mxu0 0
          %1059 = vmatpush1.bf16.msra.mxu0 0
          %1060 = vmatprep.subr.bf16.mxu0 0
          %1061 = vmatpush1.bf16.msra.mxu0 0
          %1062 = vmatprep.subr.bf16.mxu0 0
          %1063 = vmatpush1.bf16.msra.mxu0 0
          %1064 = vmatprep.subr.bf16.mxu0 0
          %1065 = vmatpush1.bf16.msra.mxu0 0
          %1066 = vmatprep.mubr.bf16.mxu0 0
          %1067 = vmatmul.mubr.bf16.gmra.mrb[0].mxu0 %v1029
          %v1068 = vpop.f32.mrb[0].mxu0
          %v1069 = vadd.f32 0.0, %v1068
          %v1070 = vpop.f32.mrb[0].mxu0
          %v1071 = vpop.f32.mrb[0].mxu0
          %v1072 = vpop.f32.mrb[0].mxu0
          %1073 = vdwg.mxu0
          %1074 = vrot.lane.b32.xlu0 %v852, 112
          %v1075 = vpop.permute.xlu0 %1074
          %1076 = vrot.lane.b32.xlu0 %v853, 112
          %v1077 = vpop.permute.xlu0 %1076
          %v1079 = vsel %vm855, %v1075, 0
          %v1082 = vsel %vm855, %v1077, 0
          %1084 = vmatprep.subr.bf16.mxu0 0
          %1085 = vmatpush1.bf16.xpose.msra.mxu0 %v1082
          %1086 = vmatprep.subr.bf16.mxu0 0
          %1087 = vmatpush1.bf16.xpose.msra.mxu0 0
          %1088 = vmatprep.subr.bf16.mxu0 0
          %1089 = vmatpush1.bf16.xpose.msra.mxu0 0
          %1090 = vmatprep.subr.bf16.mxu0 0
          %1091 = vmatpush1.bf16.xpose.msra.mxu0 0
          %1092 = vmatprep.subr.bf16.mxu0 0
          %1093 = vmatpush1.bf16.xpose.msra.mxu0 0
          %1094 = vmatprep.subr.bf16.mxu0 0
          %1095 = vmatpush1.bf16.xpose.msra.mxu0 0
          %1096 = vmatprep.subr.bf16.mxu0 0
          %1097 = vmatpush1.bf16.xpose.msra.mxu0 0
          %1098 = vmatprep.subr.bf16.mxu0 0
          %1099 = vmatpush1.bf16.xpose.msra.mxu0 0
          %1100 = vmatprep.subr.bf16.mxu0 0
          %1101 = vmatpush1.bf16.xpose.msra.mxu0 0
          %1102 = vmatprep.subr.bf16.mxu0 0
          %1103 = vmatpush1.bf16.xpose.msra.mxu0 0
          %1104 = vmatprep.subr.bf16.mxu0 0
          %1105 = vmatpush1.bf16.xpose.msra.mxu0 0
          %1106 = vmatprep.subr.bf16.mxu0 0
          %1107 = vmatpush1.bf16.xpose.msra.mxu0 0
          %1108 = vmatprep.subr.bf16.mxu0 0
          %1109 = vmatpush1.bf16.xpose.msra.mxu0 0
          %1110 = vmatprep.subr.bf16.mxu0 0
          %1111 = vmatpush1.bf16.xpose.msra.mxu0 0
          %1112 = vmatprep.subr.bf16.mxu0 0
          %1113 = vmatpush1.bf16.xpose.msra.mxu0 0
          %1114 = vmatprep.subr.bf16.mxu0 0
          %1115 = vmatpush1.bf16.xpose.msra.mxu0 0
          %1116 = vmatprep.mubr.bf16.mxu0 0
          %1117 = vmatmul.mubr.bf16.gmra.mrb[0].mxu0 %v1079
          %v1118 = vpop.f32.mrb[0].mxu0
          %v1119 = vadd.f32 0.0, %v1118
          %v1120 = vpop.f32.mrb[0].mxu0
          %v1121 = vpop.f32.mrb[0].mxu0
          %v1122 = vpop.f32.mrb[0].mxu0
          %1123 = vdwg.mxu0
          %v1124 = vsel %vm855, %v1119, -inf
          %1125 = vmax.xlane.f32.xlu0 %v1124
          %v1126 = vpop.xlane.xlu0 %1125
          %v1127 = vsub.f32 %v1119, %v1126
          %v1128 = vmul.f32 %v1127, 1.442695
          %v1129 = vpow.pop %v1128
          %v1130 = vsel %vm855, %v1129, 0.0
          %1131 = vadd.xlane.f32.xlu0 %v1130
          %v1132 = vpop.xlane.xlu0 %1131
          %v1133 = vrcp.pop %v1132
          %v1134 = vmul.f32 %v1129, %v1133
          %v1135 = vpack.c.bf16 %v1134, %v1134
          %1136 = vrot.lane.b32.xlu0 %v854, 112
          %v1137 = vpop.permute.xlu0 %1136
          %v1139 = vsel %vm855, %v1135, 0
          %v1142 = vsel %vm917, %v1137, 0
          %1144 = vmatprep.subr.bf16.mxu0 0
          %1145 = vmatpush1.bf16.msra.mxu0 %v1142
          %1146 = vmatprep.subr.bf16.mxu0 0
          %1147 = vmatpush1.bf16.msra.mxu0 0
          %1148 = vmatprep.subr.bf16.mxu0 0
          %1149 = vmatpush1.bf16.msra.mxu0 0
          %1150 = vmatprep.subr.bf16.mxu0 0
          %1151 = vmatpush1.bf16.msra.mxu0 0
          %1152 = vmatprep.subr.bf16.mxu0 0
          %1153 = vmatpush1.bf16.msra.mxu0 0
          %1154 = vmatprep.subr.bf16.mxu0 0
          %1155 = vmatpush1.bf16.msra.mxu0 0
          %1156 = vmatprep.subr.bf16.mxu0 0
          %1157 = vmatpush1.bf16.msra.mxu0 0
          %1158 = vmatprep.subr.bf16.mxu0 0
          %1159 = vmatpush1.bf16.msra.mxu0 0
          %1160 = vmatprep.subr.bf16.mxu0 0
          %1161 = vmatpush1.bf16.msra.mxu0 0
          %1162 = vmatprep.subr.bf16.mxu0 0
          %1163 = vmatpush1.bf16.msra.mxu0 0
          %1164 = vmatprep.subr.bf16.mxu0 0
          %1165 = vmatpush1.bf16.msra.mxu0 0
          %1166 = vmatprep.subr.bf16.mxu0 0
          %1167 = vmatpush1.bf16.msra.mxu0 0
          %1168 = vmatprep.subr.bf16.mxu0 0
          %1169 = vmatpush1.bf16.msra.mxu0 0
          %1170 = vmatprep.subr.bf16.mxu0 0
          %1171 = vmatpush1.bf16.msra.mxu0 0
          %1172 = vmatprep.subr.bf16.mxu0 0
          %1173 = vmatpush1.bf16.msra.mxu0 0
          %1174 = vmatprep.subr.bf16.mxu0 0
          %1175 = vmatpush1.bf16.msra.mxu0 0
          %1176 = vmatprep.mubr.bf16.mxu0 0
          %1177 = vmatmul.mubr.bf16.gmra.mrb[0].mxu0 %v1139
          %v1178 = vpop.f32.mrb[0].mxu0
          %v1179 = vadd.f32 0.0, %v1178
          %v1180 = vpop.f32.mrb[0].mxu0
          %v1181 = vpop.f32.mrb[0].mxu0
          %v1182 = vpop.f32.mrb[0].mxu0
          %1183 = vdwg.mxu0
          %1184 = vrot.lane.b32.xlu0 %v852, 104
          %v1185 = vpop.permute.xlu0 %1184
          %1186 = vrot.lane.b32.xlu0 %v853, 104
          %v1187 = vpop.permute.xlu0 %1186
          %v1189 = vsel %vm855, %v1185, 0
          %v1192 = vsel %vm855, %v1187, 0
          %1194 = vmatprep.subr.bf16.mxu0 0
          %1195 = vmatpush1.bf16.xpose.msra.mxu0 %v1192
          %1196 = vmatprep.subr.bf16.mxu0 0
          %1197 = vmatpush1.bf16.xpose.msra.mxu0 0
          %1198 = vmatprep.subr.bf16.mxu0 0
          %1199 = vmatpush1.bf16.xpose.msra.mxu0 0
          %1200 = vmatprep.subr.bf16.mxu0 0
          %1201 = vmatpush1.bf16.xpose.msra.mxu0 0
          %1202 = vmatprep.subr.bf16.mxu0 0
          %1203 = vmatpush1.bf16.xpose.msra.mxu0 0
          %1204 = vmatprep.subr.bf16.mxu0 0
          %1205 = vmatpush1.bf16.xpose.msra.mxu0 0
          %1206 = vmatprep.subr.bf16.mxu0 0
          %1207 = vmatpush1.bf16.xpose.msra.mxu0 0
          %1208 = vmatprep.subr.bf16.mxu0 0
          %1209 = vmatpush1.bf16.xpose.msra.mxu0 0
          %1210 = vmatprep.subr.bf16.mxu0 0
          %1211 = vmatpush1.bf16.xpose.msra.mxu0 0
          %1212 = vmatprep.subr.bf16.mxu0 0
          %1213 = vmatpush1.bf16.xpose.msra.mxu0 0
          %1214 = vmatprep.subr.bf16.mxu0 0
          %1215 = vmatpush1.bf16.xpose.msra.mxu0 0
          %1216 = vmatprep.subr.bf16.mxu0 0
          %1217 = vmatpush1.bf16.xpose.msra.mxu0 0
          %1218 = vmatprep.subr.bf16.mxu0 0
          %1219 = vmatpush1.bf16.xpose.msra.mxu0 0
          %1220 = vmatprep.subr.bf16.mxu0 0
          %1221 = vmatpush1.bf16.xpose.msra.mxu0 0
          %1222 = vmatprep.subr.bf16.mxu0 0
          %1223 = vmatpush1.bf16.xpose.msra.mxu0 0
          %1224 = vmatprep.subr.bf16.mxu0 0
          %1225 = vmatpush1.bf16.xpose.msra.mxu0 0
          %1226 = vmatprep.mubr.bf16.mxu0 0
          %1227 = vmatmul.mubr.bf16.gmra.mrb[0].mxu0 %v1189
          %v1228 = vpop.f32.mrb[0].mxu0
          %v1229 = vadd.f32 0.0, %v1228
          %v1230 = vpop.f32.mrb[0].mxu0
          %v1231 = vpop.f32.mrb[0].mxu0
          %v1232 = vpop.f32.mrb[0].mxu0
          %1233 = vdwg.mxu0
          %v1234 = vsel %vm855, %v1229, -inf
          %1235 = vmax.xlane.f32.xlu0 %v1234
          %v1236 = vpop.xlane.xlu0 %1235
          %v1237 = vsub.f32 %v1229, %v1236
          %v1238 = vmul.f32 %v1237, 1.442695
          %v1239 = vpow.pop %v1238
          %v1240 = vsel %vm855, %v1239, 0.0
          %1241 = vadd.xlane.f32.xlu0 %v1240
          %v1242 = vpop.xlane.xlu0 %1241
          %v1243 = vrcp.pop %v1242
          %v1244 = vmul.f32 %v1239, %v1243
          %v1245 = vpack.c.bf16 %v1244, %v1244
          %1246 = vrot.lane.b32.xlu0 %v854, 104
          %v1247 = vpop.permute.xlu0 %1246
          %v1249 = vsel %vm855, %v1245, 0
          %v1252 = vsel %vm917, %v1247, 0
          %1254 = vmatprep.subr.bf16.mxu0 0
          %1255 = vmatpush1.bf16.msra.mxu0 %v1252
          %1256 = vmatprep.subr.bf16.mxu0 0
          %1257 = vmatpush1.bf16.msra.mxu0 0
          %1258 = vmatprep.subr.bf16.mxu0 0
          %1259 = vmatpush1.bf16.msra.mxu0 0
          %1260 = vmatprep.subr.bf16.mxu0 0
          %1261 = vmatpush1.bf16.msra.mxu0 0
          %1262 = vmatprep.subr.bf16.mxu0 0
          %1263 = vmatpush1.bf16.msra.mxu0 0
          %1264 = vmatprep.subr.bf16.mxu0 0
          %1265 = vmatpush1.bf16.msra.mxu0 0
          %1266 = vmatprep.subr.bf16.mxu0 0
          %1267 = vmatpush1.bf16.msra.mxu0 0
          %1268 = vmatprep.subr.bf16.mxu0 0
          %1269 = vmatpush1.bf16.msra.mxu0 0
          %1270 = vmatprep.subr.bf16.mxu0 0
          %1271 = vmatpush1.bf16.msra.mxu0 0
          %1272 = vmatprep.subr.bf16.mxu0 0
          %1273 = vmatpush1.bf16.msra.mxu0 0
          %1274 = vmatprep.subr.bf16.mxu0 0
          %1275 = vmatpush1.bf16.msra.mxu0 0
          %1276 = vmatprep.subr.bf16.mxu0 0
          %1277 = vmatpush1.bf16.msra.mxu0 0
          %1278 = vmatprep.subr.bf16.mxu0 0
          %1279 = vmatpush1.bf16.msra.mxu0 0
          %1280 = vmatprep.subr.bf16.mxu0 0
          %1281 = vmatpush1.bf16.msra.mxu0 0
          %1282 = vmatprep.subr.bf16.mxu0 0
          %1283 = vmatpush1.bf16.msra.mxu0 0
          %1284 = vmatprep.subr.bf16.mxu0 0
          %1285 = vmatpush1.bf16.msra.mxu0 0
          %1286 = vmatprep.mubr.bf16.mxu0 0
          %1287 = vmatmul.mubr.bf16.gmra.mrb[0].mxu0 %v1249
          %v1288 = vpop.f32.mrb[0].mxu0
          %v1289 = vadd.f32 0.0, %v1288
          %v1290 = vpop.f32.mrb[0].mxu0
          %v1291 = vpop.f32.mrb[0].mxu0
          %v1292 = vpop.f32.mrb[0].mxu0
          %1293 = vdwg.mxu0
          %1294 = vrot.lane.b32.xlu0 %v852, 96
          %v1295 = vpop.permute.xlu0 %1294
          %1296 = vrot.lane.b32.xlu0 %v853, 96
          %v1297 = vpop.permute.xlu0 %1296
          %v1299 = vsel %vm855, %v1295, 0
          %v1302 = vsel %vm855, %v1297, 0
          %1304 = vmatprep.subr.bf16.mxu0 0
          %1305 = vmatpush1.bf16.xpose.msra.mxu0 %v1302
          %1306 = vmatprep.subr.bf16.mxu0 0
          %1307 = vmatpush1.bf16.xpose.msra.mxu0 0
          %1308 = vmatprep.subr.bf16.mxu0 0
          %1309 = vmatpush1.bf16.xpose.msra.mxu0 0
          %1310 = vmatprep.subr.bf16.mxu0 0
          %1311 = vmatpush1.bf16.xpose.msra.mxu0 0
          %1312 = vmatprep.subr.bf16.mxu0 0
          %1313 = vmatpush1.bf16.xpose.msra.mxu0 0
          %1314 = vmatprep.subr.bf16.mxu0 0
          %1315 = vmatpush1.bf16.xpose.msra.mxu0 0
          %1316 = vmatprep.subr.bf16.mxu0 0
          %1317 = vmatpush1.bf16.xpose.msra.mxu0 0
          %1318 = vmatprep.subr.bf16.mxu0 0
          %1319 = vmatpush1.bf16.xpose.msra.mxu0 0
          %1320 = vmatprep.subr.bf16.mxu0 0
          %1321 = vmatpush1.bf16.xpose.msra.mxu0 0
          %1322 = vmatprep.subr.bf16.mxu0 0
          %1323 = vmatpush1.bf16.xpose.msra.mxu0 0
          %1324 = vmatprep.subr.bf16.mxu0 0
          %1325 = vmatpush1.bf16.xpose.msra.mxu0 0
          %1326 = vmatprep.subr.bf16.mxu0 0
          %1327 = vmatpush1.bf16.xpose.msra.mxu0 0
          %1328 = vmatprep.subr.bf16.mxu0 0
          %1329 = vmatpush1.bf16.xpose.msra.mxu0 0
          %1330 = vmatprep.subr.bf16.mxu0 0
          %1331 = vmatpush1.bf16.xpose.msra.mxu0 0
          %1332 = vmatprep.subr.bf16.mxu0 0
          %1333 = vmatpush1.bf16.xpose.msra.mxu0 0
          %1334 = vmatprep.subr.bf16.mxu0 0
          %1335 = vmatpush1.bf16.xpose.msra.mxu0 0
          %1336 = vmatprep.mubr.bf16.mxu0 0
          %1337 = vmatmul.mubr.bf16.gmra.mrb[0].mxu0 %v1299
          %v1338 = vpop.f32.mrb[0].mxu0
          %v1339 = vadd.f32 0.0, %v1338
          %v1340 = vpop.f32.mrb[0].mxu0
          %v1341 = vpop.f32.mrb[0].mxu0
          %v1342 = vpop.f32.mrb[0].mxu0
          %1343 = vdwg.mxu0
          %v1344 = vsel %vm855, %v1339, -inf
          %1345 = vmax.xlane.f32.xlu0 %v1344
          %v1346 = vpop.xlane.xlu0 %1345
          %v1347 = vsub.f32 %v1339, %v1346
          %v1348 = vmul.f32 %v1347, 1.442695
          %v1349 = vpow.pop %v1348
          %v1350 = vsel %vm855, %v1349, 0.0
          %1351 = vadd.xlane.f32.xlu0 %v1350
          %v1352 = vpop.xlane.xlu0 %1351
          %v1353 = vrcp.pop %v1352
          %v1354 = vmul.f32 %v1349, %v1353
          %v1355 = vpack.c.bf16 %v1354, %v1354
          %1356 = vrot.lane.b32.xlu0 %v854, 96
          %v1357 = vpop.permute.xlu0 %1356
          %v1359 = vsel %vm855, %v1355, 0
          %v1362 = vsel %vm917, %v1357, 0
          %1364 = vmatprep.subr.bf16.mxu0 0
          %1365 = vmatpush1.bf16.msra.mxu0 %v1362
          %1366 = vmatprep.subr.bf16.mxu0 0
          %1367 = vmatpush1.bf16.msra.mxu0 0
          %1368 = vmatprep.subr.bf16.mxu0 0
          %1369 = vmatpush1.bf16.msra.mxu0 0
          %1370 = vmatprep.subr.bf16.mxu0 0
          %1371 = vmatpush1.bf16.msra.mxu0 0
          %1372 = vmatprep.subr.bf16.mxu0 0
          %1373 = vmatpush1.bf16.msra.mxu0 0
          %1374 = vmatprep.subr.bf16.mxu0 0
          %1375 = vmatpush1.bf16.msra.mxu0 0
          %1376 = vmatprep.subr.bf16.mxu0 0
          %1377 = vmatpush1.bf16.msra.mxu0 0
          %1378 = vmatprep.subr.bf16.mxu0 0
          %1379 = vmatpush1.bf16.msra.mxu0 0
          %1380 = vmatprep.subr.bf16.mxu0 0
          %1381 = vmatpush1.bf16.msra.mxu0 0
          %1382 = vmatprep.subr.bf16.mxu0 0
          %1383 = vmatpush1.bf16.msra.mxu0 0
          %1384 = vmatprep.subr.bf16.mxu0 0
          %1385 = vmatpush1.bf16.msra.mxu0 0
          %1386 = vmatprep.subr.bf16.mxu0 0
          %1387 = vmatpush1.bf16.msra.mxu0 0
          %1388 = vmatprep.subr.bf16.mxu0 0
          %1389 = vmatpush1.bf16.msra.mxu0 0
          %1390 = vmatprep.subr.bf16.mxu0 0
          %1391 = vmatpush1.bf16.msra.mxu0 0
          %1392 = vmatprep.subr.bf16.mxu0 0
          %1393 = vmatpush1.bf16.msra.mxu0 0
          %1394 = vmatprep.subr.bf16.mxu0 0
          %1395 = vmatpush1.bf16.msra.mxu0 0
          %1396 = vmatprep.mubr.bf16.mxu0 0
          %1397 = vmatmul.mubr.bf16.gmra.mrb[0].mxu0 %v1359
          %v1398 = vpop.f32.mrb[0].mxu0
          %v1399 = vadd.f32 0.0, %v1398
          %v1400 = vpop.f32.mrb[0].mxu0
          %v1401 = vpop.f32.mrb[0].mxu0
          %v1402 = vpop.f32.mrb[0].mxu0
          %1403 = vdwg.mxu0
          %1404 = vrot.lane.b32.xlu0 %v852, 88
          %v1405 = vpop.permute.xlu0 %1404
          %1406 = vrot.lane.b32.xlu0 %v853, 88
          %v1407 = vpop.permute.xlu0 %1406
          %v1409 = vsel %vm855, %v1405, 0
          %v1412 = vsel %vm855, %v1407, 0
          %1414 = vmatprep.subr.bf16.mxu0 0
          %1415 = vmatpush1.bf16.xpose.msra.mxu0 %v1412
          %1416 = vmatprep.subr.bf16.mxu0 0
          %1417 = vmatpush1.bf16.xpose.msra.mxu0 0
          %1418 = vmatprep.subr.bf16.mxu0 0
          %1419 = vmatpush1.bf16.xpose.msra.mxu0 0
          %1420 = vmatprep.subr.bf16.mxu0 0
          %1421 = vmatpush1.bf16.xpose.msra.mxu0 0
          %1422 = vmatprep.subr.bf16.mxu0 0
          %1423 = vmatpush1.bf16.xpose.msra.mxu0 0
          %1424 = vmatprep.subr.bf16.mxu0 0
          %1425 = vmatpush1.bf16.xpose.msra.mxu0 0
          %1426 = vmatprep.subr.bf16.mxu0 0
          %1427 = vmatpush1.bf16.xpose.msra.mxu0 0
          %1428 = vmatprep.subr.bf16.mxu0 0
          %1429 = vmatpush1.bf16.xpose.msra.mxu0 0
          %1430 = vmatprep.subr.bf16.mxu0 0
          %1431 = vmatpush1.bf16.xpose.msra.mxu0 0
          %1432 = vmatprep.subr.bf16.mxu0 0
          %1433 = vmatpush1.bf16.xpose.msra.mxu0 0
          %1434 = vmatprep.subr.bf16.mxu0 0
          %1435 = vmatpush1.bf16.xpose.msra.mxu0 0
          %1436 = vmatprep.subr.bf16.mxu0 0
          %1437 = vmatpush1.bf16.xpose.msra.mxu0 0
          %1438 = vmatprep.subr.bf16.mxu0 0
          %1439 = vmatpush1.bf16.xpose.msra.mxu0 0
          %1440 = vmatprep.subr.bf16.mxu0 0
          %1441 = vmatpush1.bf16.xpose.msra.mxu0 0
          %1442 = vmatprep.subr.bf16.mxu0 0
          %1443 = vmatpush1.bf16.xpose.msra.mxu0 0
          %1444 = vmatprep.subr.bf16.mxu0 0
          %1445 = vmatpush1.bf16.xpose.msra.mxu0 0
          %1446 = vmatprep.mubr.bf16.mxu0 0
          %1447 = vmatmul.mubr.bf16.gmra.mrb[0].mxu0 %v1409
          %v1448 = vpop.f32.mrb[0].mxu0
          %v1449 = vadd.f32 0.0, %v1448
          %v1450 = vpop.f32.mrb[0].mxu0
          %v1451 = vpop.f32.mrb[0].mxu0
          %v1452 = vpop.f32.mrb[0].mxu0
          %1453 = vdwg.mxu0
          %v1454 = vsel %vm855, %v1449, -inf
          %1455 = vmax.xlane.f32.xlu0 %v1454
          %v1456 = vpop.xlane.xlu0 %1455
          %v1457 = vsub.f32 %v1449, %v1456
          %v1458 = vmul.f32 %v1457, 1.442695
          %v1459 = vpow.pop %v1458
          %v1460 = vsel %vm855, %v1459, 0.0
          %1461 = vadd.xlane.f32.xlu0 %v1460
          %v1462 = vpop.xlane.xlu0 %1461
          %v1463 = vrcp.pop %v1462
          %v1464 = vmul.f32 %v1459, %v1463
          %v1465 = vpack.c.bf16 %v1464, %v1464
          %1466 = vrot.lane.b32.xlu0 %v854, 88
          %v1467 = vpop.permute.xlu0 %1466
          %v1469 = vsel %vm855, %v1465, 0
          %v1472 = vsel %vm917, %v1467, 0
          %1474 = vmatprep.subr.bf16.mxu0 0
          %1475 = vmatpush1.bf16.msra.mxu0 %v1472
          %1476 = vmatprep.subr.bf16.mxu0 0
          %1477 = vmatpush1.bf16.msra.mxu0 0
          %1478 = vmatprep.subr.bf16.mxu0 0
          %1479 = vmatpush1.bf16.msra.mxu0 0
          %1480 = vmatprep.subr.bf16.mxu0 0
          %1481 = vmatpush1.bf16.msra.mxu0 0
          %1482 = vmatprep.subr.bf16.mxu0 0
          %1483 = vmatpush1.bf16.msra.mxu0 0
          %1484 = vmatprep.subr.bf16.mxu0 0
          %1485 = vmatpush1.bf16.msra.mxu0 0
          %1486 = vmatprep.subr.bf16.mxu0 0
          %1487 = vmatpush1.bf16.msra.mxu0 0
          %1488 = vmatprep.subr.bf16.mxu0 0
          %1489 = vmatpush1.bf16.msra.mxu0 0
          %1490 = vmatprep.subr.bf16.mxu0 0
          %1491 = vmatpush1.bf16.msra.mxu0 0
          %1492 = vmatprep.subr.bf16.mxu0 0
          %1493 = vmatpush1.bf16.msra.mxu0 0
          %1494 = vmatprep.subr.bf16.mxu0 0
          %1495 = vmatpush1.bf16.msra.mxu0 0
          %1496 = vmatprep.subr.bf16.mxu0 0
          %1497 = vmatpush1.bf16.msra.mxu0 0
          %1498 = vmatprep.subr.bf16.mxu0 0
          %1499 = vmatpush1.bf16.msra.mxu0 0
          %1500 = vmatprep.subr.bf16.mxu0 0
          %1501 = vmatpush1.bf16.msra.mxu0 0
          %1502 = vmatprep.subr.bf16.mxu0 0
          %1503 = vmatpush1.bf16.msra.mxu0 0
          %1504 = vmatprep.subr.bf16.mxu0 0
          %1505 = vmatpush1.bf16.msra.mxu0 0
          %1506 = vmatprep.mubr.bf16.mxu0 0
          %1507 = vmatmul.mubr.bf16.gmra.mrb[0].mxu0 %v1469
          %v1508 = vpop.f32.mrb[0].mxu0
          %v1509 = vadd.f32 0.0, %v1508
          %v1510 = vpop.f32.mrb[0].mxu0
          %v1511 = vpop.f32.mrb[0].mxu0
          %v1512 = vpop.f32.mrb[0].mxu0
          %1513 = vdwg.mxu0
          %1514 = vrot.lane.b32.xlu0 %v852, 80
          %v1515 = vpop.permute.xlu0 %1514
          %1516 = vrot.lane.b32.xlu0 %v853, 80
          %v1517 = vpop.permute.xlu0 %1516
          %v1519 = vsel %vm855, %v1515, 0
          %v1522 = vsel %vm855, %v1517, 0
          %1524 = vmatprep.subr.bf16.mxu0 0
          %1525 = vmatpush1.bf16.xpose.msra.mxu0 %v1522
          %1526 = vmatprep.subr.bf16.mxu0 0
          %1527 = vmatpush1.bf16.xpose.msra.mxu0 0
          %1528 = vmatprep.subr.bf16.mxu0 0
          %1529 = vmatpush1.bf16.xpose.msra.mxu0 0
          %1530 = vmatprep.subr.bf16.mxu0 0
          %1531 = vmatpush1.bf16.xpose.msra.mxu0 0
          %1532 = vmatprep.subr.bf16.mxu0 0
          %1533 = vmatpush1.bf16.xpose.msra.mxu0 0
          %1534 = vmatprep.subr.bf16.mxu0 0
          %1535 = vmatpush1.bf16.xpose.msra.mxu0 0
          %1536 = vmatprep.subr.bf16.mxu0 0
          %1537 = vmatpush1.bf16.xpose.msra.mxu0 0
          %1538 = vmatprep.subr.bf16.mxu0 0
          %1539 = vmatpush1.bf16.xpose.msra.mxu0 0
          %1540 = vmatprep.subr.bf16.mxu0 0
          %1541 = vmatpush1.bf16.xpose.msra.mxu0 0
          %1542 = vmatprep.subr.bf16.mxu0 0
          %1543 = vmatpush1.bf16.xpose.msra.mxu0 0
          %1544 = vmatprep.subr.bf16.mxu0 0
          %1545 = vmatpush1.bf16.xpose.msra.mxu0 0
          %1546 = vmatprep.subr.bf16.mxu0 0
          %1547 = vmatpush1.bf16.xpose.msra.mxu0 0
          %1548 = vmatprep.subr.bf16.mxu0 0
          %1549 = vmatpush1.bf16.xpose.msra.mxu0 0
          %1550 = vmatprep.subr.bf16.mxu0 0
          %1551 = vmatpush1.bf16.xpose.msra.mxu0 0
          %1552 = vmatprep.subr.bf16.mxu0 0
          %1553 = vmatpush1.bf16.xpose.msra.mxu0 0
          %1554 = vmatprep.subr.bf16.mxu0 0
          %1555 = vmatpush1.bf16.xpose.msra.mxu0 0
          %1556 = vmatprep.mubr.bf16.mxu0 0
          %1557 = vmatmul.mubr.bf16.gmra.mrb[0].mxu0 %v1519
          %v1558 = vpop.f32.mrb[0].mxu0
          %v1559 = vadd.f32 0.0, %v1558
          %v1560 = vpop.f32.mrb[0].mxu0
          %v1561 = vpop.f32.mrb[0].mxu0
          %v1562 = vpop.f32.mrb[0].mxu0
          %1563 = vdwg.mxu0
          %v1564 = vsel %vm855, %v1559, -inf
          %1565 = vmax.xlane.f32.xlu0 %v1564
          %v1566 = vpop.xlane.xlu0 %1565
          %v1567 = vsub.f32 %v1559, %v1566
          %v1568 = vmul.f32 %v1567, 1.442695
          %v1569 = vpow.pop %v1568
          %v1570 = vsel %vm855, %v1569, 0.0
          %1571 = vadd.xlane.f32.xlu0 %v1570
          %v1572 = vpop.xlane.xlu0 %1571
          %v1573 = vrcp.pop %v1572
          %v1574 = vmul.f32 %v1569, %v1573
          %v1575 = vpack.c.bf16 %v1574, %v1574
          %1576 = vrot.lane.b32.xlu0 %v854, 80
          %v1577 = vpop.permute.xlu0 %1576
          %v1579 = vsel %vm855, %v1575, 0
          %v1582 = vsel %vm917, %v1577, 0
          %1584 = vmatprep.subr.bf16.mxu0 0
          %1585 = vmatpush1.bf16.msra.mxu0 %v1582
          %1586 = vmatprep.subr.bf16.mxu0 0
          %1587 = vmatpush1.bf16.msra.mxu0 0
          %1588 = vmatprep.subr.bf16.mxu0 0
          %1589 = vmatpush1.bf16.msra.mxu0 0
          %1590 = vmatprep.subr.bf16.mxu0 0
          %1591 = vmatpush1.bf16.msra.mxu0 0
          %1592 = vmatprep.subr.bf16.mxu0 0
          %1593 = vmatpush1.bf16.msra.mxu0 0
          %1594 = vmatprep.subr.bf16.mxu0 0
          %1595 = vmatpush1.bf16.msra.mxu0 0
          %1596 = vmatprep.subr.bf16.mxu0 0
          %1597 = vmatpush1.bf16.msra.mxu0 0
          %1598 = vmatprep.subr.bf16.mxu0 0
          %1599 = vmatpush1.bf16.msra.mxu0 0
          %1600 = vmatprep.subr.bf16.mxu0 0
          %1601 = vmatpush1.bf16.msra.mxu0 0
          %1602 = vmatprep.subr.bf16.mxu0 0
          %1603 = vmatpush1.bf16.msra.mxu0 0
          %1604 = vmatprep.subr.bf16.mxu0 0
          %1605 = vmatpush1.bf16.msra.mxu0 0
          %1606 = vmatprep.subr.bf16.mxu0 0
          %1607 = vmatpush1.bf16.msra.mxu0 0
          %1608 = vmatprep.subr.bf16.mxu0 0
          %1609 = vmatpush1.bf16.msra.mxu0 0
          %1610 = vmatprep.subr.bf16.mxu0 0
          %1611 = vmatpush1.bf16.msra.mxu0 0
          %1612 = vmatprep.subr.bf16.mxu0 0
          %1613 = vmatpush1.bf16.msra.mxu0 0
          %1614 = vmatprep.subr.bf16.mxu0 0
          %1615 = vmatpush1.bf16.msra.mxu0 0
          %1616 = vmatprep.mubr.bf16.mxu0 0
          %1617 = vmatmul.mubr.bf16.gmra.mrb[0].mxu0 %v1579
          %v1618 = vpop.f32.mrb[0].mxu0
          %v1619 = vadd.f32 0.0, %v1618
          %v1620 = vpop.f32.mrb[0].mxu0
          %v1621 = vpop.f32.mrb[0].mxu0
          %v1622 = vpop.f32.mrb[0].mxu0
          %1623 = vdwg.mxu0
          %1624 = vrot.lane.b32.xlu0 %v852, 72
          %v1625 = vpop.permute.xlu0 %1624
          %1626 = vrot.lane.b32.xlu0 %v853, 72
          %v1627 = vpop.permute.xlu0 %1626
          %v1629 = vsel %vm855, %v1625, 0
          %v1632 = vsel %vm855, %v1627, 0
          %1634 = vmatprep.subr.bf16.mxu0 0
          %1635 = vmatpush1.bf16.xpose.msra.mxu0 %v1632
          %1636 = vmatprep.subr.bf16.mxu0 0
          %1637 = vmatpush1.bf16.xpose.msra.mxu0 0
          %1638 = vmatprep.subr.bf16.mxu0 0
          %1639 = vmatpush1.bf16.xpose.msra.mxu0 0
          %1640 = vmatprep.subr.bf16.mxu0 0
          %1641 = vmatpush1.bf16.xpose.msra.mxu0 0
          %1642 = vmatprep.subr.bf16.mxu0 0
          %1643 = vmatpush1.bf16.xpose.msra.mxu0 0
          %1644 = vmatprep.subr.bf16.mxu0 0
          %1645 = vmatpush1.bf16.xpose.msra.mxu0 0
          %1646 = vmatprep.subr.bf16.mxu0 0
          %1647 = vmatpush1.bf16.xpose.msra.mxu0 0
          %1648 = vmatprep.subr.bf16.mxu0 0
          %1649 = vmatpush1.bf16.xpose.msra.mxu0 0
          %1650 = vmatprep.subr.bf16.mxu0 0
          %1651 = vmatpush1.bf16.xpose.msra.mxu0 0
          %1652 = vmatprep.subr.bf16.mxu0 0
          %1653 = vmatpush1.bf16.xpose.msra.mxu0 0
          %1654 = vmatprep.subr.bf16.mxu0 0
          %1655 = vmatpush1.bf16.xpose.msra.mxu0 0
          %1656 = vmatprep.subr.bf16.mxu0 0
          %1657 = vmatpush1.bf16.xpose.msra.mxu0 0
          %1658 = vmatprep.subr.bf16.mxu0 0
          %1659 = vmatpush1.bf16.xpose.msra.mxu0 0
          %1660 = vmatprep.subr.bf16.mxu0 0
          %1661 = vmatpush1.bf16.xpose.msra.mxu0 0
          %1662 = vmatprep.subr.bf16.mxu0 0
          %1663 = vmatpush1.bf16.xpose.msra.mxu0 0
          %1664 = vmatprep.subr.bf16.mxu0 0
          %1665 = vmatpush1.bf16.xpose.msra.mxu0 0
          %1666 = vmatprep.mubr.bf16.mxu0 0
          %1667 = vmatmul.mubr.bf16.gmra.mrb[0].mxu0 %v1629
          %v1668 = vpop.f32.mrb[0].mxu0
          %v1669 = vadd.f32 0.0, %v1668
          %v1670 = vpop.f32.mrb[0].mxu0
          %v1671 = vpop.f32.mrb[0].mxu0
          %v1672 = vpop.f32.mrb[0].mxu0
          %1673 = vdwg.mxu0
          %v1674 = vsel %vm855, %v1669, -inf
          %1675 = vmax.xlane.f32.xlu0 %v1674
          %v1676 = vpop.xlane.xlu0 %1675
          %v1677 = vsub.f32 %v1669, %v1676
          %v1678 = vmul.f32 %v1677, 1.442695
          %v1679 = vpow.pop %v1678
          %v1680 = vsel %vm855, %v1679, 0.0
          %1681 = vadd.xlane.f32.xlu0 %v1680
          %v1682 = vpop.xlane.xlu0 %1681
          %v1683 = vrcp.pop %v1682
          %v1684 = vmul.f32 %v1679, %v1683
          %v1685 = vpack.c.bf16 %v1684, %v1684
          %1686 = vrot.lane.b32.xlu0 %v854, 72
          %v1687 = vpop.permute.xlu0 %1686
          %v1689 = vsel %vm855, %v1685, 0
          %v1692 = vsel %vm917, %v1687, 0
          %1694 = vmatprep.subr.bf16.mxu0 0
          %1695 = vmatpush1.bf16.msra.mxu0 %v1692
          %1696 = vmatprep.subr.bf16.mxu0 0
          %1697 = vmatpush1.bf16.msra.mxu0 0
          %1698 = vmatprep.subr.bf16.mxu0 0
          %1699 = vmatpush1.bf16.msra.mxu0 0
          %1700 = vmatprep.subr.bf16.mxu0 0
          %1701 = vmatpush1.bf16.msra.mxu0 0
          %1702 = vmatprep.subr.bf16.mxu0 0
          %1703 = vmatpush1.bf16.msra.mxu0 0
          %1704 = vmatprep.subr.bf16.mxu0 0
          %1705 = vmatpush1.bf16.msra.mxu0 0
          %1706 = vmatprep.subr.bf16.mxu0 0
          %1707 = vmatpush1.bf16.msra.mxu0 0
          %1708 = vmatprep.subr.bf16.mxu0 0
          %1709 = vmatpush1.bf16.msra.mxu0 0
          %1710 = vmatprep.subr.bf16.mxu0 0
          %1711 = vmatpush1.bf16.msra.mxu0 0
          %1712 = vmatprep.subr.bf16.mxu0 0
          %1713 = vmatpush1.bf16.msra.mxu0 0
          %1714 = vmatprep.subr.bf16.mxu0 0
          %1715 = vmatpush1.bf16.msra.mxu0 0
          %1716 = vmatprep.subr.bf16.mxu0 0
          %1717 = vmatpush1.bf16.msra.mxu0 0
          %1718 = vmatprep.subr.bf16.mxu0 0
          %1719 = vmatpush1.bf16.msra.mxu0 0
          %1720 = vmatprep.subr.bf16.mxu0 0
          %1721 = vmatpush1.bf16.msra.mxu0 0
          %1722 = vmatprep.subr.bf16.mxu0 0
          %1723 = vmatpush1.bf16.msra.mxu0 0
          %1724 = vmatprep.subr.bf16.mxu0 0
          %1725 = vmatpush1.bf16.msra.mxu0 0
          %1726 = vmatprep.mubr.bf16.mxu0 0
          %1727 = vmatmul.mubr.bf16.gmra.mrb[0].mxu0 %v1689
          %v1728 = vpop.f32.mrb[0].mxu0
          %v1729 = vadd.f32 0.0, %v1728
          %v1730 = vpop.f32.mrb[0].mxu0
          %v1731 = vpop.f32.mrb[0].mxu0
          %v1732 = vpop.f32.mrb[0].mxu0
          %1733 = vdwg.mxu0
          %1735 = vrot.lane.b32.xlu0 %v1069, 8
          %v1736 = vpop.permute.xlu0 %1735
          %1739 = vrot.lane.b32.xlu0 %v1179, 16
          %v1740 = vpop.permute.xlu0 %1739
          %1743 = vrot.lane.b32.xlu0 %v1289, 24
          %v1744 = vpop.permute.xlu0 %1743
          %1747 = vrot.lane.b32.xlu0 %v1399, 32
          %v1748 = vpop.permute.xlu0 %1747
          %1751 = vrot.lane.b32.xlu0 %v1509, 40
          %v1752 = vpop.permute.xlu0 %1751
          %1755 = vrot.lane.b32.xlu0 %v1619, 48
          %v1756 = vpop.permute.xlu0 %1755
          %1759 = vrot.lane.b32.xlu0 %v1729, 56
          %v1760 = vpop.permute.xlu0 %1759
          %v1762 = vsel %vm855, %v956, %v1736
          %vm1763 = vcmask 130048
          %v1764 = vsel %vm1763, %v1762, %v1740
          %vm1765 = vcmask 195584
          %v1766 = vsel %vm1765, %v1764, %v1744
          %vm1767 = vcmask 261120
          %v1768 = vsel %vm1767, %v1766, %v1748
          %vm1769 = vcmask 326656
          %v1770 = vsel %vm1769, %v1768, %v1752
          %vm1771 = vcmask 392192
          %v1772 = vsel %vm1771, %v1770, %v1756
          %vm1773 = vcmask 457728
          %v1774 = vsel %vm1773, %v1772, %v1760
          %v1775 = vpack.c.bf16 %v1774, %v1774
          %s1776 = smul.addr %s600, 4
          %s1777 = scalar_lea.vmem %s8, %s1776
          %v1778 = vld [vmem:[%s1777] sm:$0xf]
          %v1779 = vld [vmem:[%s1777 + $0x4] sm:$0xf]
          %v1780 = vld [vmem:[%s1777 + $0x8] sm:$0xf]
          %v1781 = vld [vmem:[%s1777 + $0xc] sm:$0xf]
          %v1782 = vld [vmem:[%s1777 + $0x10] sm:$0xf]
          %v1783 = vld [vmem:[%s1777 + $0x14] sm:$0xf]
          %v1784 = vld [vmem:[%s1777 + $0x18] sm:$0xf]
          %v1785 = vld [vmem:[%s1777 + $0x1c] sm:$0xf]
          %s1786 = scalar_lea.vmem %s9, %s593
          %v1787 = vld [vmem:[%s1786] sm:$0x1]
          %v1789 = vlaneseq
          %v1790 = vshrl.u32 %v1789, 7
          %v1791 = vsub.s32 0, %v1790
          %v1792 = vrot.slane %v1787, %v1791
          %v1802 = vunpack.c.l.b16 %v1778
          %v1803 = vunpack.c.l.b16 %v1779
          %v1804 = vunpack.c.l.b16 %v1780
          %v1805 = vunpack.c.l.b16 %v1781
          %v1806 = vunpack.c.l.b16 %v1782
          %v1807 = vunpack.c.l.b16 %v1783
          %v1808 = vunpack.c.l.b16 %v1784
          %v1809 = vunpack.c.l.b16 %v1785
          %v1810 = vpack.c.b16 %v1803, %v1802
          %v1811 = vpack.c.b16 %v1805, %v1804
          %v1812 = vpack.c.b16 %v1807, %v1806
          %v1813 = vpack.c.b16 %v1809, %v1808
          %v1819 = vsel %vm643, %v1775, 0
          %1821 = vmatprep.subr.bf16.mxu0 0
          %1822 = vmatpush1.bf16.msra.mxu0 %v1810
          %1823 = vmatprep.subr.bf16.mxu0 0
          %1824 = vmatpush1.bf16.msra.mxu0 %v1811
          %1825 = vmatprep.subr.bf16.mxu0 0
          %1826 = vmatpush1.bf16.msra.mxu0 %v1812
          %1827 = vmatprep.subr.bf16.mxu0 0
          %1828 = vmatpush1.bf16.msra.mxu0 %v1813
          %1829 = vmatprep.subr.bf16.mxu0 0
          %1830 = vmatpush1.bf16.msra.mxu0 0
          %1831 = vmatprep.subr.bf16.mxu0 0
          %1832 = vmatpush1.bf16.msra.mxu0 0
          %1833 = vmatprep.subr.bf16.mxu0 0
          %1834 = vmatpush1.bf16.msra.mxu0 0
          %1835 = vmatprep.subr.bf16.mxu0 0
          %1836 = vmatpush1.bf16.msra.mxu0 0
          %1837 = vmatprep.subr.bf16.mxu0 0
          %1838 = vmatpush1.bf16.msra.mxu0 0
          %1839 = vmatprep.subr.bf16.mxu0 0
          %1840 = vmatpush1.bf16.msra.mxu0 0
          %1841 = vmatprep.subr.bf16.mxu0 0
          %1842 = vmatpush1.bf16.msra.mxu0 0
          %1843 = vmatprep.subr.bf16.mxu0 0
          %1844 = vmatpush1.bf16.msra.mxu0 0
          %1845 = vmatprep.subr.bf16.mxu0 0
          %1846 = vmatpush1.bf16.msra.mxu0 0
          %1847 = vmatprep.subr.bf16.mxu0 0
          %1848 = vmatpush1.bf16.msra.mxu0 0
          %1849 = vmatprep.subr.bf16.mxu0 0
          %1850 = vmatpush1.bf16.msra.mxu0 0
          %1851 = vmatprep.subr.bf16.mxu0 0
          %1852 = vmatpush1.bf16.msra.mxu0 0
          %1853 = vmatprep.mubr.bf16.mxu0 0
          %1854 = vmatmul.mubr.bf16.gmra.mrb[0].mxu0 %v1819
          %v1855 = vpop.f32.mrb[0].mxu0
          %v1856 = vadd.f32 %v1792, %v1855
          %v1857 = vpop.f32.mrb[0].mxu0
          %v1858 = vpop.f32.mrb[0].mxu0
          %v1859 = vpop.f32.mrb[0].mxu0
          %1860 = vdwg.mxu0
          %v1861 = vadd.f32 %v598, %v1856
          %v1862 = vsel %vm643, %v1861, 0.0
          %1863 = vadd.xlane.f32.xlu0 %v1862
          %v1864 = vpop.xlane.xlu0 %1863
          %v1865 = vrcp.pop 64.0
          %v1866 = vmul.f32 %v1864, %v1865
          %v1867 = vsub.f32 %v1861, %v1866
          %v1868 = vmul.f32 %v1867, %v1867
          %v1869 = vsel %vm643, %v1868, 0.0
          %1870 = vadd.xlane.f32.xlu0 %v1869
          %v1871 = vpop.xlane.xlu0 %1870
          %v1872 = vmul.f32 %v1871, %v1865
          %v1873 = vadd.f32 %v1872, 1e-05
          %v1874 = vrsqrt.pop %v1873
          %v1875 = vmul.f32 %v1867, %v1874
          %s1876 = scalar_lea.vmem %s10, %s593
          %v1877 = vld [vmem:[%s1876] sm:$0x1]
          %v1879 = vlaneseq
          %v1880 = vshrl.u32 %v1879, 7
          %v1881 = vsub.s32 0, %v1880
          %v1882 = vrot.slane %v1877, %v1881
          %v1884 = vmul.f32 %v1875, %v1882
          %s1885 = scalar_lea.vmem %s11, %s593
          %v1886 = vld [vmem:[%s1885] sm:$0x1]
          %v1888 = vlaneseq
          %v1889 = vshrl.u32 %v1888, 7
          %v1890 = vsub.s32 0, %v1889
          %v1891 = vrot.slane %v1886, %v1890
          %v1893 = vadd.f32 %v1884, %v1891
          %v1894 = vpack.c.bf16 %v1893, %v1893
          loop: start=0, step=1, limit=4
          $region100: #{tpu_custom_call.1} parent=96 // loop_pre_header
            _
          $region101: #{tpu_custom_call.1} parent=96 // loop_header
            %s1896 = sphi 0, %s1900
            %p1897 = scmp.ge.s32.totalorder %s1896, 4
            %v1901 = vphi 0.0, %v2465
          $region102: #{tpu_custom_call.1} parent=96 // loop_header_branch
            %1899 = sbr.rel (%p1897) target = $region106
          $region103: #{tpu_custom_call.1} parent=96 // loop_body
            %s1902 = smul.u32 %s1896, 512
            %s1903 = sshra.s32 %s1902, 7
            %s1904 = sand.u32 %s1902, 127
            %s1905 = smul.u32 %s593, 128
            %s1906 = sadd.s32 %s1903, %s1905
            %s1907 = smul.addr %s1906, 4
            %s1908 = scalar_lea.vmem %s12, %s1907
            %v1909 = vld [vmem:[%s1908] sm:$0xff]
            %v1910 = vld [vmem:[%s1908 + $0x8] sm:$0xff]
            %v1911 = vld [vmem:[%s1908 + $0x40] sm:$0xff]
            %v1912 = vld [vmem:[%s1908 + $0x48] sm:$0xff]
            %v1913 = vld [vmem:[%s1908 + $0x80] sm:$0xff]
            %v1914 = vld [vmem:[%s1908 + $0x88] sm:$0xff]
            %v1915 = vld [vmem:[%s1908 + $0xc0] sm:$0xff]
            %v1916 = vld [vmem:[%s1908 + $0xc8] sm:$0xff]
            %v1917 = vld [vmem:[%s1908 + $0x100] sm:$0xff]
            %v1918 = vld [vmem:[%s1908 + $0x108] sm:$0xff]
            %v1919 = vld [vmem:[%s1908 + $0x140] sm:$0xff]
            %v1920 = vld [vmem:[%s1908 + $0x148] sm:$0xff]
            %v1921 = vld [vmem:[%s1908 + $0x180] sm:$0xff]
            %v1922 = vld [vmem:[%s1908 + $0x188] sm:$0xff]
            %v1923 = vld [vmem:[%s1908 + $0x1c0] sm:$0xff]
            %v1924 = vld [vmem:[%s1908 + $0x1c8] sm:$0xff]
            %s1925 = smul.u32 %s593, 16
            %s1926 = sadd.s32 %s1903, %s1925
            %s1927 = scalar_lea.vmem %s13, %s1926
            %v1928 = vld [vmem:[%s1927] sm:$0xf]
            %v1930 = vlaneseq
            %v1931 = vshrl.u32 %v1930, 7
            %v1932 = vsub.s32 0, %v1931
            %v1933 = vrot.slane %v1928, %v1932
            %v1934 = vlaneseq
            %v1935 = vshrl.u32 %v1934, 7
            %v1936 = vsub.s32 1, %v1935
            %v1937 = vrot.slane %v1928, %v1936
            %v1938 = vlaneseq
            %v1939 = vshrl.u32 %v1938, 7
            %v1940 = vsub.s32 2, %v1939
            %v1941 = vrot.slane %v1928, %v1940
            %v1942 = vlaneseq
            %v1943 = vshrl.u32 %v1942, 7
            %v1944 = vsub.s32 3, %v1943
            %v1945 = vrot.slane %v1928, %v1944
            %v1966 = vunpack.c.l.b16 %v1909
            %v1967 = vunpack.c.h.b16 %v1909
            %v1968 = vunpack.c.l.b16 %v1910
            %v1969 = vunpack.c.h.b16 %v1910
            %v1970 = vunpack.c.l.b16 %v1911
            %v1971 = vunpack.c.h.b16 %v1911
            %v1972 = vunpack.c.l.b16 %v1912
            %v1973 = vunpack.c.h.b16 %v1912
            %v1974 = vunpack.c.l.b16 %v1913
            %v1975 = vunpack.c.h.b16 %v1913
            %v1976 = vunpack.c.l.b16 %v1914
            %v1977 = vunpack.c.h.b16 %v1914
            %v1978 = vunpack.c.l.b16 %v1915
            %v1979 = vunpack.c.h.b16 %v1915
            %v1980 = vunpack.c.l.b16 %v1916
            %v1981 = vunpack.c.h.b16 %v1916
            %v1982 = vunpack.c.l.b16 %v1917
            %v1983 = vunpack.c.h.b16 %v1917
            %v1984 = vunpack.c.l.b16 %v1918
            %v1985 = vunpack.c.h.b16 %v1918
            %v1986 = vunpack.c.l.b16 %v1919
            %v1987 = vunpack.c.h.b16 %v1919
            %v1988 = vunpack.c.l.b16 %v1920
            %v1989 = vunpack.c.h.b16 %v1920
            %v1990 = vunpack.c.l.b16 %v1921
            %v1991 = vunpack.c.h.b16 %v1921
            %v1992 = vunpack.c.l.b16 %v1922
            %v1993 = vunpack.c.h.b16 %v1922
            %v1994 = vunpack.c.l.b16 %v1923
            %v1995 = vunpack.c.h.b16 %v1923
            %v1996 = vunpack.c.l.b16 %v1924
            %v1997 = vunpack.c.h.b16 %v1924
            %v1998 = vpack.c.b16 %v1970, %v1966
            %v1999 = vpack.c.b16 %v1971, %v1967
            %v2000 = vpack.c.b16 %v1972, %v1968
            %v2001 = vpack.c.b16 %v1973, %v1969
            %v2002 = vpack.c.b16 %v1978, %v1974
            %v2003 = vpack.c.b16 %v1979, %v1975
            %v2004 = vpack.c.b16 %v1980, %v1976
            %v2005 = vpack.c.b16 %v1981, %v1977
            %v2006 = vpack.c.b16 %v1986, %v1982
            %v2007 = vpack.c.b16 %v1987, %v1983
            %v2008 = vpack.c.b16 %v1988, %v1984
            %v2009 = vpack.c.b16 %v1989, %v1985
            %v2010 = vpack.c.b16 %v1994, %v1990
            %v2011 = vpack.c.b16 %v1995, %v1991
            %v2012 = vpack.c.b16 %v1996, %v1992
            %v2013 = vpack.c.b16 %v1997, %v1993
            %v2031 = vsel %vm643, %v1894, 0
            %2033 = vmatprep.subr.bf16.mxu0 %v1999
            %2034 = vmatpush1.bf16.msra.mxu0 %v1998
            %2035 = vmatprep.subr.bf16.mxu0 %v2003
            %2036 = vmatpush1.bf16.msra.mxu0 %v2002
            %2037 = vmatprep.subr.bf16.mxu0 %v2007
            %2038 = vmatpush1.bf16.msra.mxu0 %v2006
            %2039 = vmatprep.subr.bf16.mxu0 %v2011
            %2040 = vmatpush1.bf16.msra.mxu0 %v2010
            %2041 = vmatprep.subr.bf16.mxu0 0
            %2042 = vmatpush1.bf16.msra.mxu0 0
            %2043 = vmatprep.subr.bf16.mxu0 0
            %2044 = vmatpush1.bf16.msra.mxu0 0
            %2045 = vmatprep.subr.bf16.mxu0 0
            %2046 = vmatpush1.bf16.msra.mxu0 0
            %2047 = vmatprep.subr.bf16.mxu0 0
            %2048 = vmatpush1.bf16.msra.mxu0 0
            %2049 = vmatprep.subr.bf16.mxu0 0
            %2050 = vmatpush1.bf16.msra.mxu0 0
            %2051 = vmatprep.subr.bf16.mxu0 0
            %2052 = vmatpush1.bf16.msra.mxu0 0
            %2053 = vmatprep.subr.bf16.mxu0 0
            %2054 = vmatpush1.bf16.msra.mxu0 0
            %2055 = vmatprep.subr.bf16.mxu0 0
            %2056 = vmatpush1.bf16.msra.mxu0 0
            %2057 = vmatprep.subr.bf16.mxu0 0
            %2058 = vmatpush1.bf16.msra.mxu0 0
            %2059 = vmatprep.subr.bf16.mxu0 0
            %2060 = vmatpush1.bf16.msra.mxu0 0
            %2061 = vmatprep.subr.bf16.mxu0 0
            %2062 = vmatpush1.bf16.msra.mxu0 0
            %2063 = vmatprep.subr.bf16.mxu0 0
            %2064 = vmatpush1.bf16.msra.mxu0 0
            %2065 = vmatprep.mubr.bf16.mxu0 0
            %2066 = vmatmul.mubr.bf16.gmra.mrb[0].mxu0 %v2031
            %v2067 = vpop.f32.mrb[0].mxu0
            %v2068 = vadd.f32 %v1933, %v2067
            %v2069 = vpop.f32.mrb[0].mxu0
            %v2070 = vadd.f32 %v1937, %v2069
            %v2071 = vpop.f32.mrb[0].mxu0
            %v2072 = vpop.f32.mrb[0].mxu0
            %2073 = vdwg.mxu0
            %2074 = vmatprep.subr.bf16.mxu0 %v2001
            %2075 = vmatpush1.bf16.msra.mxu0 %v2000
            %2076 = vmatprep.subr.bf16.mxu0 %v2005
            %2077 = vmatpush1.bf16.msra.mxu0 %v2004
            %2078 = vmatprep.subr.bf16.mxu0 %v2009
            %2079 = vmatpush1.bf16.msra.mxu0 %v2008
            %2080 = vmatprep.subr.bf16.mxu0 %v2013
            %2081 = vmatpush1.bf16.msra.mxu0 %v2012
            %2082 = vmatprep.subr.bf16.mxu0 0
            %2083 = vmatpush1.bf16.msra.mxu0 0
            %2084 = vmatprep.subr.bf16.mxu0 0
            %2085 = vmatpush1.bf16.msra.mxu0 0
            %2086 = vmatprep.subr.bf16.mxu0 0
            %2087 = vmatpush1.bf16.msra.mxu0 0
            %2088 = vmatprep.subr.bf16.mxu0 0
            %2089 = vmatpush1.bf16.msra.mxu0 0
            %2090 = vmatprep.subr.bf16.mxu0 0
            %2091 = vmatpush1.bf16.msra.mxu0 0
            %2092 = vmatprep.subr.bf16.mxu0 0
            %2093 = vmatpush1.bf16.msra.mxu0 0
            %2094 = vmatprep.subr.bf16.mxu0 0
            %2095 = vmatpush1.bf16.msra.mxu0 0
            %2096 = vmatprep.subr.bf16.mxu0 0
            %2097 = vmatpush1.bf16.msra.mxu0 0
            %2098 = vmatprep.subr.bf16.mxu0 0
            %2099 = vmatpush1.bf16.msra.mxu0 0
            %2100 = vmatprep.subr.bf16.mxu0 0
            %2101 = vmatpush1.bf16.msra.mxu0 0
            %2102 = vmatprep.subr.bf16.mxu0 0
            %2103 = vmatpush1.bf16.msra.mxu0 0
            %2104 = vmatprep.subr.bf16.mxu0 0
            %2105 = vmatpush1.bf16.msra.mxu0 0
            %2106 = vmatprep.mubr.bf16.mxu0 0
            %2107 = vmatmul.mubr.bf16.gmra.mrb[0].mxu0 %v2031
            %v2108 = vpop.f32.mrb[0].mxu0
            %v2109 = vadd.f32 %v1941, %v2108
            %v2110 = vpop.f32.mrb[0].mxu0
            %v2111 = vadd.f32 %v1945, %v2110
            %v2112 = vpop.f32.mrb[0].mxu0
            %v2113 = vpop.f32.mrb[0].mxu0
            %2114 = vdwg.mxu0
            %v2115 = vmax.f32 %v2068, 0.0
            %v2116 = vmax.f32 %v2070, 0.0
            %v2117 = vmax.f32 %v2109, 0.0
            %v2118 = vmax.f32 %v2111, 0.0
            %s2119 = sshra.s32 %s1902, 3
            %s2120 = sand.u32 %s1902, 7
            %s2121 = smul.u32 %s593, 256
            %s2122 = sadd.s32 %s2119, %s2121
            %s2123 = smul.addr %s2122, 4
            %s2124 = scalar_lea.vmem %s14, %s2123
            %v2125 = vld [vmem:[%s2124] sm:$0xf]
            %v2126 = vld [vmem:[%s2124 + $0x4] sm:$0xf]
            %v2127 = vld [vmem:[%s2124 + $0x8] sm:$0xf]
            %v2128 = vld [vmem:[%s2124 + $0xc] sm:$0xf]
            %v2129 = vld [vmem:[%s2124 + $0x10] sm:$0xf]
            %v2130 = vld [vmem:[%s2124 + $0x14] sm:$0xf]
            %v2131 = vld [vmem:[%s2124 + $0x18] sm:$0xf]
            %v2132 = vld [vmem:[%s2124 + $0x1c] sm:$0xf]
            %v2133 = vld [vmem:[%s2124 + $0x20] sm:$0xf]
            %v2134 = vld [vmem:[%s2124 + $0x24] sm:$0xf]
            %v2135 = vld [vmem:[%s2124 + $0x28] sm:$0xf]
            %v2136 = vld [vmem:[%s2124 + $0x2c] sm:$0xf]
            %v2137 = vld [vmem:[%s2124 + $0x30] sm:$0xf]
            %v2138 = vld [vmem:[%s2124 + $0x34] sm:$0xf]
            %v2139 = vld [vmem:[%s2124 + $0x38] sm:$0xf]
            %v2140 = vld [vmem:[%s2124 + $0x3c] sm:$0xf]
            %v2141 = vld [vmem:[%s2124 + $0x40] sm:$0xf]
            %v2142 = vld [vmem:[%s2124 + $0x44] sm:$0xf]
            %v2143 = vld [vmem:[%s2124 + $0x48] sm:$0xf]
            %v2144 = vld [vmem:[%s2124 + $0x4c] sm:$0xf]
            %v2145 = vld [vmem:[%s2124 + $0x50] sm:$0xf]
            %v2146 = vld [vmem:[%s2124 + $0x54] sm:$0xf]
            %v2147 = vld [vmem:[%s2124 + $0x58] sm:$0xf]
            %v2148 = vld [vmem:[%s2124 + $0x5c] sm:$0xf]
            %v2149 = vld [vmem:[%s2124 + $0x60] sm:$0xf]
            %v2150 = vld [vmem:[%s2124 + $0x64] sm:$0xf]
            %v2151 = vld [vmem:[%s2124 + $0x68] sm:$0xf]
            %v2152 = vld [vmem:[%s2124 + $0x6c] sm:$0xf]
            %v2153 = vld [vmem:[%s2124 + $0x70] sm:$0xf]
            %v2154 = vld [vmem:[%s2124 + $0x74] sm:$0xf]
            %v2155 = vld [vmem:[%s2124 + $0x78] sm:$0xf]
            %v2156 = vld [vmem:[%s2124 + $0x7c] sm:$0xf]
            %v2157 = vld [vmem:[%s2124 + $0x80] sm:$0xf]
            %v2158 = vld [vmem:[%s2124 + $0x84] sm:$0xf]
            %v2159 = vld [vmem:[%s2124 + $0x88] sm:$0xf]
            %v2160 = vld [vmem:[%s2124 + $0x8c] sm:$0xf]
            %v2161 = vld [vmem:[%s2124 + $0x90] sm:$0xf]
            %v2162 = vld [vmem:[%s2124 + $0x94] sm:$0xf]
            %v2163 = vld [vmem:[%s2124 + $0x98] sm:$0xf]
            %v2164 = vld [vmem:[%s2124 + $0x9c] sm:$0xf]
            %v2165 = vld [vmem:[%s2124 + $0xa0] sm:$0xf]
            %v2166 = vld [vmem:[%s2124 + $0xa4] sm:$0xf]
            %v2167 = vld [vmem:[%s2124 + $0xa8] sm:$0xf]
            %v2168 = vld [vmem:[%s2124 + $0xac] sm:$0xf]
            %v2169 = vld [vmem:[%s2124 + $0xb0] sm:$0xf]
            %v2170 = vld [vmem:[%s2124 + $0xb4] sm:$0xf]
            %v2171 = vld [vmem:[%s2124 + $0xb8] sm:$0xf]
            %v2172 = vld [vmem:[%s2124 + $0xbc] sm:$0xf]
            %v2173 = vld [vmem:[%s2124 + $0xc0] sm:$0xf]
            %v2174 = vld [vmem:[%s2124 + $0xc4] sm:$0xf]
            %v2175 = vld [vmem:[%s2124 + $0xc8] sm:$0xf]
            %v2176 = vld [vmem:[%s2124 + $0xcc] sm:$0xf]
            %v2177 = vld [vmem:[%s2124 + $0xd0] sm:$0xf]
            %v2178 = vld [vmem:[%s2124 + $0xd4] sm:$0xf]
            %v2179 = vld [vmem:[%s2124 + $0xd8] sm:$0xf]
            %v2180 = vld [vmem:[%s2124 + $0xdc] sm:$0xf]
            %v2181 = vld [vmem:[%s2124 + $0xe0] sm:$0xf]
            %v2182 = vld [vmem:[%s2124 + $0xe4] sm:$0xf]
            %v2183 = vld [vmem:[%s2124 + $0xe8] sm:$0xf]
            %v2184 = vld [vmem:[%s2124 + $0xec] sm:$0xf]
            %v2185 = vld [vmem:[%s2124 + $0xf0] sm:$0xf]
            %v2186 = vld [vmem:[%s2124 + $0xf4] sm:$0xf]
            %v2187 = vld [vmem:[%s2124 + $0xf8] sm:$0xf]
            %v2188 = vld [vmem:[%s2124 + $0xfc] sm:$0xf]
            %v2189 = vpack.c.bf16 %v2115, %v2115
            %v2190 = vpack.c.bf16 %v2116, %v2116
            %v2191 = vpack.c.bf16 %v2117, %v2117
            %v2192 = vpack.c.bf16 %v2118, %v2118
            %v2257 = vunpack.c.l.b16 %v2125
            %v2258 = vunpack.c.l.b16 %v2126
            %v2259 = vunpack.c.l.b16 %v2127
            %v2260 = vunpack.c.l.b16 %v2128
            %v2261 = vunpack.c.l.b16 %v2129
            %v2262 = vunpack.c.l.b16 %v2130
            %v2263 = vunpack.c.l.b16 %v2131
            %v2264 = vunpack.c.l.b16 %v2132
            %v2265 = vunpack.c.l.b16 %v2133
            %v2266 = vunpack.c.l.b16 %v2134
            %v2267 = vunpack.c.l.b16 %v2135
            %v2268 = vunpack.c.l.b16 %v2136
            %v2269 = vunpack.c.l.b16 %v2137
            %v2270 = vunpack.c.l.b16 %v2138
            %v2271 = vunpack.c.l.b16 %v2139
            %v2272 = vunpack.c.l.b16 %v2140
            %v2273 = vunpack.c.l.b16 %v2141
            %v2274 = vunpack.c.l.b16 %v2142
            %v2275 = vunpack.c.l.b16 %v2143
            %v2276 = vunpack.c.l.b16 %v2144
            %v2277 = vunpack.c.l.b16 %v2145
            %v2278 = vunpack.c.l.b16 %v2146
            %v2279 = vunpack.c.l.b16 %v2147
            %v2280 = vunpack.c.l.b16 %v2148
            %v2281 = vunpack.c.l.b16 %v2149
            %v2282 = vunpack.c.l.b16 %v2150
            %v2283 = vunpack.c.l.b16 %v2151
            %v2284 = vunpack.c.l.b16 %v2152
            %v2285 = vunpack.c.l.b16 %v2153
            %v2286 = vunpack.c.l.b16 %v2154
            %v2287 = vunpack.c.l.b16 %v2155
            %v2288 = vunpack.c.l.b16 %v2156
            %v2289 = vunpack.c.l.b16 %v2157
            %v2290 = vunpack.c.l.b16 %v2158
            %v2291 = vunpack.c.l.b16 %v2159
            %v2292 = vunpack.c.l.b16 %v2160
            %v2293 = vunpack.c.l.b16 %v2161
            %v2294 = vunpack.c.l.b16 %v2162
            %v2295 = vunpack.c.l.b16 %v2163
            %v2296 = vunpack.c.l.b16 %v2164
            %v2297 = vunpack.c.l.b16 %v2165
            %v2298 = vunpack.c.l.b16 %v2166
            %v2299 = vunpack.c.l.b16 %v2167
            %v2300 = vunpack.c.l.b16 %v2168
            %v2301 = vunpack.c.l.b16 %v2169
            %v2302 = vunpack.c.l.b16 %v2170
            %v2303 = vunpack.c.l.b16 %v2171
            %v2304 = vunpack.c.l.b16 %v2172
            %v2305 = vunpack.c.l.b16 %v2173
            %v2306 = vunpack.c.l.b16 %v2174
            %v2307 = vunpack.c.l.b16 %v2175
            %v2308 = vunpack.c.l.b16 %v2176
            %v2309 = vunpack.c.l.b16 %v2177
            %v2310 = vunpack.c.l.b16 %v2178
            %v2311 = vunpack.c.l.b16 %v2179
            %v2312 = vunpack.c.l.b16 %v2180
            %v2313 = vunpack.c.l.b16 %v2181
            %v2314 = vunpack.c.l.b16 %v2182
            %v2315 = vunpack.c.l.b16 %v2183
            %v2316 = vunpack.c.l.b16 %v2184
            %v2317 = vunpack.c.l.b16 %v2185
            %v2318 = vunpack.c.l.b16 %v2186
            %v2319 = vunpack.c.l.b16 %v2187
            %v2320 = vunpack.c.l.b16 %v2188
            %v2321 = vpack.c.b16 %v2258, %v2257
            %v2322 = vpack.c.b16 %v2260, %v2259
            %v2323 = vpack.c.b16 %v2262, %v2261
            %v2324 = vpack.c.b16 %v2264, %v2263
            %v2325 = vpack.c.b16 %v2266, %v2265
            %v2326 = vpack.c.b16 %v2268, %v2267
            %v2327 = vpack.c.b16 %v2270, %v2269
            %v2328 = vpack.c.b16 %v2272, %v2271
            %v2329 = vpack.c.b16 %v2274, %v2273
            %v2330 = vpack.c.b16 %v2276, %v2275
            %v2331 = vpack.c.b16 %v2278, %v2277
            %v2332 = vpack.c.b16 %v2280, %v2279
            %v2333 = vpack.c.b16 %v2282, %v2281
            %v2334 = vpack.c.b16 %v2284, %v2283
            %v2335 = vpack.c.b16 %v2286, %v2285
            %v2336 = vpack.c.b16 %v2288, %v2287
            %v2337 = vpack.c.b16 %v2290, %v2289
            %v2338 = vpack.c.b16 %v2292, %v2291
            %v2339 = vpack.c.b16 %v2294, %v2293
            %v2340 = vpack.c.b16 %v2296, %v2295
            %v2341 = vpack.c.b16 %v2298, %v2297
            %v2342 = vpack.c.b16 %v2300, %v2299
            %v2343 = vpack.c.b16 %v2302, %v2301
            %v2344 = vpack.c.b16 %v2304, %v2303
            %v2345 = vpack.c.b16 %v2306, %v2305
            %v2346 = vpack.c.b16 %v2308, %v2307
            %v2347 = vpack.c.b16 %v2310, %v2309
            %v2348 = vpack.c.b16 %v2312, %v2311
            %v2349 = vpack.c.b16 %v2314, %v2313
            %v2350 = vpack.c.b16 %v2316, %v2315
            %v2351 = vpack.c.b16 %v2318, %v2317
            %v2352 = vpack.c.b16 %v2320, %v2319
            %2385 = vmatprep.subr.bf16.mxu0 0
            %2386 = vmatpush1.bf16.msra.mxu0 %v2321
            %2387 = vmatprep.subr.bf16.mxu0 0
            %2388 = vmatpush1.bf16.msra.mxu0 %v2322
            %2389 = vmatprep.subr.bf16.mxu0 0
            %2390 = vmatpush1.bf16.msra.mxu0 %v2323
            %2391 = vmatprep.subr.bf16.mxu0 0
            %2392 = vmatpush1.bf16.msra.mxu0 %v2324
            %2393 = vmatprep.subr.bf16.mxu0 0
            %2394 = vmatpush1.bf16.msra.mxu0 %v2325
            %2395 = vmatprep.subr.bf16.mxu0 0
            %2396 = vmatpush1.bf16.msra.mxu0 %v2326
            %2397 = vmatprep.subr.bf16.mxu0 0
            %2398 = vmatpush1.bf16.msra.mxu0 %v2327
            %2399 = vmatprep.subr.bf16.mxu0 0
            %2400 = vmatpush1.bf16.msra.mxu0 %v2328
            %2401 = vmatprep.subr.bf16.mxu0 0
            %2402 = vmatpush1.bf16.msra.mxu0 %v2329
            %2403 = vmatprep.subr.bf16.mxu0 0
            %2404 = vmatpush1.bf16.msra.mxu0 %v2330
            %2405 = vmatprep.subr.bf16.mxu0 0
            %2406 = vmatpush1.bf16.msra.mxu0 %v2331
            %2407 = vmatprep.subr.bf16.mxu0 0
            %2408 = vmatpush1.bf16.msra.mxu0 %v2332
            %2409 = vmatprep.subr.bf16.mxu0 0
            %2410 = vmatpush1.bf16.msra.mxu0 %v2333
            %2411 = vmatprep.subr.bf16.mxu0 0
            %2412 = vmatpush1.bf16.msra.mxu0 %v2334
            %2413 = vmatprep.subr.bf16.mxu0 0
            %2414 = vmatpush1.bf16.msra.mxu0 %v2335
            %2415 = vmatprep.subr.bf16.mxu0 0
            %2416 = vmatpush1.bf16.msra.mxu0 %v2336
            %2417 = vmatprep.mubr.bf16.mxu0 %v2190
            %2418 = vmatmul.mubr.bf16.gmra.mrb[0].mxu0 %v2189
            %v2419 = vpop.f32.mrb[0].mxu0
            %v2420 = vadd.f32 0.0, %v2419
            %v2421 = vpop.f32.mrb[0].mxu0
            %v2422 = vpop.f32.mrb[0].mxu0
            %v2423 = vpop.f32.mrb[0].mxu0
            %2424 = vdwg.mxu0
            %2425 = vmatprep.subr.bf16.mxu0 0
            %2426 = vmatpush1.bf16.msra.mxu0 %v2337
            %2427 = vmatprep.subr.bf16.mxu0 0
            %2428 = vmatpush1.bf16.msra.mxu0 %v2338
            %2429 = vmatprep.subr.bf16.mxu0 0
            %2430 = vmatpush1.bf16.msra.mxu0 %v2339
            %2431 = vmatprep.subr.bf16.mxu0 0
            %2432 = vmatpush1.bf16.msra.mxu0 %v2340
            %2433 = vmatprep.subr.bf16.mxu0 0
            %2434 = vmatpush1.bf16.msra.mxu0 %v2341
            %2435 = vmatprep.subr.bf16.mxu0 0
            %2436 = vmatpush1.bf16.msra.mxu0 %v2342
            %2437 = vmatprep.subr.bf16.mxu0 0
            %2438 = vmatpush1.bf16.msra.mxu0 %v2343
            %2439 = vmatprep.subr.bf16.mxu0 0
            %2440 = vmatpush1.bf16.msra.mxu0 %v2344
            %2441 = vmatprep.subr.bf16.mxu0 0
            %2442 = vmatpush1.bf16.msra.mxu0 %v2345
            %2443 = vmatprep.subr.bf16.mxu0 0
            %2444 = vmatpush1.bf16.msra.mxu0 %v2346
            %2445 = vmatprep.subr.bf16.mxu0 0
            %2446 = vmatpush1.bf16.msra.mxu0 %v2347
            %2447 = vmatprep.subr.bf16.mxu0 0
            %2448 = vmatpush1.bf16.msra.mxu0 %v2348
            %2449 = vmatprep.subr.bf16.mxu0 0
            %2450 = vmatpush1.bf16.msra.mxu0 %v2349
            %2451 = vmatprep.subr.bf16.mxu0 0
            %2452 = vmatpush1.bf16.msra.mxu0 %v2350
            %2453 = vmatprep.subr.bf16.mxu0 0
            %2454 = vmatpush1.bf16.msra.mxu0 %v2351
            %2455 = vmatprep.subr.bf16.mxu0 0
            %2456 = vmatpush1.bf16.msra.mxu0 %v2352
            %2457 = vmatprep.mubr.bf16.mxu0 %v2192
            %2458 = vmatmul.mubr.bf16.gmra.mrb[0].mxu0 %v2191
            %v2459 = vpop.f32.mrb[0].mxu0
            %v2460 = vadd.f32 %v2420, %v2459
            %v2461 = vpop.f32.mrb[0].mxu0
            %v2462 = vpop.f32.mrb[0].mxu0
            %v2463 = vpop.f32.mrb[0].mxu0
            %2464 = vdwg.mxu0
            %v2465 = vadd.f32 %v1901, %v2460
          $region104: #{tpu_custom_call.1} parent=96 // loop_footer
            %s1900 = sadd.s32 1, %s1896
          $region105: #{tpu_custom_call.1} parent=96 // loop_footer_branch
            %1895 = sbr.rel target = $region101
          $region106: #{tpu_custom_call.1} parent=96 // loop_exit
            _
          %s2466 = scalar_lea.vmem %s15, %s593
          %v2467 = vld [vmem:[%s2466] sm:$0x1]
          %v2469 = vlaneseq
          %v2470 = vshrl.u32 %v2469, 7
          %v2471 = vsub.s32 0, %v2470
          %v2472 = vrot.slane %v2467, %v2471
          %v2474 = vadd.f32 %v1901, %v2472
          %v2475 = vadd.f32 %v1893, %v2474
          %v2476 = vsel %vm643, %v2475, 0.0
          %2477 = vadd.xlane.f32.xlu0 %v2476
          %v2478 = vpop.xlane.xlu0 %2477
          %v2479 = vmul.f32 %v2478, %v1865
          %v2480 = vsub.f32 %v2475, %v2479
          %v2481 = vmul.f32 %v2480, %v2480
          %v2482 = vsel %vm643, %v2481, 0.0
          %2483 = vadd.xlane.f32.xlu0 %v2482
          %v2484 = vpop.xlane.xlu0 %2483
          %v2485 = vmul.f32 %v2484, %v1865
          %v2486 = vadd.f32 %v2485, 1e-05
          %v2487 = vrsqrt.pop %v2486
          %v2488 = vmul.f32 %v2480, %v2487
          %s2489 = scalar_lea.vmem %s16, %s593
          %v2490 = vld [vmem:[%s2489] sm:$0x1]
          %v2492 = vlaneseq
          %v2493 = vshrl.u32 %v2492, 7
          %v2494 = vsub.s32 0, %v2493
          %v2495 = vrot.slane %v2490, %v2494
          %v2497 = vmul.f32 %v2488, %v2495
          %s2498 = scalar_lea.vmem %s17, %s593
          %v2499 = vld [vmem:[%s2498] sm:$0x1]
          %v2501 = vlaneseq
          %v2502 = vshrl.u32 %v2501, 7
          %v2503 = vsub.s32 0, %v2502
          %v2504 = vrot.slane %v2499, %v2503
          %v2506 = vadd.f32 %v2497, %v2504
        $region97: #{tpu_custom_call.1} parent=91 // loop_footer
          %s597 = sadd.s32 1, %s593
        $region98: #{tpu_custom_call.1} parent=91 // loop_footer_branch
          %592 = sbr.rel target = $region94
        $region99: #{tpu_custom_call.1} parent=91 // loop_exit
          _
        %vm2507 = vcmask 523264
        %2508 = vst.msk [vmem:[%s579] sm:$0xff] %vm2507, %v598
        %s2509 = sand.u32 %s428, 1
        %s2510 = scalar_lea.sflag [#allocation3], %s2509
        %s2511 = sand.u32 %s428, 1
        %s2512 = smul.addr %s2511, 8
        %s2513 = scalar_lea.vmem [#allocation2], %s2512
        // Predicated region
        $region107: #{tpu_custom_call.1} parent=91 // pred_check
          %p2514 = pneg %p438
        $region108: #{tpu_custom_call.1} parent=91 // pred_check_branch
          %2516 = sbr.rel (%p2514) target = $region110
        $region109: #{tpu_custom_call.1} parent=91 // pred_region
          %s2518 = ssub.s32 128, 128
          %2519 = vsyncadd %s2510, %s2518
          %s2520 = smul.addr %s32, 128
          %s2521 = scalar_lea.hbm %s18, %s2520
          %s2523 = sshll.u32 %s2513, 4
          %s2524 = int_to_ptr.vmem [resolvable:$true] %s2523
          %2526 = dma.vmem_to_hbm [thread:$0]  %s2524, 128, %s2521, %s2510
        $region110: #{tpu_custom_call.1} parent=91 // pred_fallthru
          _
      $region92: #{tpu_custom_call.1} parent=5 // pred_fallthru
        _
      %p2527 = scmp.le.s32.totalorder 2, %s27
      // Predicated region
      $region111: #{tpu_custom_call.1} parent=5 // pred_check
        %p2528 = pneg %p2527
      $region112: #{tpu_custom_call.1} parent=5 // pred_check_branch
        %2530 = sbr.rel (%p2528) target = $region114
      $region113: #{tpu_custom_call.1} parent=5 // pred_region
        %s2531 = ssub.s32 %s27, 2
        // Predicated region
        $region115: #{tpu_custom_call.1} parent=113 // pred_check
          %p2532 = pneg %p444
        $region116: #{tpu_custom_call.1} parent=113 // pred_check_branch
          %2534 = sbr.rel (%p2532) target = $region118
        $region117: #{tpu_custom_call.1} parent=113 // pred_region
          %s2535 = sand.u32 %s429, 1
          %s2536 = scalar_lea.sflag [#allocation3], %s2535
          %s2537 = sand.u32 %s429, 1
          %s2538 = smul.addr %s2537, 8
          %s2539 = scalar_lea.vmem [#allocation2], %s2538
          %2540 = dma.done %s2536, 128
        $region118: #{tpu_custom_call.1} parent=113 // pred_fallthru
          _
      $region114: #{tpu_custom_call.1} parent=5 // pred_fallthru
        _
    $region6: #{tpu_custom_call.1} parent=1 // loop_footer
      %s31 = sadd.s32 1, %s27
    $region7: #{tpu_custom_call.1} parent=1 // loop_footer_branch
      %26 = sbr.rel target = $region3
    $region8: #{tpu_custom_call.1} parent=1 // loop_exit
      _
    %2541 = vsyncpa [#allocation3], 1
    %s2542 = scalar_lea.sflag [#allocation3], 1
    %2543 = vsyncpa %s2542, 1

</llo_original>
